<compile_context>
chip_gen: v6e
topology: v6e:2x2x1
jax: 0.10.0
libtpu: 0.0.40
codegen_flags: <defaults>
</compile_context>

<pallas_src>
import functools

import jax
import jax.numpy as jnp
import numpy as np
from jax import lax
from jax.experimental import pallas as pl
from jax.experimental.pallas import tpu as pltpu


def _p2c3_kernel(x_ref, w_ref, o_ref, pad_ref, col_ref, *, Nb, H2, W2, Cin, kh, kw):
    """Fused 2x2/stride-2 max-pool + (kh,kw) 'same' conv for Nb images.

    x_ref:   (Nb, 2*H2, W2, 2*Cin)  bf16  lane-dense input (W folded pairwise into C)
    w_ref:   (kh*kw*Cin, Cout)      bf16  im2col-ordered weights (resident)
    o_ref:   (Nb, H2, W2, Cout)     f32   output
    pad_ref: (Nb*R, Cin)            bf16  flat zero-padded pooled slab, R rows/image
    col_ref: (Nb*Mi, kh*kw*Cin)     bf16  im2col buffer, Mi = H2*Wp rows/image
    """
    Cout = o_ref.shape[-1]
    ph, pw = kh // 2, kw // 2
    Hp, Wp = H2 + kh - 1, W2 + kw - 1
    Mi = H2 * Wp                      # matmul rows per image (pad cols included)
    R = Hp * Wp + (kw - 1)            # slab rows per image (+slack for last-tap shift)

    # ---- 2x2 / stride-2 max-pool, lane-dense (128 lanes = 2*Cin), bf16 on the VPU ----
    xr = x_ref[...].reshape(Nb, H2, 2, W2, 2 * Cin)     # split row pairs (free: minor dims unchanged)
    vmax = jnp.max(xr, axis=2)                          # vertical half of the pool
    pooled = jnp.maximum(vmax[..., :Cin], vmax[..., Cin:])  # horizontal half -> (Nb,H2,W2,Cin) bf16

    # ---- 'same' zero padding built directly in VMEM (flat slab, no jnp.pad) ----
    # Interior is fully rewritten every step; border / slack rows stay zero.
    pad_ref[...] = jnp.zeros(pad_ref.shape, pad_ref.dtype)
    for b in range(Nb):
        for y in range(H2):
            start = b * R + (ph + y) * Wp + pw          # static offset
            pad_ref[start:start + W2, :] = pooled[b, y]

    # ---- im2col via flat-shift: every tap is a CONTIGUOUS row slice of the slab ----
    for b in range(Nb):
        for i in range(kh):
            for j in range(kw):
                tap = i * kw + j
                src0 = b * R + i * Wp + j               # static offset
                col_ref[b * Mi:(b + 1) * Mi, tap * Cin:(tap + 1) * Cin] = (
                    pad_ref[src0:src0 + Mi, :])

    # ---- single big-K MXU matmul: (Nb*Mi, kh*kw*Cin) @ (kh*kw*Cin, Cout), f32 acc ----
    acc = jnp.dot(col_ref[...], w_ref[...], preferred_element_type=jnp.float32)

    # Rows with x >= W2 carry wrap-around garbage; drop the kw-1 pad columns on store.
    out = acc.reshape(Nb, H2, Wp, Cout)[:, :, :W2, :]
    o_ref[...] = out.astype(o_ref.dtype)


def p2c3_forward(x, w, *, block_n=None):
    """x: (N, H, W, Cin) f32, w: (kh, kw, Cin, Cout) f32 -> (N, H//2, W//2, Cout) f32."""
    N, H, W, Cin = x.shape
    kh, kw, wcin, Cout = w.shape
    assert wcin == Cin
    assert H % 2 == 0 and W % 2 == 0, "P2C3 expects even spatial dims for the 2x2 pool"
    H2, W2 = H // 2, W // 2
    Hp, Wp = H2 + kh - 1, W2 + kw - 1
    Mi = H2 * Wp
    R = Hp * Wp + (kw - 1)
    KK = kh * kw * Cin

    if block_n is None:
        # Grow matmul M by batching images per step, but keep the grid length >= 2
        # so both v7x TensorCores get work (N=2 -> Nb=1, grid=(2,)).
        block_n = 1
        for cand in (4, 2):
            if N % cand == 0 and N // cand >= 2:
                block_n = cand
                break
    Nb = block_n
    assert N % Nb == 0

    # Lane-dense bf16 input: fold W-pairs into channels -> last dim 2*Cin (=128 here).
    # Free in HBM (contiguous reshape); halves input DMA vs f32.
    x_in = x.astype(jnp.bfloat16).reshape(N, H, W2, 2 * Cin)
    # Merged-matmul weight layout, bf16, resident across the grid.
    w_in = w.astype(jnp.bfloat16).reshape(KK, Cout)

    kernel = functools.partial(_p2c3_kernel, Nb=Nb, H2=H2, W2=W2, Cin=Cin, kh=kh, kw=kw)
    return pl.pallas_call(
        kernel,
        out_shape=jax.ShapeDtypeStruct((N, H2, W2, Cout), jnp.float32),
        grid=(N // Nb,),
        in_specs=[
            pl.BlockSpec((Nb, H, W2, 2 * Cin), lambda n: (n, 0, 0, 0)),
            pl.BlockSpec((KK, Cout), lambda n: (0, 0)),   # weights stay resident
        ],
        out_specs=pl.BlockSpec((Nb, H2, W2, Cout), lambda n: (n, 0, 0, 0)),
        scratch_shapes=[
            pltpu.VMEM((Nb * R, Cin), jnp.bfloat16),      # flat zero-padded pooled slab
            pltpu.VMEM((Nb * Mi, KK), jnp.bfloat16),      # im2col buffer
        ],
        compiler_params=pltpu.CompilerParams(
            dimension_semantics=("parallel",),            # batch axis over both TCs
        ),
    )(x_in, w_in)


def reference_forward(x, w):
    """Pure-JAX (XLA) reference: pool, then conv with the same bf16-quantised inputs
    and f32 accumulation as the kernel, for a tight numerical comparison."""
    p = lax.reduce_window(x, -jnp.inf, lax.max, (1, 2, 2, 1), (1, 2, 2, 1), "VALID")
    return lax.conv_general_dilated(
        p.astype(jnp.bfloat16), w.astype(jnp.bfloat16),
        window_strides=(1, 1), padding="SAME",
        dimension_numbers=("NHWC", "HWIO", "NHWC"),
        preferred_element_type=jnp.float32)


if __name__ == "__main__":
    key = jax.random.PRNGKey(0)

    # P2C3 as used in RISTD: in_c=64, out_c=128, 5x5 kernel.  NHWC input.
    N, H, W, in_c, out_c, k = 2, 16, 16, 64, 128, 5
    x = jax.random.normal(jax.random.fold_in(key, 0), (N, H, W, in_c), jnp.float32)
    fan_in = k * k * in_c
    w = jax.random.normal(jax.random.fold_in(key, 1), (k, k, in_c, out_c),
                          jnp.float32) / np.sqrt(fan_in)

    out = jax.jit(p2c3_forward)(x, w)
    out = jax.block_until_ready(out)
    assert out.shape == (N, H // 2, W // 2, out_c), out.shape

    ref = reference_forward(x, w)
    np.testing.assert_allclose(np.asarray(out), np.asarray(ref), rtol=1e-2, atol=1e-2)
    print("KERNEL_OK")
</pallas_src>

<mosaic_0001>
module attributes {stable_mosaic.version = 11 : i64} {
  func.func @_p2c3_kernel(%arg0: i32, %arg1: memref<1x16x8x128xbf16, #tpu.memory_space<vmem>>, %arg2: memref<1600x128xbf16, #tpu.memory_space<vmem>>, %arg3: memref<1x8x8x128xf32, #tpu.memory_space<vmem>>, %arg4: memref<148x64xbf16, #tpu.memory_space<vmem>>, %arg5: memref<96x1600xbf16, #tpu.memory_space<vmem>>) attributes {dimension_semantics = [#tpu.dimension_semantics<parallel>], iteration_bounds = array<i64: 2>, scalar_prefetch = 0 : i64, scratch_operands = 2 : i64, tpu.core_type = #tpu.core_type<tc>, window_params = [{transform_indices = @transform_0, window_bounds = array<i64: 1, 16, 8, 128>}, {pipeline_mode = #tpu.pipeline_mode<synchronous>, transform_indices = @transform_1, window_bounds = array<i64: 1600, 128>}, {transform_indices = @transform_2, window_bounds = array<i64: 1, 8, 8, 128>}]} {
    %c0 = arith.constant 0 : index
    %c0_0 = arith.constant 0 : index
    %c0_1 = arith.constant 0 : index
    %c0_2 = arith.constant 0 : index
    %0 = vector.load %arg1[%c0, %c0_0, %c0_1, %c0_2] : memref<1x16x8x128xbf16, #tpu.memory_space<vmem>>, vector<1x16x8x128xbf16>
    %1 = vector.shape_cast %0 : vector<1x16x8x128xbf16> to vector<1x8x2x8x128xbf16>
    %cst = arith.constant dense<0xFF80> : vector<1x8x8x128xbf16>
    %2 = vector.multi_reduction <maximumf>, %1, %cst [2] : vector<1x8x2x8x128xbf16> to vector<1x8x8x128xbf16>
    %3 = vector.extract_strided_slice %2 {offsets = [0, 0, 0, 0], sizes = [1, 8, 8, 64], strides = [1, 1, 1, 1]} : vector<1x8x8x128xbf16> to vector<1x8x8x64xbf16>
    %4 = vector.extract_strided_slice %2 {offsets = [0, 0, 0, 64], sizes = [1, 8, 8, 64], strides = [1, 1, 1, 1]} : vector<1x8x8x128xbf16> to vector<1x8x8x64xbf16>
    %5 = arith.maximumf %3, %4 : vector<1x8x8x64xbf16>
    %cst_3 = arith.constant 0.000000e+00 : bf16
    %6 = vector.broadcast %cst_3 : bf16 to vector<148x64xbf16>
    %c0_4 = arith.constant 0 : index
    %c0_5 = arith.constant 0 : index
    %7 = vector.load %arg4[%c0_4, %c0_5] : memref<148x64xbf16, #tpu.memory_space<vmem>>, vector<148x64xbf16>
    tpu.vector_store %arg4[%c0_4, %c0_5], %6 {strides = array<i32>} : memref<148x64xbf16, #tpu.memory_space<vmem>>, vector<148x64xbf16>,
    %8 = vector.extract_strided_slice %5 {offsets = [0, 0, 0, 0], sizes = [1, 1, 8, 64], strides = [1, 1, 1, 1]} : vector<1x8x8x64xbf16> to vector<1x1x8x64xbf16>
    %9 = vector.shape_cast %8 : vector<1x1x8x64xbf16> to vector<8x64xbf16>
    %c26 = arith.constant 26 : index
    %c0_6 = arith.constant 0 : index
    %10 = vector.load %arg4[%c26, %c0_6] : memref<148x64xbf16, #tpu.memory_space<vmem>>, vector<8x64xbf16>
    tpu.vector_store %arg4[%c26, %c0_6], %9 {strides = array<i32>} : memref<148x64xbf16, #tpu.memory_space<vmem>>, vector<8x64xbf16>,
    %11 = vector.extract_strided_slice %5 {offsets = [0, 1, 0, 0], sizes = [1, 1, 8, 64], strides = [1, 1, 1, 1]} : vector<1x8x8x64xbf16> to vector<1x1x8x64xbf16>
    %12 = vector.shape_cast %11 : vector<1x1x8x64xbf16> to vector<8x64xbf16>
    %c38 = arith.constant 38 : index
    %c0_7 = arith.constant 0 : index
    %13 = vector.load %arg4[%c38, %c0_7] : memref<148x64xbf16, #tpu.memory_space<vmem>>, vector<8x64xbf16>
    tpu.vector_store %arg4[%c38, %c0_7], %12 {strides = array<i32>} : memref<148x64xbf16, #tpu.memory_space<vmem>>, vector<8x64xbf16>,
    %14 = vector.extract_strided_slice %5 {offsets = [0, 2, 0, 0], sizes = [1, 1, 8, 64], strides = [1, 1, 1, 1]} : vector<1x8x8x64xbf16> to vector<1x1x8x64xbf16>
    %15 = vector.shape_cast %14 : vector<1x1x8x64xbf16> to vector<8x64xbf16>
    %c50 = arith.constant 50 : index
    %c0_8 = arith.constant 0 : index
    %16 = vector.load %arg4[%c50, %c0_8] : memref<148x64xbf16, #tpu.memory_space<vmem>>, vector<8x64xbf16>
    tpu.vector_store %arg4[%c50, %c0_8], %15 {strides = array<i32>} : memref<148x64xbf16, #tpu.memory_space<vmem>>, vector<8x64xbf16>,
    %17 = vector.extract_strided_slice %5 {offsets = [0, 3, 0, 0], sizes = [1, 1, 8, 64], strides = [1, 1, 1, 1]} : vector<1x8x8x64xbf16> to vector<1x1x8x64xbf16>
    %18 = vector.shape_cast %17 : vector<1x1x8x64xbf16> to vector<8x64xbf16>
    %c62 = arith.constant 62 : index
    %c0_9 = arith.constant 0 : index
    %19 = vector.load %arg4[%c62, %c0_9] : memref<148x64xbf16, #tpu.memory_space<vmem>>, vector<8x64xbf16>
    tpu.vector_store %arg4[%c62, %c0_9], %18 {strides = array<i32>} : memref<148x64xbf16, #tpu.memory_space<vmem>>, vector<8x64xbf16>,
    %20 = vector.extract_strided_slice %5 {offsets = [0, 4, 0, 0], sizes = [1, 1, 8, 64], strides = [1, 1, 1, 1]} : vector<1x8x8x64xbf16> to vector<1x1x8x64xbf16>
    %21 = vector.shape_cast %20 : vector<1x1x8x64xbf16> to vector<8x64xbf16>
    %c74 = arith.constant 74 : index
    %c0_10 = arith.constant 0 : index
    %22 = vector.load %arg4[%c74, %c0_10] : memref<148x64xbf16, #tpu.memory_space<vmem>>, vector<8x64xbf16>
    tpu.vector_store %arg4[%c74, %c0_10], %21 {strides = array<i32>} : memref<148x64xbf16, #tpu.memory_space<vmem>>, vector<8x64xbf16>,
    %23 = vector.extract_strided_slice %5 {offsets = [0, 5, 0, 0], sizes = [1, 1, 8, 64], strides = [1, 1, 1, 1]} : vector<1x8x8x64xbf16> to vector<1x1x8x64xbf16>
    %24 = vector.shape_cast %23 : vector<1x1x8x64xbf16> to vector<8x64xbf16>
    %c86 = arith.constant 86 : index
    %c0_11 = arith.constant 0 : index
    %25 = vector.load %arg4[%c86, %c0_11] : memref<148x64xbf16, #tpu.memory_space<vmem>>, vector<8x64xbf16>
    tpu.vector_store %arg4[%c86, %c0_11], %24 {strides = array<i32>} : memref<148x64xbf16, #tpu.memory_space<vmem>>, vector<8x64xbf16>,
    %26 = vector.extract_strided_slice %5 {offsets = [0, 6, 0, 0], sizes = [1, 1, 8, 64], strides = [1, 1, 1, 1]} : vector<1x8x8x64xbf16> to vector<1x1x8x64xbf16>
    %27 = vector.shape_cast %26 : vector<1x1x8x64xbf16> to vector<8x64xbf16>
    %c98 = arith.constant 98 : index
    %c0_12 = arith.constant 0 : index
    %28 = vector.load %arg4[%c98, %c0_12] : memref<148x64xbf16, #tpu.memory_space<vmem>>, vector<8x64xbf16>
    tpu.vector_store %arg4[%c98, %c0_12], %27 {strides = array<i32>} : memref<148x64xbf16, #tpu.memory_space<vmem>>, vector<8x64xbf16>,
    %29 = vector.extract_strided_slice %5 {offsets = [0, 7, 0, 0], sizes = [1, 1, 8, 64], strides = [1, 1, 1, 1]} : vector<1x8x8x64xbf16> to vector<1x1x8x64xbf16>
    %30 = vector.shape_cast %29 : vector<1x1x8x64xbf16> to vector<8x64xbf16>
    %c110 = arith.constant 110 : index
    %c0_13 = arith.constant 0 : index
    %31 = vector.load %arg4[%c110, %c0_13] : memref<148x64xbf16, #tpu.memory_space<vmem>>, vector<8x64xbf16>
    tpu.vector_store %arg4[%c110, %c0_13], %30 {strides = array<i32>} : memref<148x64xbf16, #tpu.memory_space<vmem>>, vector<8x64xbf16>,
    %c0_14 = arith.constant 0 : index
    %c0_15 = arith.constant 0 : index
    %32 = vector.load %arg4[%c0_14, %c0_15] : memref<148x64xbf16, #tpu.memory_space<vmem>>, vector<96x64xbf16>
    %c0_16 = arith.constant 0 : index
    %c0_17 = arith.constant 0 : index
    %33 = vector.load %arg5[%c0_16, %c0_17] : memref<96x1600xbf16, #tpu.memory_space<vmem>>, vector<96x64xbf16>
    tpu.vector_store %arg5[%c0_16, %c0_17], %32 {strides = array<i32>} : memref<96x1600xbf16, #tpu.memory_space<vmem>>, vector<96x64xbf16>,
    %c1 = arith.constant 1 : index
    %c0_18 = arith.constant 0 : index
    %34 = vector.load %arg4[%c1, %c0_18] : memref<148x64xbf16, #tpu.memory_space<vmem>>, vector<96x64xbf16>
    %c0_19 = arith.constant 0 : index
    %c64 = arith.constant 64 : index
    %35 = vector.load %arg5[%c0_19, %c64] : memref<96x1600xbf16, #tpu.memory_space<vmem>>, vector<96x64xbf16>
    tpu.vector_store %arg5[%c0_19, %c64], %34 {strides = array<i32>} : memref<96x1600xbf16, #tpu.memory_space<vmem>>, vector<96x64xbf16>,
    %c2 = arith.constant 2 : index
    %c0_20 = arith.constant 0 : index
    %36 = vector.load %arg4[%c2, %c0_20] : memref<148x64xbf16, #tpu.memory_space<vmem>>, vector<96x64xbf16>
    %c0_21 = arith.constant 0 : index
    %c128 = arith.constant 128 : index
    %37 = vector.load %arg5[%c0_21, %c128] : memref<96x1600xbf16, #tpu.memory_space<vmem>>, vector<96x64xbf16>
    tpu.vector_store %arg5[%c0_21, %c128], %36 {strides = array<i32>} : memref<96x1600xbf16, #tpu.memory_space<vmem>>, vector<96x64xbf16>,
    %c3 = arith.constant 3 : index
    %c0_22 = arith.constant 0 : index
    %38 = vector.load %arg4[%c3, %c0_22] : memref<148x64xbf16, #tpu.memory_space<vmem>>, vector<96x64xbf16>
    %c0_23 = arith.constant 0 : index
    %c192 = arith.constant 192 : index
    %39 = vector.load %arg5[%c0_23, %c192] : memref<96x1600xbf16, #tpu.memory_space<vmem>>, vector<96x64xbf16>
    tpu.vector_store %arg5[%c0_23, %c192], %38 {strides = array<i32>} : memref<96x1600xbf16, #tpu.memory_space<vmem>>, vector<96x64xbf16>,
    %c4 = arith.constant 4 : index
    %c0_24 = arith.constant 0 : index
    %40 = vector.load %arg4[%c4, %c0_24] : memref<148x64xbf16, #tpu.memory_space<vmem>>, vector<96x64xbf16>
    %c0_25 = arith.constant 0 : index
    %c256 = arith.constant 256 : index
    %41 = vector.load %arg5[%c0_25, %c256] : memref<96x1600xbf16, #tpu.memory_space<vmem>>, vector<96x64xbf16>
    tpu.vector_store %arg5[%c0_25, %c256], %40 {strides = array<i32>} : memref<96x1600xbf16, #tpu.memory_space<vmem>>, vector<96x64xbf16>,
    %c12 = arith.constant 12 : index
    %c0_26 = arith.constant 0 : index
    %42 = vector.load %arg4[%c12, %c0_26] : memref<148x64xbf16, #tpu.memory_space<vmem>>, vector<96x64xbf16>
    %c0_27 = arith.constant 0 : index
    %c320 = arith.constant 320 : index
    %43 = vector.load %arg5[%c0_27, %c320] : memref<96x1600xbf16, #tpu.memory_space<vmem>>, vector<96x64xbf16>
    tpu.vector_store %arg5[%c0_27, %c320], %42 {strides = array<i32>} : memref<96x1600xbf16, #tpu.memory_space<vmem>>, vector<96x64xbf16>,
    %c13 = arith.constant 13 : index
    %c0_28 = arith.constant 0 : index
    %44 = vector.load %arg4[%c13, %c0_28] : memref<148x64xbf16, #tpu.memory_space<vmem>>, vector<96x64xbf16>
    %c0_29 = arith.constant 0 : index
    %c384 = arith.constant 384 : index
    %45 = vector.load %arg5[%c0_29, %c384] : memref<96x1600xbf16, #tpu.memory_space<vmem>>, vector<96x64xbf16>
    tpu.vector_store %arg5[%c0_29, %c384], %44 {strides = array<i32>} : memref<96x1600xbf16, #tpu.memory_space<vmem>>, vector<96x64xbf16>,
    %c14 = arith.constant 14 : index
    %c0_30 = arith.constant 0 : index
    %46 = vector.load %arg4[%c14, %c0_30] : memref<148x64xbf16, #tpu.memory_space<vmem>>, vector<96x64xbf16>
    %c0_31 = arith.constant 0 : index
    %c448 = arith.constant 448 : index
    %47 = vector.load %arg5[%c0_31, %c448] : memref<96x1600xbf16, #tpu.memory_space<vmem>>, vector<96x64xbf16>
    tpu.vector_store %arg5[%c0_31, %c448], %46 {strides = array<i32>} : memref<96x1600xbf16, #tpu.memory_space<vmem>>, vector<96x64xbf16>,
    %c15 = arith.constant 15 : index
    %c0_32 = arith.constant 0 : index
    %48 = vector.load %arg4[%c15, %c0_32] : memref<148x64xbf16, #tpu.memory_space<vmem>>, vector<96x64xbf16>
    %c0_33 = arith.constant 0 : index
    %c512 = arith.constant 512 : index
    %49 = vector.load %arg5[%c0_33, %c512] : memref<96x1600xbf16, #tpu.memory_space<vmem>>, vector<96x64xbf16>
    tpu.vector_store %arg5[%c0_33, %c512], %48 {strides = array<i32>} : memref<96x1600xbf16, #tpu.memory_space<vmem>>, vector<96x64xbf16>,
    %c16 = arith.constant 16 : index
    %c0_34 = arith.constant 0 : index
    %50 = vector.load %arg4[%c16, %c0_34] : memref<148x64xbf16, #tpu.memory_space<vmem>>, vector<96x64xbf16>
    %c0_35 = arith.constant 0 : index
    %c576 = arith.constant 576 : index
    %51 = vector.load %arg5[%c0_35, %c576] : memref<96x1600xbf16, #tpu.memory_space<vmem>>, vector<96x64xbf16>
    tpu.vector_store %arg5[%c0_35, %c576], %50 {strides = array<i32>} : memref<96x1600xbf16, #tpu.memory_space<vmem>>, vector<96x64xbf16>,
    %c24 = arith.constant 24 : index
    %c0_36 = arith.constant 0 : index
    %52 = vector.load %arg4[%c24, %c0_36] : memref<148x64xbf16, #tpu.memory_space<vmem>>, vector<96x64xbf16>
    %c0_37 = arith.constant 0 : index
    %c640 = arith.constant 640 : index
    %53 = vector.load %arg5[%c0_37, %c640] : memref<96x1600xbf16, #tpu.memory_space<vmem>>, vector<96x64xbf16>
    tpu.vector_store %arg5[%c0_37, %c640], %52 {strides = array<i32>} : memref<96x1600xbf16, #tpu.memory_space<vmem>>, vector<96x64xbf16>,
    %c25 = arith.constant 25 : index
    %c0_38 = arith.constant 0 : index
    %54 = vector.load %arg4[%c25, %c0_38] : memref<148x64xbf16, #tpu.memory_space<vmem>>, vector<96x64xbf16>
    %c0_39 = arith.constant 0 : index
    %c704 = arith.constant 704 : index
    %55 = vector.load %arg5[%c0_39, %c704] : memref<96x1600xbf16, #tpu.memory_space<vmem>>, vector<96x64xbf16>
    tpu.vector_store %arg5[%c0_39, %c704], %54 {strides = array<i32>} : memref<96x1600xbf16, #tpu.memory_space<vmem>>, vector<96x64xbf16>,
    %c26_40 = arith.constant 26 : index
    %c0_41 = arith.constant 0 : index
    %56 = vector.load %arg4[%c26_40, %c0_41] : memref<148x64xbf16, #tpu.memory_space<vmem>>, vector<96x64xbf16>
    %c0_42 = arith.constant 0 : index
    %c768 = arith.constant 768 : index
    %57 = vector.load %arg5[%c0_42, %c768] : memref<96x1600xbf16, #tpu.memory_space<vmem>>, vector<96x64xbf16>
    tpu.vector_store %arg5[%c0_42, %c768], %56 {strides = array<i32>} : memref<96x1600xbf16, #tpu.memory_space<vmem>>, vector<96x64xbf16>,
    %c27 = arith.constant 27 : index
    %c0_43 = arith.constant 0 : index
    %58 = vector.load %arg4[%c27, %c0_43] : memref<148x64xbf16, #tpu.memory_space<vmem>>, vector<96x64xbf16>
    %c0_44 = arith.constant 0 : index
    %c832 = arith.constant 832 : index
    %59 = vector.load %arg5[%c0_44, %c832] : memref<96x1600xbf16, #tpu.memory_space<vmem>>, vector<96x64xbf16>
    tpu.vector_store %arg5[%c0_44, %c832], %58 {strides = array<i32>} : memref<96x1600xbf16, #tpu.memory_space<vmem>>, vector<96x64xbf16>,
    %c28 = arith.constant 28 : index
    %c0_45 = arith.constant 0 : index
    %60 = vector.load %arg4[%c28, %c0_45] : memref<148x64xbf16, #tpu.memory_space<vmem>>, vector<96x64xbf16>
    %c0_46 = arith.constant 0 : index
    %c896 = arith.constant 896 : index
    %61 = vector.load %arg5[%c0_46, %c896] : memref<96x1600xbf16, #tpu.memory_space<vmem>>, vector<96x64xbf16>
    tpu.vector_store %arg5[%c0_46, %c896], %60 {strides = array<i32>} : memref<96x1600xbf16, #tpu.memory_space<vmem>>, vector<96x64xbf16>,
    %c36 = arith.constant 36 : index
    %c0_47 = arith.constant 0 : index
    %62 = vector.load %arg4[%c36, %c0_47] : memref<148x64xbf16, #tpu.memory_space<vmem>>, vector<96x64xbf16>
    %c0_48 = arith.constant 0 : index
    %c960 = arith.constant 960 : index
    %63 = vector.load %arg5[%c0_48, %c960] : memref<96x1600xbf16, #tpu.memory_space<vmem>>, vector<96x64xbf16>
    tpu.vector_store %arg5[%c0_48, %c960], %62 {strides = array<i32>} : memref<96x1600xbf16, #tpu.memory_space<vmem>>, vector<96x64xbf16>,
    %c37 = arith.constant 37 : index
    %c0_49 = arith.constant 0 : index
    %64 = vector.load %arg4[%c37, %c0_49] : memref<148x64xbf16, #tpu.memory_space<vmem>>, vector<96x64xbf16>
    %c0_50 = arith.constant 0 : index
    %c1024 = arith.constant 1024 : index
    %65 = vector.load %arg5[%c0_50, %c1024] : memref<96x1600xbf16, #tpu.memory_space<vmem>>, vector<96x64xbf16>
    tpu.vector_store %arg5[%c0_50, %c1024], %64 {strides = array<i32>} : memref<96x1600xbf16, #tpu.memory_space<vmem>>, vector<96x64xbf16>,
    %c38_51 = arith.constant 38 : index
    %c0_52 = arith.constant 0 : index
    %66 = vector.load %arg4[%c38_51, %c0_52] : memref<148x64xbf16, #tpu.memory_space<vmem>>, vector<96x64xbf16>
    %c0_53 = arith.constant 0 : index
    %c1088 = arith.constant 1088 : index
    %67 = vector.load %arg5[%c0_53, %c1088] : memref<96x1600xbf16, #tpu.memory_space<vmem>>, vector<96x64xbf16>
    tpu.vector_store %arg5[%c0_53, %c1088], %66 {strides = array<i32>} : memref<96x1600xbf16, #tpu.memory_space<vmem>>, vector<96x64xbf16>,
    %c39 = arith.constant 39 : index
    %c0_54 = arith.constant 0 : index
    %68 = vector.load %arg4[%c39, %c0_54] : memref<148x64xbf16, #tpu.memory_space<vmem>>, vector<96x64xbf16>
    %c0_55 = arith.constant 0 : index
    %c1152 = arith.constant 1152 : index
    %69 = vector.load %arg5[%c0_55, %c1152] : memref<96x1600xbf16, #tpu.memory_space<vmem>>, vector<96x64xbf16>
    tpu.vector_store %arg5[%c0_55, %c1152], %68 {strides = array<i32>} : memref<96x1600xbf16, #tpu.memory_space<vmem>>, vector<96x64xbf16>,
    %c40 = arith.constant 40 : index
    %c0_56 = arith.constant 0 : index
    %70 = vector.load %arg4[%c40, %c0_56] : memref<148x64xbf16, #tpu.memory_space<vmem>>, vector<96x64xbf16>
    %c0_57 = arith.constant 0 : index
    %c1216 = arith.constant 1216 : index
    %71 = vector.load %arg5[%c0_57, %c1216] : memref<96x1600xbf16, #tpu.memory_space<vmem>>, vector<96x64xbf16>
    tpu.vector_store %arg5[%c0_57, %c1216], %70 {strides = array<i32>} : memref<96x1600xbf16, #tpu.memory_space<vmem>>, vector<96x64xbf16>,
    %c48 = arith.constant 48 : index
    %c0_58 = arith.constant 0 : index
    %72 = vector.load %arg4[%c48, %c0_58] : memref<148x64xbf16, #tpu.memory_space<vmem>>, vector<96x64xbf16>
    %c0_59 = arith.constant 0 : index
    %c1280 = arith.constant 1280 : index
    %73 = vector.load %arg5[%c0_59, %c1280] : memref<96x1600xbf16, #tpu.memory_space<vmem>>, vector<96x64xbf16>
    tpu.vector_store %arg5[%c0_59, %c1280], %72 {strides = array<i32>} : memref<96x1600xbf16, #tpu.memory_space<vmem>>, vector<96x64xbf16>,
    %c49 = arith.constant 49 : index
    %c0_60 = arith.constant 0 : index
    %74 = vector.load %arg4[%c49, %c0_60] : memref<148x64xbf16, #tpu.memory_space<vmem>>, vector<96x64xbf16>
    %c0_61 = arith.constant 0 : index
    %c1344 = arith.constant 1344 : index
    %75 = vector.load %arg5[%c0_61, %c1344] : memref<96x1600xbf16, #tpu.memory_space<vmem>>, vector<96x64xbf16>
    tpu.vector_store %arg5[%c0_61, %c1344], %74 {strides = array<i32>} : memref<96x1600xbf16, #tpu.memory_space<vmem>>, vector<96x64xbf16>,
    %c50_62 = arith.constant 50 : index
    %c0_63 = arith.constant 0 : index
    %76 = vector.load %arg4[%c50_62, %c0_63] : memref<148x64xbf16, #tpu.memory_space<vmem>>, vector<96x64xbf16>
    %c0_64 = arith.constant 0 : index
    %c1408 = arith.constant 1408 : index
    %77 = vector.load %arg5[%c0_64, %c1408] : memref<96x1600xbf16, #tpu.memory_space<vmem>>, vector<96x64xbf16>
    tpu.vector_store %arg5[%c0_64, %c1408], %76 {strides = array<i32>} : memref<96x1600xbf16, #tpu.memory_space<vmem>>, vector<96x64xbf16>,
    %c51 = arith.constant 51 : index
    %c0_65 = arith.constant 0 : index
    %78 = vector.load %arg4[%c51, %c0_65] : memref<148x64xbf16, #tpu.memory_space<vmem>>, vector<96x64xbf16>
    %c0_66 = arith.constant 0 : index
    %c1472 = arith.constant 1472 : index
    %79 = vector.load %arg5[%c0_66, %c1472] : memref<96x1600xbf16, #tpu.memory_space<vmem>>, vector<96x64xbf16>
    tpu.vector_store %arg5[%c0_66, %c1472], %78 {strides = array<i32>} : memref<96x1600xbf16, #tpu.memory_space<vmem>>, vector<96x64xbf16>,
    %c52 = arith.constant 52 : index
    %c0_67 = arith.constant 0 : index
    %80 = vector.load %arg4[%c52, %c0_67] : memref<148x64xbf16, #tpu.memory_space<vmem>>, vector<96x64xbf16>
    %c0_68 = arith.constant 0 : index
    %c1536 = arith.constant 1536 : index
    %81 = vector.load %arg5[%c0_68, %c1536] : memref<96x1600xbf16, #tpu.memory_space<vmem>>, vector<96x64xbf16>
    tpu.vector_store %arg5[%c0_68, %c1536], %80 {strides = array<i32>} : memref<96x1600xbf16, #tpu.memory_space<vmem>>, vector<96x64xbf16>,
    %c0_69 = arith.constant 0 : index
    %c0_70 = arith.constant 0 : index
    %82 = vector.load %arg5[%c0_69, %c0_70] : memref<96x1600xbf16, #tpu.memory_space<vmem>>, vector<96x1600xbf16>
    %c0_71 = arith.constant 0 : index
    %c0_72 = arith.constant 0 : index
    %83 = vector.load %arg2[%c0_71, %c0_72] : memref<1600x128xbf16, #tpu.memory_space<vmem>>, vector<1600x128xbf16>
    %cst_73 = arith.constant dense<0.000000e+00> : vector<96x128xf32>
    %84 = tpu.matmul %82, %83, %cst_73 {dimension_numbers = #tpu.dot_dimension_numbers<[1], [0], [0], [1], [0, 0, 1, 1], [], []>} : vector<96x1600xbf16>, vector<1600x128xbf16>, vector<96x128xf32> -> vector<96x128xf32>
    %85 = vector.shape_cast %84 : vector<96x128xf32> to vector<1x8x12x128xf32>
    %86 = vector.extract_strided_slice %85 {offsets = [0, 0, 0, 0], sizes = [1, 8, 8, 128], strides = [1, 1, 1, 1]} : vector<1x8x12x128xf32> to vector<1x8x8x128xf32>
    %c0_74 = arith.constant 0 : index
    %c0_75 = arith.constant 0 : index
    %c0_76 = arith.constant 0 : index
    %c0_77 = arith.constant 0 : index
    %87 = vector.load %arg3[%c0_74, %c0_75, %c0_76, %c0_77] : memref<1x8x8x128xf32, #tpu.memory_space<vmem>>, vector<1x8x8x128xf32>
    tpu.vector_store %arg3[%c0_74, %c0_75, %c0_76, %c0_77], %86 {strides = array<i32>} : memref<1x8x8x128xf32, #tpu.memory_space<vmem>>, vector<1x8x8x128xf32>,
    return
  }
  func.func @transform_0(%arg0: i32) -> (i32, i32, i32, i32) {
    %c0_i32 = arith.constant 0 : i32
    %c0_i32_0 = arith.constant 0 : i32
    %c0_i32_1 = arith.constant 0 : i32
    %c0_i32_2 = arith.constant 0 : i32
    return %arg0, %c0_i32, %c0_i32_0, %c0_i32_1 : i32, i32, i32, i32
  }
  func.func @transform_1(%arg0: i32) -> (i32, i32) {
    %c0_i32 = arith.constant 0 : i32
    %c0_i32_0 = arith.constant 0 : i32
    %c0_i32_1 = arith.constant 0 : i32
    return %c0_i32, %c0_i32_0 : i32, i32
  }
  func.func @transform_2(%arg0: i32) -> (i32, i32, i32, i32) {
    %c0_i32 = arith.constant 0 : i32
    %c0_i32_0 = arith.constant 0 : i32
    %c0_i32_1 = arith.constant 0 : i32
    %c0_i32_2 = arith.constant 0 : i32
    return %arg0, %c0_i32, %c0_i32_0, %c0_i32_1 : i32, i32, i32, i32
  }
}

</mosaic_0001>

<llo_original>
// kernel: p2c3_forward.1
$region0: #{p2c3_forward.1}
  #allocation0 [shape = 'u32[]', space=smem, size = 0x4, offset = 0x4, fixed_abs, tag = 'smem constant byte address 0x4 - core index']
  #allocation1 [shape = 'u32[144,128]{1,0:T(1,128)}', space=vmem, size = 0x12000, scoped, tag = 'internal scratch']
  #allocation2 [shape = 'bf16[148,64]{1,0:T(8,128)(2,1)}', space=vmem, size = 0x9800, scoped, tag = 'scratch operand']
  #allocation3 [shape = 'bf16[96,1600]{1,0:T(8,128)(2,1)}', space=vmem, size = 0x4e000, scoped, tag = 'scratch operand']
  %s0 = inlined_call_operand.vmem [shape: bf16[2,16,8,128], index: 0, kind: input, shape index: {}]
  %s1 = inlined_call_operand.vmem [shape: bf16[1600,128], index: 1, kind: input, shape index: {}]
  %s2 = inlined_call_operand.hbm [shape: f32[2,8,8,128], index: 2, kind: output, shape index: {}]
  %s3 = sld [smem:[#allocation0]]
  $region41: #{p2c3_forward.1} parent=0
    _
  %s5 = ssub.s32 1, %s3
  %s6 = scalar_select 0, %s5, %s3
  $region1: #{p2c3_forward.1} parent=0
    #allocation4 [shape = 'u8[65536]{0}', space=vmem, size = 0x10000, scoped, tag = 'output window, operand 0']
    #allocation5 [shape = 's32[2]{0}', space=sflag, size = 0x8, scoped, tag = 'scoped memory for p2c3_forward.1']
    %7 = vsyncpa [#allocation5], 0
    %s8 = scalar_lea.sflag [#allocation5], 1
    %9 = vsyncpa %s8, 0
    loop: start=0, step=1, limit=4
    $region2: #{p2c3_forward.1} parent=1 // loop_pre_header
      _
    $region3: #{p2c3_forward.1} parent=1 // loop_header
      %s11 = sphi 0, %s15
      %p12 = scmp.ge.s32.totalorder %s11, 4
      %s21 = sphi 0, %s23
      %s24 = sphi 0, %s21
      %s25 = sphi 0, %s24
      %s41 = sphi 0, %s25
      %s45 = sphi 0, %s45
      %s47 = sphi 0, %s45
      %s48 = sphi 0, %s47
      %s62 = sphi 0, %s48
      %s68 = sphi 0, %s70
      %s71 = sphi 0, %s68
      %s72 = sphi 0, %s71
      %s88 = sphi 0, %s72
    $region4: #{p2c3_forward.1} parent=1 // loop_header_branch
      %14 = sbr.rel (%p12) target = $region8
    $region5: #{p2c3_forward.1} parent=1 // loop_body
      %s16 = ssub.s32 %s11, 1
      %s17 = ssub.s32 %s11, 2
      %s18 = sadd.s32 %s11, 1
      %s19 = ssub.s32 %s11, %s18
      %p20 = scmp.eq.s32.totalorder %s19, 0
      %s22 = sadd.s32 %s21, 1
      %s23 = scalar_select %p20, %s21, %s22
      %p26 = pneg %p20
      %p27 = scmp.eq.s32.totalorder %s11, 1
      %p28 = por %p26, %p27
      %p29 = scmp.ne.s32.totalorder %s21, %s24
      %p30 = scmp.eq.s32.totalorder %s11, 0
      %p31 = por %p29, %p30
      %p32 = scmp.ne.s32.totalorder %s21, %s24
      %p33 = scmp.eq.s32.totalorder %s16, 1
      %p34 = por %p32, %p33
      %p35 = scmp.ne.s32.totalorder %s24, %s25
      %p36 = scmp.eq.s32.totalorder %s16, 0
      %p37 = por %p35, %p36
      %p38 = scmp.ne.s32.totalorder %s24, %s25
      %p39 = scmp.eq.s32.totalorder %s17, 1
      %p40 = por %p38, %p39
      %p42 = scmp.ne.s32.totalorder %s25, %s41
      %p43 = scmp.eq.s32.totalorder %s17, 0
      %p44 = por %p42, %p43
      %s46 = sadd.s32 %s45, 1
      %p49 = scmp.eq.s32.totalorder %s11, 1
      %p50 = scmp.ne.s32.totalorder %s45, %s47
      %p51 = scmp.eq.s32.totalorder %s11, 0
      %p52 = por %p50, %p51
      %p53 = scmp.ne.s32.totalorder %s45, %s47
      %p54 = scmp.eq.s32.totalorder %s16, 1
      %p55 = por %p53, %p54
      %p56 = scmp.ne.s32.totalorder %s47, %s48
      %p57 = scmp.eq.s32.totalorder %s16, 0
      %p58 = por %p56, %p57
      %p59 = scmp.ne.s32.totalorder %s47, %s48
      %p60 = scmp.eq.s32.totalorder %s17, 1
      %p61 = por %p59, %p60
      %p63 = scmp.ne.s32.totalorder %s48, %s62
      %p64 = scmp.eq.s32.totalorder %s17, 0
      %p65 = por %p63, %p64
      %s66 = ssub.s32 %s11, %s18
      %p67 = scmp.eq.s32.totalorder %s66, 0
      %s69 = sadd.s32 %s68, 1
      %s70 = scalar_select %p67, %s68, %s69
      %p73 = pneg %p67
      %p74 = scmp.eq.s32.totalorder %s11, 1
      %p75 = por %p73, %p74
      %p76 = scmp.ne.s32.totalorder %s68, %s71
      %p77 = scmp.eq.s32.totalorder %s11, 0
      %p78 = por %p76, %p77
      %p79 = scmp.ne.s32.totalorder %s68, %s71
      %p80 = scmp.eq.s32.totalorder %s16, 1
      %p81 = por %p79, %p80
      %p82 = scmp.ne.s32.totalorder %s71, %s72
      %p83 = scmp.eq.s32.totalorder %s16, 0
      %p84 = por %p82, %p83
      %p85 = scmp.ne.s32.totalorder %s71, %s72
      %p86 = scmp.eq.s32.totalorder %s17, 1
      %p87 = por %p85, %p86
      %p89 = scmp.ne.s32.totalorder %s72, %s88
      %p90 = scmp.eq.s32.totalorder %s17, 0
      %p91 = por %p89, %p90
      %p92 = scmp.le.s32.totalorder 1, %s11
      %p93 = scmp.lt.s32.totalorder %s11, 3
      %p94 = pnand %p92, %p93
      %p95 = pneg %p94
      // Predicated region
      $region9: #{p2c3_forward.1} parent=5 // pred_check
        _
      $region10: #{p2c3_forward.1} parent=5 // pred_check_branch
        %97 = sbr.rel (%p94) target = $region12
      $region11: #{p2c3_forward.1} parent=5 // pred_region
        %s98 = ssub.s32 %s11, 1
        // Predicated region
        $region13: #{p2c3_forward.1} parent=11 // pred_check
          %p99 = pneg %p58
        $region14: #{p2c3_forward.1} parent=11 // pred_check_branch
          %101 = sbr.rel (%p99) target = $region16
        $region15: #{p2c3_forward.1} parent=11 // pred_region
          _
        $region16: #{p2c3_forward.1} parent=11 // pred_fallthru
          _
      $region12: #{p2c3_forward.1} parent=5 // pred_fallthru
        _
      %p102 = scmp.lt.s32.totalorder %s11, 2
      // Predicated region
      $region17: #{p2c3_forward.1} parent=5 // pred_check
        %p103 = pneg %p102
      $region18: #{p2c3_forward.1} parent=5 // pred_check_branch
        %105 = sbr.rel (%p103) target = $region20
      $region19: #{p2c3_forward.1} parent=5 // pred_region
        // Predicated region
        $region21: #{p2c3_forward.1} parent=19 // pred_check
          %p106 = pneg %p31
        $region22: #{p2c3_forward.1} parent=19 // pred_check_branch
          %108 = sbr.rel (%p106) target = $region24
        $region23: #{p2c3_forward.1} parent=19 // pred_region
          %p109 = scmp.lt.s32.totalorder %s11, 1
          %s110 = scalar_select %p109, %s11, 1
          %s111 = smul.addr %s110, 16
          %s112 = smul.addr %s111, 4
          %s113 = scalar_lea.vmem %s0, %s112
        $region24: #{p2c3_forward.1} parent=19 // pred_fallthru
          _
      $region20: #{p2c3_forward.1} parent=5 // pred_fallthru
        _
      %p114 = scmp.le.s32.totalorder 1, %s11
      %p115 = scmp.lt.s32.totalorder %s11, 3
      %p116 = pnand %p114, %p115
      %p117 = pneg %p116
      // Predicated region
      $region25: #{p2c3_forward.1} parent=5 // pred_check
        _
      $region26: #{p2c3_forward.1} parent=5 // pred_check_branch
        %119 = sbr.rel (%p116) target = $region28
      $region27: #{p2c3_forward.1} parent=5 // pred_region
        %s120 = ssub.s32 %s11, 1
        %p121 = scmp.lt.s32.totalorder %s16, 1
        %s122 = scalar_select %p121, %s16, 1
        %s123 = smul.addr %s122, 16
        %s124 = smul.addr %s123, 4
        %s125 = scalar_lea.vmem %s0, %s124
        %p126 = pneg %p37
        %p127 = pneg %p34
        %p128 = pneg %p58
        %p129 = pneg %p55
        %p130 = pneg %p84
        %p131 = pneg %p81
        %s132 = sand.u32 %s71, 1
        %s133 = scalar_lea.sflag [#allocation5], %s132
        %s134 = sand.u32 %s71, 1
        %s135 = smul.addr %s134, 64
        %s136 = scalar_lea.vmem [#allocation4], %s135
        %p137 = scmp.lt.s32.totalorder %s16, 1
        %s138 = scalar_select %p137, %s16, 1
        %s139 = smul.addr %s138, 16
        %s140 = smul.addr %s139, 4
        %s141 = scalar_lea.vmem %s0, %s140
        %v144 = vld [vmem:[%s141] sm:$0xf]
        %v145 = vld [vmem:[%s141 + $0x4] sm:$0xf]
        %v146 = vld [vmem:[%s141 + $0x8] sm:$0xf]
        %v147 = vld [vmem:[%s141 + $0xc] sm:$0xf]
        %v148 = vld [vmem:[%s141 + $0x10] sm:$0xf]
        %v149 = vld [vmem:[%s141 + $0x14] sm:$0xf]
        %v150 = vld [vmem:[%s141 + $0x18] sm:$0xf]
        %v151 = vld [vmem:[%s141 + $0x1c] sm:$0xf]
        %v152 = vld [vmem:[%s141 + $0x20] sm:$0xf]
        %v153 = vld [vmem:[%s141 + $0x24] sm:$0xf]
        %v154 = vld [vmem:[%s141 + $0x28] sm:$0xf]
        %v155 = vld [vmem:[%s141 + $0x2c] sm:$0xf]
        %v156 = vld [vmem:[%s141 + $0x30] sm:$0xf]
        %v157 = vld [vmem:[%s141 + $0x34] sm:$0xf]
        %v158 = vld [vmem:[%s141 + $0x38] sm:$0xf]
        %v159 = vld [vmem:[%s141 + $0x3c] sm:$0xf]
        %vm160 = vcmask 1043456
        %v163 = vsel %vm160, %v144, 4286644096
        %v166 = vsel %vm160, %v145, 4286644096
        %v168 = vmax.bf16 %v163, %v166
        %v170 = vsel %vm160, %v146, 4286644096
        %v173 = vsel %vm160, %v147, 4286644096
        %v175 = vmax.bf16 %v170, %v173
        %v177 = vsel %vm160, %v148, 4286644096
        %v180 = vsel %vm160, %v149, 4286644096
        %v182 = vmax.bf16 %v177, %v180
        %v184 = vsel %vm160, %v150, 4286644096
        %v187 = vsel %vm160, %v151, 4286644096
        %v189 = vmax.bf16 %v184, %v187
        %v191 = vsel %vm160, %v152, 4286644096
        %v194 = vsel %vm160, %v153, 4286644096
        %v196 = vmax.bf16 %v191, %v194
        %v198 = vsel %vm160, %v154, 4286644096
        %v201 = vsel %vm160, %v155, 4286644096
        %v203 = vmax.bf16 %v198, %v201
        %v205 = vsel %vm160, %v156, 4286644096
        %v208 = vsel %vm160, %v157, 4286644096
        %v210 = vmax.bf16 %v205, %v208
        %v212 = vsel %vm160, %v158, 4286644096
        %v215 = vsel %vm160, %v159, 4286644096
        %v217 = vmax.bf16 %v212, %v215
        %226 = vrot.lane.b32.xlu0 %v168, 64
        %v227 = vpop.permute.xlu0 %226
        %228 = vrot.lane.b32.xlu0 %v175, 64
        %v229 = vpop.permute.xlu0 %228
        %230 = vrot.lane.b32.xlu0 %v182, 64
        %v231 = vpop.permute.xlu0 %230
        %232 = vrot.lane.b32.xlu0 %v189, 64
        %v233 = vpop.permute.xlu0 %232
        %234 = vrot.lane.b32.xlu0 %v196, 64
        %v235 = vpop.permute.xlu0 %234
        %236 = vrot.lane.b32.xlu0 %v203, 64
        %v237 = vpop.permute.xlu0 %236
        %238 = vrot.lane.b32.xlu0 %v210, 64
        %v239 = vpop.permute.xlu0 %238
        %240 = vrot.lane.b32.xlu0 %v217, 64
        %v241 = vpop.permute.xlu0 %240
        %v250 = vmax.bf16 %v168, %v227
        %v251 = vmax.bf16 %v175, %v229
        %v252 = vmax.bf16 %v182, %v231
        %v253 = vmax.bf16 %v189, %v233
        %v254 = vmax.bf16 %v196, %v235
        %v255 = vmax.bf16 %v203, %v237
        %v256 = vmax.bf16 %v210, %v239
        %v257 = vmax.bf16 %v217, %v241
        %vm258 = vcmask 519168
        %259 = vst.msk [vmem:[#allocation2] sm:$0xf] %vm258, 0
        %260 = vst.msk [vmem:[#allocation2 + $0x4] sm:$0xf] %vm258, 0
        %261 = vst.msk [vmem:[#allocation2 + $0x8] sm:$0xf] %vm258, 0
        %262 = vst.msk [vmem:[#allocation2 + $0xc] sm:$0xf] %vm258, 0
        %263 = vst.msk [vmem:[#allocation2 + $0x10] sm:$0xf] %vm258, 0
        %264 = vst.msk [vmem:[#allocation2 + $0x14] sm:$0xf] %vm258, 0
        %265 = vst.msk [vmem:[#allocation2 + $0x18] sm:$0xf] %vm258, 0
        %266 = vst.msk [vmem:[#allocation2 + $0x1c] sm:$0xf] %vm258, 0
        %267 = vst.msk [vmem:[#allocation2 + $0x20] sm:$0xf] %vm258, 0
        %268 = vst.msk [vmem:[#allocation2 + $0x24] sm:$0xf] %vm258, 0
        %269 = vst.msk [vmem:[#allocation2 + $0x28] sm:$0xf] %vm258, 0
        %270 = vst.msk [vmem:[#allocation2 + $0x2c] sm:$0xf] %vm258, 0
        %271 = vst.msk [vmem:[#allocation2 + $0x30] sm:$0xf] %vm258, 0
        %272 = vst.msk [vmem:[#allocation2 + $0x34] sm:$0xf] %vm258, 0
        %273 = vst.msk [vmem:[#allocation2 + $0x38] sm:$0xf] %vm258, 0
        %274 = vst.msk [vmem:[#allocation2 + $0x3c] sm:$0xf] %vm258, 0
        %275 = vst.msk [vmem:[#allocation2 + $0x40] sm:$0xf] %vm258, 0
        %276 = vst.msk [vmem:[#allocation2 + $0x44] sm:$0xf] %vm258, 0
        %vm277 = vcmask 517120
        %278 = vst.msk [vmem:[#allocation2 + $0x48] sm:$0x3] %vm277, 0
        %v280 = vrot.slane %v250, 7
        %v281 = vrot.slane %v280, 4
        %vm284 = vcmask 519169
        %285 = vst.msk [vmem:[#allocation2 + $0xc] sm:$0xe] %vm284, %v280
        %vm286 = vcmask 516096
        %287 = vst.msk [vmem:[#allocation2 + $0x10] sm:$0x1] %vm286, %v281
        %v289 = vrot.slane %v251, 5
        %v290 = vrot.slane %v289, 4
        %vm293 = vcmask 519171
        %294 = vst.msk [vmem:[#allocation2 + $0x10] sm:$0x8] %vm293, %v289
        %vm295 = vcmask 518144
        %296 = vst.msk [vmem:[#allocation2 + $0x14] sm:$0x7] %vm295, %v290
        %v298 = vrot.slane %v252, 7
        %v299 = vrot.slane %v298, 4
        %302 = vst.msk [vmem:[#allocation2 + $0x18] sm:$0xe] %vm284, %v298
        %303 = vst.msk [vmem:[#allocation2 + $0x1c] sm:$0x1] %vm286, %v299
        %v305 = vrot.slane %v253, 5
        %v306 = vrot.slane %v305, 4
        %309 = vst.msk [vmem:[#allocation2 + $0x1c] sm:$0x8] %vm293, %v305
        %310 = vst.msk [vmem:[#allocation2 + $0x20] sm:$0x7] %vm295, %v306
        %v312 = vrot.slane %v254, 7
        %v313 = vrot.slane %v312, 4
        %316 = vst.msk [vmem:[#allocation2 + $0x24] sm:$0xe] %vm284, %v312
        %317 = vst.msk [vmem:[#allocation2 + $0x28] sm:$0x1] %vm286, %v313
        %v319 = vrot.slane %v255, 5
        %v320 = vrot.slane %v319, 4
        %323 = vst.msk [vmem:[#allocation2 + $0x28] sm:$0x8] %vm293, %v319
        %324 = vst.msk [vmem:[#allocation2 + $0x2c] sm:$0x7] %vm295, %v320
        %v326 = vrot.slane %v256, 7
        %v327 = vrot.slane %v326, 4
        %330 = vst.msk [vmem:[#allocation2 + $0x30] sm:$0xe] %vm284, %v326
        %331 = vst.msk [vmem:[#allocation2 + $0x34] sm:$0x1] %vm286, %v327
        %v333 = vrot.slane %v257, 5
        %v334 = vrot.slane %v333, 4
        %337 = vst.msk [vmem:[#allocation2 + $0x34] sm:$0x8] %vm293, %v333
        %338 = vst.msk [vmem:[#allocation2 + $0x38] sm:$0x7] %vm295, %v334
        %v339 = vld [vmem:[#allocation2] sm:$0xf]
        %v340 = vld [vmem:[#allocation2 + $0x4] sm:$0xf]
        %v341 = vld [vmem:[#allocation2 + $0x8] sm:$0xf]
        %v342 = vld [vmem:[#allocation2 + $0xc] sm:$0xf]
        %v343 = vld [vmem:[#allocation2 + $0x10] sm:$0xf]
        %v344 = vld [vmem:[#allocation2 + $0x14] sm:$0xf]
        %v345 = vld [vmem:[#allocation2 + $0x18] sm:$0xf]
        %v346 = vld [vmem:[#allocation2 + $0x1c] sm:$0xf]
        %v347 = vld [vmem:[#allocation2 + $0x20] sm:$0xf]
        %v348 = vld [vmem:[#allocation2 + $0x24] sm:$0xf]
        %v349 = vld [vmem:[#allocation2 + $0x28] sm:$0xf]
        %v350 = vld [vmem:[#allocation2 + $0x2c] sm:$0xf]
        %351 = vst.msk [vmem:[#allocation3] sm:$0xf] %vm258, %v339
        %352 = vst.msk [vmem:[#allocation3 + $0x34] sm:$0xf] %vm258, %v340
        %353 = vst.msk [vmem:[#allocation3 + $0x68] sm:$0xf] %vm258, %v341
        %354 = vst.msk [vmem:[#allocation3 + $0x9c] sm:$0xf] %vm258, %v342
        %355 = vst.msk [vmem:[#allocation3 + $0xd0] sm:$0xf] %vm258, %v343
        %356 = vst.msk [vmem:[#allocation3 + $0x104] sm:$0xf] %vm258, %v344
        %357 = vst.msk [vmem:[#allocation3 + $0x138] sm:$0xf] %vm258, %v345
        %358 = vst.msk [vmem:[#allocation3 + $0x16c] sm:$0xf] %vm258, %v346
        %359 = vst.msk [vmem:[#allocation3 + $0x1a0] sm:$0xf] %vm258, %v347
        %360 = vst.msk [vmem:[#allocation3 + $0x1d4] sm:$0xf] %vm258, %v348
        %361 = vst.msk [vmem:[#allocation3 + $0x208] sm:$0xf] %vm258, %v349
        %362 = vst.msk [vmem:[#allocation3 + $0x23c] sm:$0xf] %vm258, %v350
        %v363 = vld [vmem:[#allocation2] sm:$0xf]
        %v364 = vld [vmem:[#allocation2 + $0x4] sm:$0xf]
        %v365 = vld [vmem:[#allocation2 + $0x8] sm:$0xf]
        %v366 = vld [vmem:[#allocation2 + $0xc] sm:$0xf]
        %v367 = vld [vmem:[#allocation2 + $0x10] sm:$0xf]
        %v368 = vld [vmem:[#allocation2 + $0x14] sm:$0xf]
        %v369 = vld [vmem:[#allocation2 + $0x18] sm:$0xf]
        %v370 = vld [vmem:[#allocation2 + $0x1c] sm:$0xf]
        %v371 = vld [vmem:[#allocation2 + $0x20] sm:$0xf]
        %v372 = vld [vmem:[#allocation2 + $0x24] sm:$0xf]
        %v373 = vld [vmem:[#allocation2 + $0x28] sm:$0xf]
        %v374 = vld [vmem:[#allocation2 + $0x2c] sm:$0xf]
        %v375 = vld [vmem:[#allocation2 + $0x30] sm:$0x1]
        %vm376 = vsmask.f32 3328
        %vm377 = vsmask.f32 7440
        %vm378 = vmor %vm376, %vm377
        %v380 = vshrl.u32 %v363, 16
        %v382 = vrot.slane %v380, 4
        %v383 = vshll.u32 %v363, 16
        %v385 = vrot.slane %v383, 5
        %v386 = vor.u32 %v382, %v385
        %v387 = vrot.slane %v386, 4
        %v389 = vshll.u32 %v364, 16
        %v391 = vrot.slane %v389, 5
        %v392 = vsel %vm378, %v387, %v391
        %v393 = vshrl.u32 %v364, 16
        %v395 = vrot.slane %v393, 4
        %v396 = vor.u32 %v395, %v391
        %v397 = vrot.slane %v396, 4
        %v399 = vshll.u32 %v365, 16
        %v401 = vrot.slane %v399, 5
        %v402 = vsel %vm378, %v397, %v401
        %v403 = vshrl.u32 %v365, 16
        %v405 = vrot.slane %v403, 4
        %v406 = vor.u32 %v405, %v401
        %v407 = vrot.slane %v406, 4
        %v409 = vshll.u32 %v366, 16
        %v411 = vrot.slane %v409, 5
        %v412 = vsel %vm378, %v407, %v411
        %v413 = vshrl.u32 %v366, 16
        %v415 = vrot.slane %v413, 4
        %v416 = vor.u32 %v415, %v411
        %v417 = vrot.slane %v416, 4
        %v419 = vshll.u32 %v367, 16
        %v421 = vrot.slane %v419, 5
        %v422 = vsel %vm378, %v417, %v421
        %v423 = vshrl.u32 %v367, 16
        %v425 = vrot.slane %v423, 4
        %v426 = vor.u32 %v425, %v421
        %v427 = vrot.slane %v426, 4
        %v429 = vshll.u32 %v368, 16
        %v431 = vrot.slane %v429, 5
        %v432 = vsel %vm378, %v427, %v431
        %v433 = vshrl.u32 %v368, 16
        %v435 = vrot.slane %v433, 4
        %v436 = vor.u32 %v435, %v431
        %v437 = vrot.slane %v436, 4
        %v439 = vshll.u32 %v369, 16
        %v441 = vrot.slane %v439, 5
        %v442 = vsel %vm378, %v437, %v441
        %v443 = vshrl.u32 %v369, 16
        %v445 = vrot.slane %v443, 4
        %v446 = vor.u32 %v445, %v441
        %v447 = vrot.slane %v446, 4
        %v449 = vshll.u32 %v370, 16
        %v451 = vrot.slane %v449, 5
        %v452 = vsel %vm378, %v447, %v451
        %v453 = vshrl.u32 %v370, 16
        %v455 = vrot.slane %v453, 4
        %v456 = vor.u32 %v455, %v451
        %v457 = vrot.slane %v456, 4
        %v459 = vshll.u32 %v371, 16
        %v461 = vrot.slane %v459, 5
        %v462 = vsel %vm378, %v457, %v461
        %v463 = vshrl.u32 %v371, 16
        %v465 = vrot.slane %v463, 4
        %v466 = vor.u32 %v465, %v461
        %v467 = vrot.slane %v466, 4
        %v469 = vshll.u32 %v372, 16
        %v471 = vrot.slane %v469, 5
        %v472 = vsel %vm378, %v467, %v471
        %v473 = vshrl.u32 %v372, 16
        %v475 = vrot.slane %v473, 4
        %v476 = vor.u32 %v475, %v471
        %v477 = vrot.slane %v476, 4
        %v479 = vshll.u32 %v373, 16
        %v481 = vrot.slane %v479, 5
        %v482 = vsel %vm378, %v477, %v481
        %v483 = vshrl.u32 %v373, 16
        %v485 = vrot.slane %v483, 4
        %v486 = vor.u32 %v485, %v481
        %v487 = vrot.slane %v486, 4
        %v489 = vshll.u32 %v374, 16
        %v491 = vrot.slane %v489, 5
        %v492 = vsel %vm378, %v487, %v491
        %v493 = vshrl.u32 %v374, 16
        %v495 = vrot.slane %v493, 4
        %v496 = vor.u32 %v495, %v491
        %v497 = vrot.slane %v496, 4
        %v499 = vshll.u32 %v375, 16
        %v501 = vrot.slane %v499, 5
        %v502 = vsel %vm378, %v497, %v501
        %503 = vrot.lane.b32.xlu0 %v392, 64
        %v504 = vpop.permute.xlu0 %503
        %505 = vrot.lane.b32.xlu0 %v402, 64
        %v506 = vpop.permute.xlu0 %505
        %507 = vrot.lane.b32.xlu0 %v412, 64
        %v508 = vpop.permute.xlu0 %507
        %509 = vrot.lane.b32.xlu0 %v422, 64
        %v510 = vpop.permute.xlu0 %509
        %511 = vrot.lane.b32.xlu0 %v432, 64
        %v512 = vpop.permute.xlu0 %511
        %513 = vrot.lane.b32.xlu0 %v442, 64
        %v514 = vpop.permute.xlu0 %513
        %515 = vrot.lane.b32.xlu0 %v452, 64
        %v516 = vpop.permute.xlu0 %515
        %517 = vrot.lane.b32.xlu0 %v462, 64
        %v518 = vpop.permute.xlu0 %517
        %519 = vrot.lane.b32.xlu0 %v472, 64
        %v520 = vpop.permute.xlu0 %519
        %521 = vrot.lane.b32.xlu0 %v482, 64
        %v522 = vpop.permute.xlu0 %521
        %523 = vrot.lane.b32.xlu0 %v492, 64
        %v524 = vpop.permute.xlu0 %523
        %525 = vrot.lane.b32.xlu0 %v502, 64
        %v526 = vpop.permute.xlu0 %525
        %vm539 = vcmask 1043968
        %540 = vst.msk [vmem:[#allocation3] sm:$0xf] %vm539, %v504
        %541 = vst.msk [vmem:[#allocation3 + $0x34] sm:$0xf] %vm539, %v506
        %542 = vst.msk [vmem:[#allocation3 + $0x68] sm:$0xf] %vm539, %v508
        %543 = vst.msk [vmem:[#allocation3 + $0x9c] sm:$0xf] %vm539, %v510
        %544 = vst.msk [vmem:[#allocation3 + $0xd0] sm:$0xf] %vm539, %v512
        %545 = vst.msk [vmem:[#allocation3 + $0x104] sm:$0xf] %vm539, %v514
        %546 = vst.msk [vmem:[#allocation3 + $0x138] sm:$0xf] %vm539, %v516
        %547 = vst.msk [vmem:[#allocation3 + $0x16c] sm:$0xf] %vm539, %v518
        %548 = vst.msk [vmem:[#allocation3 + $0x1a0] sm:$0xf] %vm539, %v520
        %549 = vst.msk [vmem:[#allocation3 + $0x1d4] sm:$0xf] %vm539, %v522
        %550 = vst.msk [vmem:[#allocation3 + $0x208] sm:$0xf] %vm539, %v524
        %551 = vst.msk [vmem:[#allocation3 + $0x23c] sm:$0xf] %vm539, %v526
        %v552 = vld [vmem:[#allocation2] sm:$0xe]
        %v553 = vld [vmem:[#allocation2 + $0x4] sm:$0xf]
        %v554 = vld [vmem:[#allocation2 + $0x8] sm:$0xf]
        %v555 = vld [vmem:[#allocation2 + $0xc] sm:$0xf]
        %v556 = vld [vmem:[#allocation2 + $0x10] sm:$0xf]
        %v557 = vld [vmem:[#allocation2 + $0x14] sm:$0xf]
        %v558 = vld [vmem:[#allocation2 + $0x18] sm:$0xf]
        %v559 = vld [vmem:[#allocation2 + $0x1c] sm:$0xf]
        %v560 = vld [vmem:[#allocation2 + $0x20] sm:$0xf]
        %v561 = vld [vmem:[#allocation2 + $0x24] sm:$0xf]
        %v562 = vld [vmem:[#allocation2 + $0x28] sm:$0xf]
        %v563 = vld [vmem:[#allocation2 + $0x2c] sm:$0xf]
        %v564 = vld [vmem:[#allocation2 + $0x30] sm:$0x1]
        %vm578 = vcmask 1042432
        %vm579 = vcmask 1046532
        %vm580 = vmor %vm578, %vm579
        %v581 = vrot.slane %v552, 5
        %v582 = vrot.slane %v581, 4
        %v583 = vrot.slane %v553, 5
        %v584 = vsel %vm580, %v582, %v583
        %v585 = vrot.slane %v583, 4
        %v586 = vrot.slane %v554, 5
        %v587 = vsel %vm580, %v585, %v586
        %v588 = vrot.slane %v586, 4
        %v589 = vrot.slane %v555, 5
        %v590 = vsel %vm580, %v588, %v589
        %v591 = vrot.slane %v589, 4
        %v592 = vrot.slane %v556, 5
        %v593 = vsel %vm580, %v591, %v592
        %v594 = vrot.slane %v592, 4
        %v595 = vrot.slane %v557, 5
        %v596 = vsel %vm580, %v594, %v595
        %v597 = vrot.slane %v595, 4
        %v598 = vrot.slane %v558, 5
        %v599 = vsel %vm580, %v597, %v598
        %v600 = vrot.slane %v598, 4
        %v601 = vrot.slane %v559, 5
        %v602 = vsel %vm580, %v600, %v601
        %v603 = vrot.slane %v601, 4
        %v604 = vrot.slane %v560, 5
        %v605 = vsel %vm580, %v603, %v604
        %v606 = vrot.slane %v604, 4
        %v607 = vrot.slane %v561, 5
        %v608 = vsel %vm580, %v606, %v607
        %v609 = vrot.slane %v607, 4
        %v610 = vrot.slane %v562, 5
        %v611 = vsel %vm580, %v609, %v610
        %v612 = vrot.slane %v610, 4
        %v613 = vrot.slane %v563, 5
        %v614 = vsel %vm580, %v612, %v613
        %v615 = vrot.slane %v613, 4
        %v616 = vrot.slane %v564, 5
        %v617 = vsel %vm580, %v615, %v616
        %630 = vst.msk [vmem:[#allocation3 + $0x4] sm:$0xf] %vm258, %v584
        %631 = vst.msk [vmem:[#allocation3 + $0x38] sm:$0xf] %vm258, %v587
        %632 = vst.msk [vmem:[#allocation3 + $0x6c] sm:$0xf] %vm258, %v590
        %633 = vst.msk [vmem:[#allocation3 + $0xa0] sm:$0xf] %vm258, %v593
        %634 = vst.msk [vmem:[#allocation3 + $0xd4] sm:$0xf] %vm258, %v596
        %635 = vst.msk [vmem:[#allocation3 + $0x108] sm:$0xf] %vm258, %v599
        %636 = vst.msk [vmem:[#allocation3 + $0x13c] sm:$0xf] %vm258, %v602
        %637 = vst.msk [vmem:[#allocation3 + $0x170] sm:$0xf] %vm258, %v605
        %638 = vst.msk [vmem:[#allocation3 + $0x1a4] sm:$0xf] %vm258, %v608
        %639 = vst.msk [vmem:[#allocation3 + $0x1d8] sm:$0xf] %vm258, %v611
        %640 = vst.msk [vmem:[#allocation3 + $0x20c] sm:$0xf] %vm258, %v614
        %641 = vst.msk [vmem:[#allocation3 + $0x240] sm:$0xf] %vm258, %v617
        %v642 = vld [vmem:[#allocation2] sm:$0xe]
        %v643 = vld [vmem:[#allocation2 + $0x4] sm:$0xf]
        %v644 = vld [vmem:[#allocation2 + $0x8] sm:$0xf]
        %v645 = vld [vmem:[#allocation2 + $0xc] sm:$0xf]
        %v646 = vld [vmem:[#allocation2 + $0x10] sm:$0xf]
        %v647 = vld [vmem:[#allocation2 + $0x14] sm:$0xf]
        %v648 = vld [vmem:[#allocation2 + $0x18] sm:$0xf]
        %v649 = vld [vmem:[#allocation2 + $0x1c] sm:$0xf]
        %v650 = vld [vmem:[#allocation2 + $0x20] sm:$0xf]
        %v651 = vld [vmem:[#allocation2 + $0x24] sm:$0xf]
        %v652 = vld [vmem:[#allocation2 + $0x28] sm:$0xf]
        %v653 = vld [vmem:[#allocation2 + $0x2c] sm:$0xf]
        %v654 = vld [vmem:[#allocation2 + $0x30] sm:$0x3]
        %vm655 = vsmask.f32 2304
        %vm656 = vsmask.f32 6416
        %vm657 = vmor %vm655, %vm656
        %v659 = vshrl.u32 %v642, 16
        %v661 = vrot.slane %v659, 5
        %v662 = vshll.u32 %v642, 16
        %v664 = vrot.slane %v662, 6
        %v665 = vor.u32 %v661, %v664
        %v666 = vrot.slane %v665, 4
        %v668 = vshrl.u32 %v643, 16
        %v670 = vrot.slane %v668, 5
        %v671 = vshll.u32 %v643, 16
        %v673 = vrot.slane %v671, 6
        %v674 = vor.u32 %v670, %v673
        %v675 = vsel %vm657, %v666, %v674
        %v676 = vrot.slane %v674, 4
        %v678 = vshrl.u32 %v644, 16
        %v680 = vrot.slane %v678, 5
        %v681 = vshll.u32 %v644, 16
        %v683 = vrot.slane %v681, 6
        %v684 = vor.u32 %v680, %v683
        %v685 = vsel %vm657, %v676, %v684
        %v686 = vrot.slane %v684, 4
        %v688 = vshrl.u32 %v645, 16
        %v690 = vrot.slane %v688, 5
        %v691 = vshll.u32 %v645, 16
        %v693 = vrot.slane %v691, 6
        %v694 = vor.u32 %v690, %v693
        %v695 = vsel %vm657, %v686, %v694
        %v696 = vrot.slane %v694, 4
        %v698 = vshrl.u32 %v646, 16
        %v700 = vrot.slane %v698, 5
        %v701 = vshll.u32 %v646, 16
        %v703 = vrot.slane %v701, 6
        %v704 = vor.u32 %v700, %v703
        %v705 = vsel %vm657, %v696, %v704
        %v706 = vrot.slane %v704, 4
        %v708 = vshrl.u32 %v647, 16
        %v710 = vrot.slane %v708, 5
        %v711 = vshll.u32 %v647, 16
        %v713 = vrot.slane %v711, 6
        %v714 = vor.u32 %v710, %v713
        %v715 = vsel %vm657, %v706, %v714
        %v716 = vrot.slane %v714, 4
        %v718 = vshrl.u32 %v648, 16
        %v720 = vrot.slane %v718, 5
        %v721 = vshll.u32 %v648, 16
        %v723 = vrot.slane %v721, 6
        %v724 = vor.u32 %v720, %v723
        %v725 = vsel %vm657, %v716, %v724
        %v726 = vrot.slane %v724, 4
        %v728 = vshrl.u32 %v649, 16
        %v730 = vrot.slane %v728, 5
        %v731 = vshll.u32 %v649, 16
        %v733 = vrot.slane %v731, 6
        %v734 = vor.u32 %v730, %v733
        %v735 = vsel %vm657, %v726, %v734
        %v736 = vrot.slane %v734, 4
        %v738 = vshrl.u32 %v650, 16
        %v740 = vrot.slane %v738, 5
        %v741 = vshll.u32 %v650, 16
        %v743 = vrot.slane %v741, 6
        %v744 = vor.u32 %v740, %v743
        %v745 = vsel %vm657, %v736, %v744
        %v746 = vrot.slane %v744, 4
        %v748 = vshrl.u32 %v651, 16
        %v750 = vrot.slane %v748, 5
        %v751 = vshll.u32 %v651, 16
        %v753 = vrot.slane %v751, 6
        %v754 = vor.u32 %v750, %v753
        %v755 = vsel %vm657, %v746, %v754
        %v756 = vrot.slane %v754, 4
        %v758 = vshrl.u32 %v652, 16
        %v760 = vrot.slane %v758, 5
        %v761 = vshll.u32 %v652, 16
        %v763 = vrot.slane %v761, 6
        %v764 = vor.u32 %v760, %v763
        %v765 = vsel %vm657, %v756, %v764
        %v766 = vrot.slane %v764, 4
        %v768 = vshrl.u32 %v653, 16
        %v770 = vrot.slane %v768, 5
        %v771 = vshll.u32 %v653, 16
        %v773 = vrot.slane %v771, 6
        %v774 = vor.u32 %v770, %v773
        %v775 = vsel %vm657, %v766, %v774
        %v776 = vrot.slane %v774, 4
        %v778 = vshrl.u32 %v654, 16
        %v780 = vrot.slane %v778, 5
        %v781 = vshll.u32 %v654, 16
        %v783 = vrot.slane %v781, 6
        %v784 = vor.u32 %v780, %v783
        %v785 = vsel %vm657, %v776, %v784
        %786 = vrot.lane.b32.xlu0 %v675, 64
        %v787 = vpop.permute.xlu0 %786
        %788 = vrot.lane.b32.xlu0 %v685, 64
        %v789 = vpop.permute.xlu0 %788
        %790 = vrot.lane.b32.xlu0 %v695, 64
        %v791 = vpop.permute.xlu0 %790
        %792 = vrot.lane.b32.xlu0 %v705, 64
        %v793 = vpop.permute.xlu0 %792
        %794 = vrot.lane.b32.xlu0 %v715, 64
        %v795 = vpop.permute.xlu0 %794
        %796 = vrot.lane.b32.xlu0 %v725, 64
        %v797 = vpop.permute.xlu0 %796
        %798 = vrot.lane.b32.xlu0 %v735, 64
        %v799 = vpop.permute.xlu0 %798
        %800 = vrot.lane.b32.xlu0 %v745, 64
        %v801 = vpop.permute.xlu0 %800
        %802 = vrot.lane.b32.xlu0 %v755, 64
        %v803 = vpop.permute.xlu0 %802
        %804 = vrot.lane.b32.xlu0 %v765, 64
        %v805 = vpop.permute.xlu0 %804
        %806 = vrot.lane.b32.xlu0 %v775, 64
        %v807 = vpop.permute.xlu0 %806
        %808 = vrot.lane.b32.xlu0 %v785, 64
        %v809 = vpop.permute.xlu0 %808
        %822 = vst.msk [vmem:[#allocation3 + $0x4] sm:$0xf] %vm539, %v787
        %823 = vst.msk [vmem:[#allocation3 + $0x38] sm:$0xf] %vm539, %v789
        %824 = vst.msk [vmem:[#allocation3 + $0x6c] sm:$0xf] %vm539, %v791
        %825 = vst.msk [vmem:[#allocation3 + $0xa0] sm:$0xf] %vm539, %v793
        %826 = vst.msk [vmem:[#allocation3 + $0xd4] sm:$0xf] %vm539, %v795
        %827 = vst.msk [vmem:[#allocation3 + $0x108] sm:$0xf] %vm539, %v797
        %828 = vst.msk [vmem:[#allocation3 + $0x13c] sm:$0xf] %vm539, %v799
        %829 = vst.msk [vmem:[#allocation3 + $0x170] sm:$0xf] %vm539, %v801
        %830 = vst.msk [vmem:[#allocation3 + $0x1a4] sm:$0xf] %vm539, %v803
        %831 = vst.msk [vmem:[#allocation3 + $0x1d8] sm:$0xf] %vm539, %v805
        %832 = vst.msk [vmem:[#allocation3 + $0x20c] sm:$0xf] %vm539, %v807
        %833 = vst.msk [vmem:[#allocation3 + $0x240] sm:$0xf] %vm539, %v809
        %v834 = vld [vmem:[#allocation2] sm:$0xc]
        %v835 = vld [vmem:[#allocation2 + $0x4] sm:$0xf]
        %v836 = vld [vmem:[#allocation2 + $0x8] sm:$0xf]
        %v837 = vld [vmem:[#allocation2 + $0xc] sm:$0xf]
        %v838 = vld [vmem:[#allocation2 + $0x10] sm:$0xf]
        %v839 = vld [vmem:[#allocation2 + $0x14] sm:$0xf]
        %v840 = vld [vmem:[#allocation2 + $0x18] sm:$0xf]
        %v841 = vld [vmem:[#allocation2 + $0x1c] sm:$0xf]
        %v842 = vld [vmem:[#allocation2 + $0x20] sm:$0xf]
        %v843 = vld [vmem:[#allocation2 + $0x24] sm:$0xf]
        %v844 = vld [vmem:[#allocation2 + $0x28] sm:$0xf]
        %v845 = vld [vmem:[#allocation2 + $0x2c] sm:$0xf]
        %v846 = vld [vmem:[#allocation2 + $0x30] sm:$0x3]
        %vm860 = vcmask 1041408
        %vm861 = vcmask 1045508
        %vm862 = vmor %vm860, %vm861
        %v863 = vrot.slane %v834, 6
        %v864 = vrot.slane %v863, 4
        %v865 = vrot.slane %v835, 6
        %v866 = vsel %vm862, %v864, %v865
        %v867 = vrot.slane %v865, 4
        %v868 = vrot.slane %v836, 6
        %v869 = vsel %vm862, %v867, %v868
        %v870 = vrot.slane %v868, 4
        %v871 = vrot.slane %v837, 6
        %v872 = vsel %vm862, %v870, %v871
        %v873 = vrot.slane %v871, 4
        %v874 = vrot.slane %v838, 6
        %v875 = vsel %vm862, %v873, %v874
        %v876 = vrot.slane %v874, 4
        %v877 = vrot.slane %v839, 6
        %v878 = vsel %vm862, %v876, %v877
        %v879 = vrot.slane %v877, 4
        %v880 = vrot.slane %v840, 6
        %v881 = vsel %vm862, %v879, %v880
        %v882 = vrot.slane %v880, 4
        %v883 = vrot.slane %v841, 6
        %v884 = vsel %vm862, %v882, %v883
        %v885 = vrot.slane %v883, 4
        %v886 = vrot.slane %v842, 6
        %v887 = vsel %vm862, %v885, %v886
        %v888 = vrot.slane %v886, 4
        %v889 = vrot.slane %v843, 6
        %v890 = vsel %vm862, %v888, %v889
        %v891 = vrot.slane %v889, 4
        %v892 = vrot.slane %v844, 6
        %v893 = vsel %vm862, %v891, %v892
        %v894 = vrot.slane %v892, 4
        %v895 = vrot.slane %v845, 6
        %v896 = vsel %vm862, %v894, %v895
        %v897 = vrot.slane %v895, 4
        %v898 = vrot.slane %v846, 6
        %v899 = vsel %vm862, %v897, %v898
        %912 = vst.msk [vmem:[#allocation3 + $0x8] sm:$0xf] %vm258, %v866
        %913 = vst.msk [vmem:[#allocation3 + $0x3c] sm:$0xf] %vm258, %v869
        %914 = vst.msk [vmem:[#allocation3 + $0x70] sm:$0xf] %vm258, %v872
        %915 = vst.msk [vmem:[#allocation3 + $0xa4] sm:$0xf] %vm258, %v875
        %916 = vst.msk [vmem:[#allocation3 + $0xd8] sm:$0xf] %vm258, %v878
        %917 = vst.msk [vmem:[#allocation3 + $0x10c] sm:$0xf] %vm258, %v881
        %918 = vst.msk [vmem:[#allocation3 + $0x140] sm:$0xf] %vm258, %v884
        %919 = vst.msk [vmem:[#allocation3 + $0x174] sm:$0xf] %vm258, %v887
        %920 = vst.msk [vmem:[#allocation3 + $0x1a8] sm:$0xf] %vm258, %v890
        %921 = vst.msk [vmem:[#allocation3 + $0x1dc] sm:$0xf] %vm258, %v893
        %922 = vst.msk [vmem:[#allocation3 + $0x210] sm:$0xf] %vm258, %v896
        %923 = vst.msk [vmem:[#allocation3 + $0x244] sm:$0xf] %vm258, %v899
        %v924 = vld [vmem:[#allocation2 + $0x4] sm:$0xc]
        %v925 = vld [vmem:[#allocation2 + $0x8] sm:$0xf]
        %v926 = vld [vmem:[#allocation2 + $0xc] sm:$0xf]
        %v927 = vld [vmem:[#allocation2 + $0x10] sm:$0xf]
        %v928 = vld [vmem:[#allocation2 + $0x14] sm:$0xf]
        %v929 = vld [vmem:[#allocation2 + $0x18] sm:$0xf]
        %v930 = vld [vmem:[#allocation2 + $0x1c] sm:$0xf]
        %v931 = vld [vmem:[#allocation2 + $0x20] sm:$0xf]
        %v932 = vld [vmem:[#allocation2 + $0x24] sm:$0xf]
        %v933 = vld [vmem:[#allocation2 + $0x28] sm:$0xf]
        %v934 = vld [vmem:[#allocation2 + $0x2c] sm:$0xf]
        %v935 = vld [vmem:[#allocation2 + $0x30] sm:$0xf]
        %v936 = vld [vmem:[#allocation2 + $0x34] sm:$0x3]
        %v950 = vrot.slane %v924, 6
        %v951 = vrot.slane %v950, 4
        %v952 = vrot.slane %v925, 6
        %v953 = vsel %vm862, %v951, %v952
        %v954 = vrot.slane %v952, 4
        %v955 = vrot.slane %v926, 6
        %v956 = vsel %vm862, %v954, %v955
        %v957 = vrot.slane %v955, 4
        %v958 = vrot.slane %v927, 6
        %v959 = vsel %vm862, %v957, %v958
        %v960 = vrot.slane %v958, 4
        %v961 = vrot.slane %v928, 6
        %v962 = vsel %vm862, %v960, %v961
        %v963 = vrot.slane %v961, 4
        %v964 = vrot.slane %v929, 6
        %v965 = vsel %vm862, %v963, %v964
        %v966 = vrot.slane %v964, 4
        %v967 = vrot.slane %v930, 6
        %v968 = vsel %vm862, %v966, %v967
        %v969 = vrot.slane %v967, 4
        %v970 = vrot.slane %v931, 6
        %v971 = vsel %vm862, %v969, %v970
        %v972 = vrot.slane %v970, 4
        %v973 = vrot.slane %v932, 6
        %v974 = vsel %vm862, %v972, %v973
        %v975 = vrot.slane %v973, 4
        %v976 = vrot.slane %v933, 6
        %v977 = vsel %vm862, %v975, %v976
        %v978 = vrot.slane %v976, 4
        %v979 = vrot.slane %v934, 6
        %v980 = vsel %vm862, %v978, %v979
        %v981 = vrot.slane %v979, 4
        %v982 = vrot.slane %v935, 6
        %v983 = vsel %vm862, %v981, %v982
        %v984 = vrot.slane %v982, 4
        %v985 = vrot.slane %v936, 6
        %v986 = vsel %vm862, %v984, %v985
        %987 = vrot.lane.b32.xlu0 %v953, 64
        %v988 = vpop.permute.xlu0 %987
        %989 = vrot.lane.b32.xlu0 %v956, 64
        %v990 = vpop.permute.xlu0 %989
        %991 = vrot.lane.b32.xlu0 %v959, 64
        %v992 = vpop.permute.xlu0 %991
        %993 = vrot.lane.b32.xlu0 %v962, 64
        %v994 = vpop.permute.xlu0 %993
        %995 = vrot.lane.b32.xlu0 %v965, 64
        %v996 = vpop.permute.xlu0 %995
        %997 = vrot.lane.b32.xlu0 %v968, 64
        %v998 = vpop.permute.xlu0 %997
        %999 = vrot.lane.b32.xlu0 %v971, 64
        %v1000 = vpop.permute.xlu0 %999
        %1001 = vrot.lane.b32.xlu0 %v974, 64
        %v1002 = vpop.permute.xlu0 %1001
        %1003 = vrot.lane.b32.xlu0 %v977, 64
        %v1004 = vpop.permute.xlu0 %1003
        %1005 = vrot.lane.b32.xlu0 %v980, 64
        %v1006 = vpop.permute.xlu0 %1005
        %1007 = vrot.lane.b32.xlu0 %v983, 64
        %v1008 = vpop.permute.xlu0 %1007
        %1009 = vrot.lane.b32.xlu0 %v986, 64
        %v1010 = vpop.permute.xlu0 %1009
        %1023 = vst.msk [vmem:[#allocation3 + $0x8] sm:$0xf] %vm539, %v988
        %1024 = vst.msk [vmem:[#allocation3 + $0x3c] sm:$0xf] %vm539, %v990
        %1025 = vst.msk [vmem:[#allocation3 + $0x70] sm:$0xf] %vm539, %v992
        %1026 = vst.msk [vmem:[#allocation3 + $0xa4] sm:$0xf] %vm539, %v994
        %1027 = vst.msk [vmem:[#allocation3 + $0xd8] sm:$0xf] %vm539, %v996
        %1028 = vst.msk [vmem:[#allocation3 + $0x10c] sm:$0xf] %vm539, %v998
        %1029 = vst.msk [vmem:[#allocation3 + $0x140] sm:$0xf] %vm539, %v1000
        %1030 = vst.msk [vmem:[#allocation3 + $0x174] sm:$0xf] %vm539, %v1002
        %1031 = vst.msk [vmem:[#allocation3 + $0x1a8] sm:$0xf] %vm539, %v1004
        %1032 = vst.msk [vmem:[#allocation3 + $0x1dc] sm:$0xf] %vm539, %v1006
        %1033 = vst.msk [vmem:[#allocation3 + $0x210] sm:$0xf] %vm539, %v1008
        %1034 = vst.msk [vmem:[#allocation3 + $0x244] sm:$0xf] %vm539, %v1010
        %v1035 = vld [vmem:[#allocation2 + $0x4] sm:$0xc]
        %v1036 = vld [vmem:[#allocation2 + $0x8] sm:$0xf]
        %v1037 = vld [vmem:[#allocation2 + $0xc] sm:$0xf]
        %v1038 = vld [vmem:[#allocation2 + $0x10] sm:$0xf]
        %v1039 = vld [vmem:[#allocation2 + $0x14] sm:$0xf]
        %v1040 = vld [vmem:[#allocation2 + $0x18] sm:$0xf]
        %v1041 = vld [vmem:[#allocation2 + $0x1c] sm:$0xf]
        %v1042 = vld [vmem:[#allocation2 + $0x20] sm:$0xf]
        %v1043 = vld [vmem:[#allocation2 + $0x24] sm:$0xf]
        %v1044 = vld [vmem:[#allocation2 + $0x28] sm:$0xf]
        %v1045 = vld [vmem:[#allocation2 + $0x2c] sm:$0xf]
        %v1046 = vld [vmem:[#allocation2 + $0x30] sm:$0xf]
        %v1047 = vld [vmem:[#allocation2 + $0x34] sm:$0x7]
        %vm1048 = vsmask.f32 1280
        %vm1049 = vsmask.f32 5392
        %vm1050 = vmor %vm1048, %vm1049
        %v1052 = vshrl.u32 %v1035, 16
        %v1054 = vrot.slane %v1052, 6
        %v1055 = vshll.u32 %v1035, 16
        %v1057 = vrot.slane %v1055, 7
        %v1058 = vor.u32 %v1054, %v1057
        %v1059 = vrot.slane %v1058, 4
        %v1061 = vshrl.u32 %v1036, 16
        %v1063 = vrot.slane %v1061, 6
        %v1064 = vshll.u32 %v1036, 16
        %v1066 = vrot.slane %v1064, 7
        %v1067 = vor.u32 %v1063, %v1066
        %v1068 = vsel %vm1050, %v1059, %v1067
        %v1069 = vrot.slane %v1067, 4
        %v1071 = vshrl.u32 %v1037, 16
        %v1073 = vrot.slane %v1071, 6
        %v1074 = vshll.u32 %v1037, 16
        %v1076 = vrot.slane %v1074, 7
        %v1077 = vor.u32 %v1073, %v1076
        %v1078 = vsel %vm1050, %v1069, %v1077
        %v1079 = vrot.slane %v1077, 4
        %v1081 = vshrl.u32 %v1038, 16
        %v1083 = vrot.slane %v1081, 6
        %v1084 = vshll.u32 %v1038, 16
        %v1086 = vrot.slane %v1084, 7
        %v1087 = vor.u32 %v1083, %v1086
        %v1088 = vsel %vm1050, %v1079, %v1087
        %v1089 = vrot.slane %v1087, 4
        %v1091 = vshrl.u32 %v1039, 16
        %v1093 = vrot.slane %v1091, 6
        %v1094 = vshll.u32 %v1039, 16
        %v1096 = vrot.slane %v1094, 7
        %v1097 = vor.u32 %v1093, %v1096
        %v1098 = vsel %vm1050, %v1089, %v1097
        %v1099 = vrot.slane %v1097, 4
        %v1101 = vshrl.u32 %v1040, 16
        %v1103 = vrot.slane %v1101, 6
        %v1104 = vshll.u32 %v1040, 16
        %v1106 = vrot.slane %v1104, 7
        %v1107 = vor.u32 %v1103, %v1106
        %v1108 = vsel %vm1050, %v1099, %v1107
        %v1109 = vrot.slane %v1107, 4
        %v1111 = vshrl.u32 %v1041, 16
        %v1113 = vrot.slane %v1111, 6
        %v1114 = vshll.u32 %v1041, 16
        %v1116 = vrot.slane %v1114, 7
        %v1117 = vor.u32 %v1113, %v1116
        %v1118 = vsel %vm1050, %v1109, %v1117
        %v1119 = vrot.slane %v1117, 4
        %v1121 = vshrl.u32 %v1042, 16
        %v1123 = vrot.slane %v1121, 6
        %v1124 = vshll.u32 %v1042, 16
        %v1126 = vrot.slane %v1124, 7
        %v1127 = vor.u32 %v1123, %v1126
        %v1128 = vsel %vm1050, %v1119, %v1127
        %v1129 = vrot.slane %v1127, 4
        %v1131 = vshrl.u32 %v1043, 16
        %v1133 = vrot.slane %v1131, 6
        %v1134 = vshll.u32 %v1043, 16
        %v1136 = vrot.slane %v1134, 7
        %v1137 = vor.u32 %v1133, %v1136
        %v1138 = vsel %vm1050, %v1129, %v1137
        %v1139 = vrot.slane %v1137, 4
        %v1141 = vshrl.u32 %v1044, 16
        %v1143 = vrot.slane %v1141, 6
        %v1144 = vshll.u32 %v1044, 16
        %v1146 = vrot.slane %v1144, 7
        %v1147 = vor.u32 %v1143, %v1146
        %v1148 = vsel %vm1050, %v1139, %v1147
        %v1149 = vrot.slane %v1147, 4
        %v1151 = vshrl.u32 %v1045, 16
        %v1153 = vrot.slane %v1151, 6
        %v1154 = vshll.u32 %v1045, 16
        %v1156 = vrot.slane %v1154, 7
        %v1157 = vor.u32 %v1153, %v1156
        %v1158 = vsel %vm1050, %v1149, %v1157
        %v1159 = vrot.slane %v1157, 4
        %v1161 = vshrl.u32 %v1046, 16
        %v1163 = vrot.slane %v1161, 6
        %v1164 = vshll.u32 %v1046, 16
        %v1166 = vrot.slane %v1164, 7
        %v1167 = vor.u32 %v1163, %v1166
        %v1168 = vsel %vm1050, %v1159, %v1167
        %v1169 = vrot.slane %v1167, 4
        %v1171 = vshrl.u32 %v1047, 16
        %v1173 = vrot.slane %v1171, 6
        %v1174 = vshll.u32 %v1047, 16
        %v1176 = vrot.slane %v1174, 7
        %v1177 = vor.u32 %v1173, %v1176
        %v1178 = vsel %vm1050, %v1169, %v1177
        %1191 = vst.msk [vmem:[#allocation3 + $0xc] sm:$0xf] %vm258, %v1068
        %1192 = vst.msk [vmem:[#allocation3 + $0x40] sm:$0xf] %vm258, %v1078
        %1193 = vst.msk [vmem:[#allocation3 + $0x74] sm:$0xf] %vm258, %v1088
        %1194 = vst.msk [vmem:[#allocation3 + $0xa8] sm:$0xf] %vm258, %v1098
        %1195 = vst.msk [vmem:[#allocation3 + $0xdc] sm:$0xf] %vm258, %v1108
        %1196 = vst.msk [vmem:[#allocation3 + $0x110] sm:$0xf] %vm258, %v1118
        %1197 = vst.msk [vmem:[#allocation3 + $0x144] sm:$0xf] %vm258, %v1128
        %1198 = vst.msk [vmem:[#allocation3 + $0x178] sm:$0xf] %vm258, %v1138
        %1199 = vst.msk [vmem:[#allocation3 + $0x1ac] sm:$0xf] %vm258, %v1148
        %1200 = vst.msk [vmem:[#allocation3 + $0x1e0] sm:$0xf] %vm258, %v1158
        %1201 = vst.msk [vmem:[#allocation3 + $0x214] sm:$0xf] %vm258, %v1168
        %1202 = vst.msk [vmem:[#allocation3 + $0x248] sm:$0xf] %vm258, %v1178
        %v1203 = vld [vmem:[#allocation2 + $0x4] sm:$0x8]
        %v1204 = vld [vmem:[#allocation2 + $0x8] sm:$0xf]
        %v1205 = vld [vmem:[#allocation2 + $0xc] sm:$0xf]
        %v1206 = vld [vmem:[#allocation2 + $0x10] sm:$0xf]
        %v1207 = vld [vmem:[#allocation2 + $0x14] sm:$0xf]
        %v1208 = vld [vmem:[#allocation2 + $0x18] sm:$0xf]
        %v1209 = vld [vmem:[#allocation2 + $0x1c] sm:$0xf]
        %v1210 = vld [vmem:[#allocation2 + $0x20] sm:$0xf]
        %v1211 = vld [vmem:[#allocation2 + $0x24] sm:$0xf]
        %v1212 = vld [vmem:[#allocation2 + $0x28] sm:$0xf]
        %v1213 = vld [vmem:[#allocation2 + $0x2c] sm:$0xf]
        %v1214 = vld [vmem:[#allocation2 + $0x30] sm:$0xf]
        %v1215 = vld [vmem:[#allocation2 + $0x34] sm:$0x7]
        %vm1229 = vcmask 1040384
        %vm1230 = vcmask 1044484
        %vm1231 = vmor %vm1229, %vm1230
        %v1232 = vrot.slane %v1203, 7
        %v1233 = vrot.slane %v1232, 4
        %v1234 = vrot.slane %v1204, 7
        %v1235 = vsel %vm1231, %v1233, %v1234
        %v1236 = vrot.slane %v1234, 4
        %v1237 = vrot.slane %v1205, 7
        %v1238 = vsel %vm1231, %v1236, %v1237
        %v1239 = vrot.slane %v1237, 4
        %v1240 = vrot.slane %v1206, 7
        %v1241 = vsel %vm1231, %v1239, %v1240
        %v1242 = vrot.slane %v1240, 4
        %v1243 = vrot.slane %v1207, 7
        %v1244 = vsel %vm1231, %v1242, %v1243
        %v1245 = vrot.slane %v1243, 4
        %v1246 = vrot.slane %v1208, 7
        %v1247 = vsel %vm1231, %v1245, %v1246
        %v1248 = vrot.slane %v1246, 4
        %v1249 = vrot.slane %v1209, 7
        %v1250 = vsel %vm1231, %v1248, %v1249
        %v1251 = vrot.slane %v1249, 4
        %v1252 = vrot.slane %v1210, 7
        %v1253 = vsel %vm1231, %v1251, %v1252
        %v1254 = vrot.slane %v1252, 4
        %v1255 = vrot.slane %v1211, 7
        %v1256 = vsel %vm1231, %v1254, %v1255
        %v1257 = vrot.slane %v1255, 4
        %v1258 = vrot.slane %v1212, 7
        %v1259 = vsel %vm1231, %v1257, %v1258
        %v1260 = vrot.slane %v1258, 4
        %v1261 = vrot.slane %v1213, 7
        %v1262 = vsel %vm1231, %v1260, %v1261
        %v1263 = vrot.slane %v1261, 4
        %v1264 = vrot.slane %v1214, 7
        %v1265 = vsel %vm1231, %v1263, %v1264
        %v1266 = vrot.slane %v1264, 4
        %v1267 = vrot.slane %v1215, 7
        %v1268 = vsel %vm1231, %v1266, %v1267
        %1269 = vrot.lane.b32.xlu0 %v1235, 64
        %v1270 = vpop.permute.xlu0 %1269
        %1271 = vrot.lane.b32.xlu0 %v1238, 64
        %v1272 = vpop.permute.xlu0 %1271
        %1273 = vrot.lane.b32.xlu0 %v1241, 64
        %v1274 = vpop.permute.xlu0 %1273
        %1275 = vrot.lane.b32.xlu0 %v1244, 64
        %v1276 = vpop.permute.xlu0 %1275
        %1277 = vrot.lane.b32.xlu0 %v1247, 64
        %v1278 = vpop.permute.xlu0 %1277
        %1279 = vrot.lane.b32.xlu0 %v1250, 64
        %v1280 = vpop.permute.xlu0 %1279
        %1281 = vrot.lane.b32.xlu0 %v1253, 64
        %v1282 = vpop.permute.xlu0 %1281
        %1283 = vrot.lane.b32.xlu0 %v1256, 64
        %v1284 = vpop.permute.xlu0 %1283
        %1285 = vrot.lane.b32.xlu0 %v1259, 64
        %v1286 = vpop.permute.xlu0 %1285
        %1287 = vrot.lane.b32.xlu0 %v1262, 64
        %v1288 = vpop.permute.xlu0 %1287
        %1289 = vrot.lane.b32.xlu0 %v1265, 64
        %v1290 = vpop.permute.xlu0 %1289
        %1291 = vrot.lane.b32.xlu0 %v1268, 64
        %v1292 = vpop.permute.xlu0 %1291
        %1305 = vst.msk [vmem:[#allocation3 + $0xc] sm:$0xf] %vm539, %v1270
        %1306 = vst.msk [vmem:[#allocation3 + $0x40] sm:$0xf] %vm539, %v1272
        %1307 = vst.msk [vmem:[#allocation3 + $0x74] sm:$0xf] %vm539, %v1274
        %1308 = vst.msk [vmem:[#allocation3 + $0xa8] sm:$0xf] %vm539, %v1276
        %1309 = vst.msk [vmem:[#allocation3 + $0xdc] sm:$0xf] %vm539, %v1278
        %1310 = vst.msk [vmem:[#allocation3 + $0x110] sm:$0xf] %vm539, %v1280
        %1311 = vst.msk [vmem:[#allocation3 + $0x144] sm:$0xf] %vm539, %v1282
        %1312 = vst.msk [vmem:[#allocation3 + $0x178] sm:$0xf] %vm539, %v1284
        %1313 = vst.msk [vmem:[#allocation3 + $0x1ac] sm:$0xf] %vm539, %v1286
        %1314 = vst.msk [vmem:[#allocation3 + $0x1e0] sm:$0xf] %vm539, %v1288
        %1315 = vst.msk [vmem:[#allocation3 + $0x214] sm:$0xf] %vm539, %v1290
        %1316 = vst.msk [vmem:[#allocation3 + $0x248] sm:$0xf] %vm539, %v1292
        %v1317 = vld [vmem:[#allocation2 + $0x4] sm:$0x8]
        %v1318 = vld [vmem:[#allocation2 + $0x8] sm:$0xf]
        %v1319 = vld [vmem:[#allocation2 + $0xc] sm:$0xf]
        %v1320 = vld [vmem:[#allocation2 + $0x10] sm:$0xf]
        %v1321 = vld [vmem:[#allocation2 + $0x14] sm:$0xf]
        %v1322 = vld [vmem:[#allocation2 + $0x18] sm:$0xf]
        %v1323 = vld [vmem:[#allocation2 + $0x1c] sm:$0xf]
        %v1324 = vld [vmem:[#allocation2 + $0x20] sm:$0xf]
        %v1325 = vld [vmem:[#allocation2 + $0x24] sm:$0xf]
        %v1326 = vld [vmem:[#allocation2 + $0x28] sm:$0xf]
        %v1327 = vld [vmem:[#allocation2 + $0x2c] sm:$0xf]
        %v1328 = vld [vmem:[#allocation2 + $0x30] sm:$0xf]
        %v1329 = vld [vmem:[#allocation2 + $0x34] sm:$0xf]
        %vm1330 = vsmask.f32 256
        %vm1331 = vsmask.f32 4368
        %vm1332 = vmor %vm1330, %vm1331
        %v1334 = vshrl.u32 %v1317, 16
        %v1336 = vrot.slane %v1334, 7
        %v1337 = vrot.slane %v1336, 4
        %v1339 = vshrl.u32 %v1318, 16
        %v1341 = vrot.slane %v1339, 7
        %v1342 = vshll.u32 %v1318, 16
        %v1344 = vor.u32 %v1341, %v1342
        %v1345 = vsel %vm1332, %v1337, %v1344
        %v1346 = vrot.slane %v1341, 4
        %v1348 = vshrl.u32 %v1319, 16
        %v1350 = vrot.slane %v1348, 7
        %v1351 = vshll.u32 %v1319, 16
        %v1353 = vor.u32 %v1350, %v1351
        %v1354 = vsel %vm1332, %v1346, %v1353
        %v1355 = vrot.slane %v1350, 4
        %v1357 = vshrl.u32 %v1320, 16
        %v1359 = vrot.slane %v1357, 7
        %v1360 = vshll.u32 %v1320, 16
        %v1362 = vor.u32 %v1359, %v1360
        %v1363 = vsel %vm1332, %v1355, %v1362
        %v1364 = vrot.slane %v1359, 4
        %v1366 = vshrl.u32 %v1321, 16
        %v1368 = vrot.slane %v1366, 7
        %v1369 = vshll.u32 %v1321, 16
        %v1371 = vor.u32 %v1368, %v1369
        %v1372 = vsel %vm1332, %v1364, %v1371
        %v1373 = vrot.slane %v1368, 4
        %v1375 = vshrl.u32 %v1322, 16
        %v1377 = vrot.slane %v1375, 7
        %v1378 = vshll.u32 %v1322, 16
        %v1380 = vor.u32 %v1377, %v1378
        %v1381 = vsel %vm1332, %v1373, %v1380
        %v1382 = vrot.slane %v1377, 4
        %v1384 = vshrl.u32 %v1323, 16
        %v1386 = vrot.slane %v1384, 7
        %v1387 = vshll.u32 %v1323, 16
        %v1389 = vor.u32 %v1386, %v1387
        %v1390 = vsel %vm1332, %v1382, %v1389
        %v1391 = vrot.slane %v1386, 4
        %v1393 = vshrl.u32 %v1324, 16
        %v1395 = vrot.slane %v1393, 7
        %v1396 = vshll.u32 %v1324, 16
        %v1398 = vor.u32 %v1395, %v1396
        %v1399 = vsel %vm1332, %v1391, %v1398
        %v1400 = vrot.slane %v1395, 4
        %v1402 = vshrl.u32 %v1325, 16
        %v1404 = vrot.slane %v1402, 7
        %v1405 = vshll.u32 %v1325, 16
        %v1407 = vor.u32 %v1404, %v1405
        %v1408 = vsel %vm1332, %v1400, %v1407
        %v1409 = vrot.slane %v1404, 4
        %v1411 = vshrl.u32 %v1326, 16
        %v1413 = vrot.slane %v1411, 7
        %v1414 = vshll.u32 %v1326, 16
        %v1416 = vor.u32 %v1413, %v1414
        %v1417 = vsel %vm1332, %v1409, %v1416
        %v1418 = vrot.slane %v1413, 4
        %v1420 = vshrl.u32 %v1327, 16
        %v1422 = vrot.slane %v1420, 7
        %v1423 = vshll.u32 %v1327, 16
        %v1425 = vor.u32 %v1422, %v1423
        %v1426 = vsel %vm1332, %v1418, %v1425
        %v1427 = vrot.slane %v1422, 4
        %v1429 = vshrl.u32 %v1328, 16
        %v1431 = vrot.slane %v1429, 7
        %v1432 = vshll.u32 %v1328, 16
        %v1434 = vor.u32 %v1431, %v1432
        %v1435 = vsel %vm1332, %v1427, %v1434
        %v1436 = vrot.slane %v1431, 4
        %v1438 = vshrl.u32 %v1329, 16
        %v1440 = vrot.slane %v1438, 7
        %v1441 = vshll.u32 %v1329, 16
        %v1443 = vor.u32 %v1440, %v1441
        %v1444 = vsel %vm1332, %v1436, %v1443
        %1457 = vst.msk [vmem:[#allocation3 + $0x10] sm:$0xf] %vm258, %v1345
        %1458 = vst.msk [vmem:[#allocation3 + $0x44] sm:$0xf] %vm258, %v1354
        %1459 = vst.msk [vmem:[#allocation3 + $0x78] sm:$0xf] %vm258, %v1363
        %1460 = vst.msk [vmem:[#allocation3 + $0xac] sm:$0xf] %vm258, %v1372
        %1461 = vst.msk [vmem:[#allocation3 + $0xe0] sm:$0xf] %vm258, %v1381
        %1462 = vst.msk [vmem:[#allocation3 + $0x114] sm:$0xf] %vm258, %v1390
        %1463 = vst.msk [vmem:[#allocation3 + $0x148] sm:$0xf] %vm258, %v1399
        %1464 = vst.msk [vmem:[#allocation3 + $0x17c] sm:$0xf] %vm258, %v1408
        %1465 = vst.msk [vmem:[#allocation3 + $0x1b0] sm:$0xf] %vm258, %v1417
        %1466 = vst.msk [vmem:[#allocation3 + $0x1e4] sm:$0xf] %vm258, %v1426
        %1467 = vst.msk [vmem:[#allocation3 + $0x218] sm:$0xf] %vm258, %v1435
        %1468 = vst.msk [vmem:[#allocation3 + $0x24c] sm:$0xf] %vm258, %v1444
        %v1469 = vld [vmem:[#allocation2 + $0x8] sm:$0xf]
        %v1470 = vld [vmem:[#allocation2 + $0xc] sm:$0xf]
        %v1471 = vld [vmem:[#allocation2 + $0x10] sm:$0xf]
        %v1472 = vld [vmem:[#allocation2 + $0x14] sm:$0xf]
        %v1473 = vld [vmem:[#allocation2 + $0x18] sm:$0xf]
        %v1474 = vld [vmem:[#allocation2 + $0x1c] sm:$0xf]
        %v1475 = vld [vmem:[#allocation2 + $0x20] sm:$0xf]
        %v1476 = vld [vmem:[#allocation2 + $0x24] sm:$0xf]
        %v1477 = vld [vmem:[#allocation2 + $0x28] sm:$0xf]
        %v1478 = vld [vmem:[#allocation2 + $0x2c] sm:$0xf]
        %v1479 = vld [vmem:[#allocation2 + $0x30] sm:$0xf]
        %v1480 = vld [vmem:[#allocation2 + $0x34] sm:$0xf]
        %1493 = vrot.lane.b32.xlu0 %v1469, 64
        %v1494 = vpop.permute.xlu0 %1493
        %1495 = vrot.lane.b32.xlu0 %v1470, 64
        %v1496 = vpop.permute.xlu0 %1495
        %1497 = vrot.lane.b32.xlu0 %v1471, 64
        %v1498 = vpop.permute.xlu0 %1497
        %1499 = vrot.lane.b32.xlu0 %v1472, 64
        %v1500 = vpop.permute.xlu0 %1499
        %1501 = vrot.lane.b32.xlu0 %v1473, 64
        %v1502 = vpop.permute.xlu0 %1501
        %1503 = vrot.lane.b32.xlu0 %v1474, 64
        %v1504 = vpop.permute.xlu0 %1503
        %1505 = vrot.lane.b32.xlu0 %v1475, 64
        %v1506 = vpop.permute.xlu0 %1505
        %1507 = vrot.lane.b32.xlu0 %v1476, 64
        %v1508 = vpop.permute.xlu0 %1507
        %1509 = vrot.lane.b32.xlu0 %v1477, 64
        %v1510 = vpop.permute.xlu0 %1509
        %1511 = vrot.lane.b32.xlu0 %v1478, 64
        %v1512 = vpop.permute.xlu0 %1511
        %1513 = vrot.lane.b32.xlu0 %v1479, 64
        %v1514 = vpop.permute.xlu0 %1513
        %1515 = vrot.lane.b32.xlu0 %v1480, 64
        %v1516 = vpop.permute.xlu0 %1515
        %1529 = vst.msk [vmem:[#allocation3 + $0x10] sm:$0xf] %vm539, %v1494
        %1530 = vst.msk [vmem:[#allocation3 + $0x44] sm:$0xf] %vm539, %v1496
        %1531 = vst.msk [vmem:[#allocation3 + $0x78] sm:$0xf] %vm539, %v1498
        %1532 = vst.msk [vmem:[#allocation3 + $0xac] sm:$0xf] %vm539, %v1500
        %1533 = vst.msk [vmem:[#allocation3 + $0xe0] sm:$0xf] %vm539, %v1502
        %1534 = vst.msk [vmem:[#allocation3 + $0x114] sm:$0xf] %vm539, %v1504
        %1535 = vst.msk [vmem:[#allocation3 + $0x148] sm:$0xf] %vm539, %v1506
        %1536 = vst.msk [vmem:[#allocation3 + $0x17c] sm:$0xf] %vm539, %v1508
        %1537 = vst.msk [vmem:[#allocation3 + $0x1b0] sm:$0xf] %vm539, %v1510
        %1538 = vst.msk [vmem:[#allocation3 + $0x1e4] sm:$0xf] %vm539, %v1512
        %1539 = vst.msk [vmem:[#allocation3 + $0x218] sm:$0xf] %vm539, %v1514
        %1540 = vst.msk [vmem:[#allocation3 + $0x24c] sm:$0xf] %vm539, %v1516
        %v1541 = vld [vmem:[#allocation2 + $0xc] sm:$0xf]
        %v1542 = vld [vmem:[#allocation2 + $0x10] sm:$0xf]
        %v1543 = vld [vmem:[#allocation2 + $0x14] sm:$0xf]
        %v1544 = vld [vmem:[#allocation2 + $0x18] sm:$0xf]
        %v1545 = vld [vmem:[#allocation2 + $0x1c] sm:$0xf]
        %v1546 = vld [vmem:[#allocation2 + $0x20] sm:$0xf]
        %v1547 = vld [vmem:[#allocation2 + $0x24] sm:$0xf]
        %v1548 = vld [vmem:[#allocation2 + $0x28] sm:$0xf]
        %v1549 = vld [vmem:[#allocation2 + $0x2c] sm:$0xf]
        %v1550 = vld [vmem:[#allocation2 + $0x30] sm:$0xf]
        %v1551 = vld [vmem:[#allocation2 + $0x34] sm:$0xf]
        %v1552 = vld [vmem:[#allocation2 + $0x38] sm:$0xf]
        %1553 = vst.msk [vmem:[#allocation3 + $0x14] sm:$0xf] %vm258, %v1541
        %1554 = vst.msk [vmem:[#allocation3 + $0x48] sm:$0xf] %vm258, %v1542
        %1555 = vst.msk [vmem:[#allocation3 + $0x7c] sm:$0xf] %vm258, %v1543
        %1556 = vst.msk [vmem:[#allocation3 + $0xb0] sm:$0xf] %vm258, %v1544
        %1557 = vst.msk [vmem:[#allocation3 + $0xe4] sm:$0xf] %vm258, %v1545
        %1558 = vst.msk [vmem:[#allocation3 + $0x118] sm:$0xf] %vm258, %v1546
        %1559 = vst.msk [vmem:[#allocation3 + $0x14c] sm:$0xf] %vm258, %v1547
        %1560 = vst.msk [vmem:[#allocation3 + $0x180] sm:$0xf] %vm258, %v1548
        %1561 = vst.msk [vmem:[#allocation3 + $0x1b4] sm:$0xf] %vm258, %v1549
        %1562 = vst.msk [vmem:[#allocation3 + $0x1e8] sm:$0xf] %vm258, %v1550
        %1563 = vst.msk [vmem:[#allocation3 + $0x21c] sm:$0xf] %vm258, %v1551
        %1564 = vst.msk [vmem:[#allocation3 + $0x250] sm:$0xf] %vm258, %v1552
        %v1565 = vld [vmem:[#allocation2 + $0xc] sm:$0xf]
        %v1566 = vld [vmem:[#allocation2 + $0x10] sm:$0xf]
        %v1567 = vld [vmem:[#allocation2 + $0x14] sm:$0xf]
        %v1568 = vld [vmem:[#allocation2 + $0x18] sm:$0xf]
        %v1569 = vld [vmem:[#allocation2 + $0x1c] sm:$0xf]
        %v1570 = vld [vmem:[#allocation2 + $0x20] sm:$0xf]
        %v1571 = vld [vmem:[#allocation2 + $0x24] sm:$0xf]
        %v1572 = vld [vmem:[#allocation2 + $0x28] sm:$0xf]
        %v1573 = vld [vmem:[#allocation2 + $0x2c] sm:$0xf]
        %v1574 = vld [vmem:[#allocation2 + $0x30] sm:$0xf]
        %v1575 = vld [vmem:[#allocation2 + $0x34] sm:$0xf]
        %v1576 = vld [vmem:[#allocation2 + $0x38] sm:$0xf]
        %v1577 = vld [vmem:[#allocation2 + $0x3c] sm:$0x1]
        %v1579 = vshrl.u32 %v1565, 16
        %v1581 = vrot.slane %v1579, 4
        %v1582 = vshll.u32 %v1565, 16
        %v1584 = vrot.slane %v1582, 5
        %v1585 = vor.u32 %v1581, %v1584
        %v1586 = vrot.slane %v1585, 4
        %v1588 = vshll.u32 %v1566, 16
        %v1590 = vrot.slane %v1588, 5
        %v1591 = vsel %vm378, %v1586, %v1590
        %v1592 = vshrl.u32 %v1566, 16
        %v1594 = vrot.slane %v1592, 4
        %v1595 = vor.u32 %v1594, %v1590
        %v1596 = vrot.slane %v1595, 4
        %v1598 = vshll.u32 %v1567, 16
        %v1600 = vrot.slane %v1598, 5
        %v1601 = vsel %vm378, %v1596, %v1600
        %v1602 = vshrl.u32 %v1567, 16
        %v1604 = vrot.slane %v1602, 4
        %v1605 = vor.u32 %v1604, %v1600
        %v1606 = vrot.slane %v1605, 4
        %v1608 = vshll.u32 %v1568, 16
        %v1610 = vrot.slane %v1608, 5
        %v1611 = vsel %vm378, %v1606, %v1610
        %v1612 = vshrl.u32 %v1568, 16
        %v1614 = vrot.slane %v1612, 4
        %v1615 = vor.u32 %v1614, %v1610
        %v1616 = vrot.slane %v1615, 4
        %v1618 = vshll.u32 %v1569, 16
        %v1620 = vrot.slane %v1618, 5
        %v1621 = vsel %vm378, %v1616, %v1620
        %v1622 = vshrl.u32 %v1569, 16
        %v1624 = vrot.slane %v1622, 4
        %v1625 = vor.u32 %v1624, %v1620
        %v1626 = vrot.slane %v1625, 4
        %v1628 = vshll.u32 %v1570, 16
        %v1630 = vrot.slane %v1628, 5
        %v1631 = vsel %vm378, %v1626, %v1630
        %v1632 = vshrl.u32 %v1570, 16
        %v1634 = vrot.slane %v1632, 4
        %v1635 = vor.u32 %v1634, %v1630
        %v1636 = vrot.slane %v1635, 4
        %v1638 = vshll.u32 %v1571, 16
        %v1640 = vrot.slane %v1638, 5
        %v1641 = vsel %vm378, %v1636, %v1640
        %v1642 = vshrl.u32 %v1571, 16
        %v1644 = vrot.slane %v1642, 4
        %v1645 = vor.u32 %v1644, %v1640
        %v1646 = vrot.slane %v1645, 4
        %v1648 = vshll.u32 %v1572, 16
        %v1650 = vrot.slane %v1648, 5
        %v1651 = vsel %vm378, %v1646, %v1650
        %v1652 = vshrl.u32 %v1572, 16
        %v1654 = vrot.slane %v1652, 4
        %v1655 = vor.u32 %v1654, %v1650
        %v1656 = vrot.slane %v1655, 4
        %v1658 = vshll.u32 %v1573, 16
        %v1660 = vrot.slane %v1658, 5
        %v1661 = vsel %vm378, %v1656, %v1660
        %v1662 = vshrl.u32 %v1573, 16
        %v1664 = vrot.slane %v1662, 4
        %v1665 = vor.u32 %v1664, %v1660
        %v1666 = vrot.slane %v1665, 4
        %v1668 = vshll.u32 %v1574, 16
        %v1670 = vrot.slane %v1668, 5
        %v1671 = vsel %vm378, %v1666, %v1670
        %v1672 = vshrl.u32 %v1574, 16
        %v1674 = vrot.slane %v1672, 4
        %v1675 = vor.u32 %v1674, %v1670
        %v1676 = vrot.slane %v1675, 4
        %v1678 = vshll.u32 %v1575, 16
        %v1680 = vrot.slane %v1678, 5
        %v1681 = vsel %vm378, %v1676, %v1680
        %v1682 = vshrl.u32 %v1575, 16
        %v1684 = vrot.slane %v1682, 4
        %v1685 = vor.u32 %v1684, %v1680
        %v1686 = vrot.slane %v1685, 4
        %v1688 = vshll.u32 %v1576, 16
        %v1690 = vrot.slane %v1688, 5
        %v1691 = vsel %vm378, %v1686, %v1690
        %v1692 = vshrl.u32 %v1576, 16
        %v1694 = vrot.slane %v1692, 4
        %v1695 = vor.u32 %v1694, %v1690
        %v1696 = vrot.slane %v1695, 4
        %v1698 = vshll.u32 %v1577, 16
        %v1700 = vrot.slane %v1698, 5
        %v1701 = vsel %vm378, %v1696, %v1700
        %1702 = vrot.lane.b32.xlu0 %v1591, 64
        %v1703 = vpop.permute.xlu0 %1702
        %1704 = vrot.lane.b32.xlu0 %v1601, 64
        %v1705 = vpop.permute.xlu0 %1704
        %1706 = vrot.lane.b32.xlu0 %v1611, 64
        %v1707 = vpop.permute.xlu0 %1706
        %1708 = vrot.lane.b32.xlu0 %v1621, 64
        %v1709 = vpop.permute.xlu0 %1708
        %1710 = vrot.lane.b32.xlu0 %v1631, 64
        %v1711 = vpop.permute.xlu0 %1710
        %1712 = vrot.lane.b32.xlu0 %v1641, 64
        %v1713 = vpop.permute.xlu0 %1712
        %1714 = vrot.lane.b32.xlu0 %v1651, 64
        %v1715 = vpop.permute.xlu0 %1714
        %1716 = vrot.lane.b32.xlu0 %v1661, 64
        %v1717 = vpop.permute.xlu0 %1716
        %1718 = vrot.lane.b32.xlu0 %v1671, 64
        %v1719 = vpop.permute.xlu0 %1718
        %1720 = vrot.lane.b32.xlu0 %v1681, 64
        %v1721 = vpop.permute.xlu0 %1720
        %1722 = vrot.lane.b32.xlu0 %v1691, 64
        %v1723 = vpop.permute.xlu0 %1722
        %1724 = vrot.lane.b32.xlu0 %v1701, 64
        %v1725 = vpop.permute.xlu0 %1724
        %1738 = vst.msk [vmem:[#allocation3 + $0x14] sm:$0xf] %vm539, %v1703
        %1739 = vst.msk [vmem:[#allocation3 + $0x48] sm:$0xf] %vm539, %v1705
        %1740 = vst.msk [vmem:[#allocation3 + $0x7c] sm:$0xf] %vm539, %v1707
        %1741 = vst.msk [vmem:[#allocation3 + $0xb0] sm:$0xf] %vm539, %v1709
        %1742 = vst.msk [vmem:[#allocation3 + $0xe4] sm:$0xf] %vm539, %v1711
        %1743 = vst.msk [vmem:[#allocation3 + $0x118] sm:$0xf] %vm539, %v1713
        %1744 = vst.msk [vmem:[#allocation3 + $0x14c] sm:$0xf] %vm539, %v1715
        %1745 = vst.msk [vmem:[#allocation3 + $0x180] sm:$0xf] %vm539, %v1717
        %1746 = vst.msk [vmem:[#allocation3 + $0x1b4] sm:$0xf] %vm539, %v1719
        %1747 = vst.msk [vmem:[#allocation3 + $0x1e8] sm:$0xf] %vm539, %v1721
        %1748 = vst.msk [vmem:[#allocation3 + $0x21c] sm:$0xf] %vm539, %v1723
        %1749 = vst.msk [vmem:[#allocation3 + $0x250] sm:$0xf] %vm539, %v1725
        %v1750 = vld [vmem:[#allocation2 + $0xc] sm:$0xe]
        %v1751 = vld [vmem:[#allocation2 + $0x10] sm:$0xf]
        %v1752 = vld [vmem:[#allocation2 + $0x14] sm:$0xf]
        %v1753 = vld [vmem:[#allocation2 + $0x18] sm:$0xf]
        %v1754 = vld [vmem:[#allocation2 + $0x1c] sm:$0xf]
        %v1755 = vld [vmem:[#allocation2 + $0x20] sm:$0xf]
        %v1756 = vld [vmem:[#allocation2 + $0x24] sm:$0xf]
        %v1757 = vld [vmem:[#allocation2 + $0x28] sm:$0xf]
        %v1758 = vld [vmem:[#allocation2 + $0x2c] sm:$0xf]
        %v1759 = vld [vmem:[#allocation2 + $0x30] sm:$0xf]
        %v1760 = vld [vmem:[#allocation2 + $0x34] sm:$0xf]
        %v1761 = vld [vmem:[#allocation2 + $0x38] sm:$0xf]
        %v1762 = vld [vmem:[#allocation2 + $0x3c] sm:$0x1]
        %v1776 = vrot.slane %v1750, 5
        %v1777 = vrot.slane %v1776, 4
        %v1778 = vrot.slane %v1751, 5
        %v1779 = vsel %vm580, %v1777, %v1778
        %v1780 = vrot.slane %v1778, 4
        %v1781 = vrot.slane %v1752, 5
        %v1782 = vsel %vm580, %v1780, %v1781
        %v1783 = vrot.slane %v1781, 4
        %v1784 = vrot.slane %v1753, 5
        %v1785 = vsel %vm580, %v1783, %v1784
        %v1786 = vrot.slane %v1784, 4
        %v1787 = vrot.slane %v1754, 5
        %v1788 = vsel %vm580, %v1786, %v1787
        %v1789 = vrot.slane %v1787, 4
        %v1790 = vrot.slane %v1755, 5
        %v1791 = vsel %vm580, %v1789, %v1790
        %v1792 = vrot.slane %v1790, 4
        %v1793 = vrot.slane %v1756, 5
        %v1794 = vsel %vm580, %v1792, %v1793
        %v1795 = vrot.slane %v1793, 4
        %v1796 = vrot.slane %v1757, 5
        %v1797 = vsel %vm580, %v1795, %v1796
        %v1798 = vrot.slane %v1796, 4
        %v1799 = vrot.slane %v1758, 5
        %v1800 = vsel %vm580, %v1798, %v1799
        %v1801 = vrot.slane %v1799, 4
        %v1802 = vrot.slane %v1759, 5
        %v1803 = vsel %vm580, %v1801, %v1802
        %v1804 = vrot.slane %v1802, 4
        %v1805 = vrot.slane %v1760, 5
        %v1806 = vsel %vm580, %v1804, %v1805
        %v1807 = vrot.slane %v1805, 4
        %v1808 = vrot.slane %v1761, 5
        %v1809 = vsel %vm580, %v1807, %v1808
        %v1810 = vrot.slane %v1808, 4
        %v1811 = vrot.slane %v1762, 5
        %v1812 = vsel %vm580, %v1810, %v1811
        %1825 = vst.msk [vmem:[#allocation3 + $0x18] sm:$0xf] %vm258, %v1779
        %1826 = vst.msk [vmem:[#allocation3 + $0x4c] sm:$0xf] %vm258, %v1782
        %1827 = vst.msk [vmem:[#allocation3 + $0x80] sm:$0xf] %vm258, %v1785
        %1828 = vst.msk [vmem:[#allocation3 + $0xb4] sm:$0xf] %vm258, %v1788
        %1829 = vst.msk [vmem:[#allocation3 + $0xe8] sm:$0xf] %vm258, %v1791
        %1830 = vst.msk [vmem:[#allocation3 + $0x11c] sm:$0xf] %vm258, %v1794
        %1831 = vst.msk [vmem:[#allocation3 + $0x150] sm:$0xf] %vm258, %v1797
        %1832 = vst.msk [vmem:[#allocation3 + $0x184] sm:$0xf] %vm258, %v1800
        %1833 = vst.msk [vmem:[#allocation3 + $0x1b8] sm:$0xf] %vm258, %v1803
        %1834 = vst.msk [vmem:[#allocation3 + $0x1ec] sm:$0xf] %vm258, %v1806
        %1835 = vst.msk [vmem:[#allocation3 + $0x220] sm:$0xf] %vm258, %v1809
        %1836 = vst.msk [vmem:[#allocation3 + $0x254] sm:$0xf] %vm258, %v1812
        %v1837 = vld [vmem:[#allocation2 + $0xc] sm:$0xe]
        %v1838 = vld [vmem:[#allocation2 + $0x10] sm:$0xf]
        %v1839 = vld [vmem:[#allocation2 + $0x14] sm:$0xf]
        %v1840 = vld [vmem:[#allocation2 + $0x18] sm:$0xf]
        %v1841 = vld [vmem:[#allocation2 + $0x1c] sm:$0xf]
        %v1842 = vld [vmem:[#allocation2 + $0x20] sm:$0xf]
        %v1843 = vld [vmem:[#allocation2 + $0x24] sm:$0xf]
        %v1844 = vld [vmem:[#allocation2 + $0x28] sm:$0xf]
        %v1845 = vld [vmem:[#allocation2 + $0x2c] sm:$0xf]
        %v1846 = vld [vmem:[#allocation2 + $0x30] sm:$0xf]
        %v1847 = vld [vmem:[#allocation2 + $0x34] sm:$0xf]
        %v1848 = vld [vmem:[#allocation2 + $0x38] sm:$0xf]
        %v1849 = vld [vmem:[#allocation2 + $0x3c] sm:$0x3]
        %v1851 = vshrl.u32 %v1837, 16
        %v1853 = vrot.slane %v1851, 5
        %v1854 = vshll.u32 %v1837, 16
        %v1856 = vrot.slane %v1854, 6
        %v1857 = vor.u32 %v1853, %v1856
        %v1858 = vrot.slane %v1857, 4
        %v1860 = vshrl.u32 %v1838, 16
        %v1862 = vrot.slane %v1860, 5
        %v1863 = vshll.u32 %v1838, 16
        %v1865 = vrot.slane %v1863, 6
        %v1866 = vor.u32 %v1862, %v1865
        %v1867 = vsel %vm657, %v1858, %v1866
        %v1868 = vrot.slane %v1866, 4
        %v1870 = vshrl.u32 %v1839, 16
        %v1872 = vrot.slane %v1870, 5
        %v1873 = vshll.u32 %v1839, 16
        %v1875 = vrot.slane %v1873, 6
        %v1876 = vor.u32 %v1872, %v1875
        %v1877 = vsel %vm657, %v1868, %v1876
        %v1878 = vrot.slane %v1876, 4
        %v1880 = vshrl.u32 %v1840, 16
        %v1882 = vrot.slane %v1880, 5
        %v1883 = vshll.u32 %v1840, 16
        %v1885 = vrot.slane %v1883, 6
        %v1886 = vor.u32 %v1882, %v1885
        %v1887 = vsel %vm657, %v1878, %v1886
        %v1888 = vrot.slane %v1886, 4
        %v1890 = vshrl.u32 %v1841, 16
        %v1892 = vrot.slane %v1890, 5
        %v1893 = vshll.u32 %v1841, 16
        %v1895 = vrot.slane %v1893, 6
        %v1896 = vor.u32 %v1892, %v1895
        %v1897 = vsel %vm657, %v1888, %v1896
        %v1898 = vrot.slane %v1896, 4
        %v1900 = vshrl.u32 %v1842, 16
        %v1902 = vrot.slane %v1900, 5
        %v1903 = vshll.u32 %v1842, 16
        %v1905 = vrot.slane %v1903, 6
        %v1906 = vor.u32 %v1902, %v1905
        %v1907 = vsel %vm657, %v1898, %v1906
        %v1908 = vrot.slane %v1906, 4
        %v1910 = vshrl.u32 %v1843, 16
        %v1912 = vrot.slane %v1910, 5
        %v1913 = vshll.u32 %v1843, 16
        %v1915 = vrot.slane %v1913, 6
        %v1916 = vor.u32 %v1912, %v1915
        %v1917 = vsel %vm657, %v1908, %v1916
        %v1918 = vrot.slane %v1916, 4
        %v1920 = vshrl.u32 %v1844, 16
        %v1922 = vrot.slane %v1920, 5
        %v1923 = vshll.u32 %v1844, 16
        %v1925 = vrot.slane %v1923, 6
        %v1926 = vor.u32 %v1922, %v1925
        %v1927 = vsel %vm657, %v1918, %v1926
        %v1928 = vrot.slane %v1926, 4
        %v1930 = vshrl.u32 %v1845, 16
        %v1932 = vrot.slane %v1930, 5
        %v1933 = vshll.u32 %v1845, 16
        %v1935 = vrot.slane %v1933, 6
        %v1936 = vor.u32 %v1932, %v1935
        %v1937 = vsel %vm657, %v1928, %v1936
        %v1938 = vrot.slane %v1936, 4
        %v1940 = vshrl.u32 %v1846, 16
        %v1942 = vrot.slane %v1940, 5
        %v1943 = vshll.u32 %v1846, 16
        %v1945 = vrot.slane %v1943, 6
        %v1946 = vor.u32 %v1942, %v1945
        %v1947 = vsel %vm657, %v1938, %v1946
        %v1948 = vrot.slane %v1946, 4
        %v1950 = vshrl.u32 %v1847, 16
        %v1952 = vrot.slane %v1950, 5
        %v1953 = vshll.u32 %v1847, 16
        %v1955 = vrot.slane %v1953, 6
        %v1956 = vor.u32 %v1952, %v1955
        %v1957 = vsel %vm657, %v1948, %v1956
        %v1958 = vrot.slane %v1956, 4
        %v1960 = vshrl.u32 %v1848, 16
        %v1962 = vrot.slane %v1960, 5
        %v1963 = vshll.u32 %v1848, 16
        %v1965 = vrot.slane %v1963, 6
        %v1966 = vor.u32 %v1962, %v1965
        %v1967 = vsel %vm657, %v1958, %v1966
        %v1968 = vrot.slane %v1966, 4
        %v1970 = vshrl.u32 %v1849, 16
        %v1972 = vrot.slane %v1970, 5
        %v1973 = vshll.u32 %v1849, 16
        %v1975 = vrot.slane %v1973, 6
        %v1976 = vor.u32 %v1972, %v1975
        %v1977 = vsel %vm657, %v1968, %v1976
        %1978 = vrot.lane.b32.xlu0 %v1867, 64
        %v1979 = vpop.permute.xlu0 %1978
        %1980 = vrot.lane.b32.xlu0 %v1877, 64
        %v1981 = vpop.permute.xlu0 %1980
        %1982 = vrot.lane.b32.xlu0 %v1887, 64
        %v1983 = vpop.permute.xlu0 %1982
        %1984 = vrot.lane.b32.xlu0 %v1897, 64
        %v1985 = vpop.permute.xlu0 %1984
        %1986 = vrot.lane.b32.xlu0 %v1907, 64
        %v1987 = vpop.permute.xlu0 %1986
        %1988 = vrot.lane.b32.xlu0 %v1917, 64
        %v1989 = vpop.permute.xlu0 %1988
        %1990 = vrot.lane.b32.xlu0 %v1927, 64
        %v1991 = vpop.permute.xlu0 %1990
        %1992 = vrot.lane.b32.xlu0 %v1937, 64
        %v1993 = vpop.permute.xlu0 %1992
        %1994 = vrot.lane.b32.xlu0 %v1947, 64
        %v1995 = vpop.permute.xlu0 %1994
        %1996 = vrot.lane.b32.xlu0 %v1957, 64
        %v1997 = vpop.permute.xlu0 %1996
        %1998 = vrot.lane.b32.xlu0 %v1967, 64
        %v1999 = vpop.permute.xlu0 %1998
        %2000 = vrot.lane.b32.xlu0 %v1977, 64
        %v2001 = vpop.permute.xlu0 %2000
        %2014 = vst.msk [vmem:[#allocation3 + $0x18] sm:$0xf] %vm539, %v1979
        %2015 = vst.msk [vmem:[#allocation3 + $0x4c] sm:$0xf] %vm539, %v1981
        %2016 = vst.msk [vmem:[#allocation3 + $0x80] sm:$0xf] %vm539, %v1983
        %2017 = vst.msk [vmem:[#allocation3 + $0xb4] sm:$0xf] %vm539, %v1985
        %2018 = vst.msk [vmem:[#allocation3 + $0xe8] sm:$0xf] %vm539, %v1987
        %2019 = vst.msk [vmem:[#allocation3 + $0x11c] sm:$0xf] %vm539, %v1989
        %2020 = vst.msk [vmem:[#allocation3 + $0x150] sm:$0xf] %vm539, %v1991
        %2021 = vst.msk [vmem:[#allocation3 + $0x184] sm:$0xf] %vm539, %v1993
        %2022 = vst.msk [vmem:[#allocation3 + $0x1b8] sm:$0xf] %vm539, %v1995
        %2023 = vst.msk [vmem:[#allocation3 + $0x1ec] sm:$0xf] %vm539, %v1997
        %2024 = vst.msk [vmem:[#allocation3 + $0x220] sm:$0xf] %vm539, %v1999
        %2025 = vst.msk [vmem:[#allocation3 + $0x254] sm:$0xf] %vm539, %v2001
        %v2026 = vld [vmem:[#allocation2 + $0xc] sm:$0xc]
        %v2027 = vld [vmem:[#allocation2 + $0x10] sm:$0xf]
        %v2028 = vld [vmem:[#allocation2 + $0x14] sm:$0xf]
        %v2029 = vld [vmem:[#allocation2 + $0x18] sm:$0xf]
        %v2030 = vld [vmem:[#allocation2 + $0x1c] sm:$0xf]
        %v2031 = vld [vmem:[#allocation2 + $0x20] sm:$0xf]
        %v2032 = vld [vmem:[#allocation2 + $0x24] sm:$0xf]
        %v2033 = vld [vmem:[#allocation2 + $0x28] sm:$0xf]
        %v2034 = vld [vmem:[#allocation2 + $0x2c] sm:$0xf]
        %v2035 = vld [vmem:[#allocation2 + $0x30] sm:$0xf]
        %v2036 = vld [vmem:[#allocation2 + $0x34] sm:$0xf]
        %v2037 = vld [vmem:[#allocation2 + $0x38] sm:$0xf]
        %v2038 = vld [vmem:[#allocation2 + $0x3c] sm:$0x3]
        %v2052 = vrot.slane %v2026, 6
        %v2053 = vrot.slane %v2052, 4
        %v2054 = vrot.slane %v2027, 6
        %v2055 = vsel %vm862, %v2053, %v2054
        %v2056 = vrot.slane %v2054, 4
        %v2057 = vrot.slane %v2028, 6
        %v2058 = vsel %vm862, %v2056, %v2057
        %v2059 = vrot.slane %v2057, 4
        %v2060 = vrot.slane %v2029, 6
        %v2061 = vsel %vm862, %v2059, %v2060
        %v2062 = vrot.slane %v2060, 4
        %v2063 = vrot.slane %v2030, 6
        %v2064 = vsel %vm862, %v2062, %v2063
        %v2065 = vrot.slane %v2063, 4
        %v2066 = vrot.slane %v2031, 6
        %v2067 = vsel %vm862, %v2065, %v2066
        %v2068 = vrot.slane %v2066, 4
        %v2069 = vrot.slane %v2032, 6
        %v2070 = vsel %vm862, %v2068, %v2069
        %v2071 = vrot.slane %v2069, 4
        %v2072 = vrot.slane %v2033, 6
        %v2073 = vsel %vm862, %v2071, %v2072
        %v2074 = vrot.slane %v2072, 4
        %v2075 = vrot.slane %v2034, 6
        %v2076 = vsel %vm862, %v2074, %v2075
        %v2077 = vrot.slane %v2075, 4
        %v2078 = vrot.slane %v2035, 6
        %v2079 = vsel %vm862, %v2077, %v2078
        %v2080 = vrot.slane %v2078, 4
        %v2081 = vrot.slane %v2036, 6
        %v2082 = vsel %vm862, %v2080, %v2081
        %v2083 = vrot.slane %v2081, 4
        %v2084 = vrot.slane %v2037, 6
        %v2085 = vsel %vm862, %v2083, %v2084
        %v2086 = vrot.slane %v2084, 4
        %v2087 = vrot.slane %v2038, 6
        %v2088 = vsel %vm862, %v2086, %v2087
        %2101 = vst.msk [vmem:[#allocation3 + $0x1c] sm:$0xf] %vm258, %v2055
        %2102 = vst.msk [vmem:[#allocation3 + $0x50] sm:$0xf] %vm258, %v2058
        %2103 = vst.msk [vmem:[#allocation3 + $0x84] sm:$0xf] %vm258, %v2061
        %2104 = vst.msk [vmem:[#allocation3 + $0xb8] sm:$0xf] %vm258, %v2064
        %2105 = vst.msk [vmem:[#allocation3 + $0xec] sm:$0xf] %vm258, %v2067
        %2106 = vst.msk [vmem:[#allocation3 + $0x120] sm:$0xf] %vm258, %v2070
        %2107 = vst.msk [vmem:[#allocation3 + $0x154] sm:$0xf] %vm258, %v2073
        %2108 = vst.msk [vmem:[#allocation3 + $0x188] sm:$0xf] %vm258, %v2076
        %2109 = vst.msk [vmem:[#allocation3 + $0x1bc] sm:$0xf] %vm258, %v2079
        %2110 = vst.msk [vmem:[#allocation3 + $0x1f0] sm:$0xf] %vm258, %v2082
        %2111 = vst.msk [vmem:[#allocation3 + $0x224] sm:$0xf] %vm258, %v2085
        %2112 = vst.msk [vmem:[#allocation3 + $0x258] sm:$0xf] %vm258, %v2088
        %v2113 = vld [vmem:[#allocation2 + $0x10] sm:$0xc]
        %v2114 = vld [vmem:[#allocation2 + $0x14] sm:$0xf]
        %v2115 = vld [vmem:[#allocation2 + $0x18] sm:$0xf]
        %v2116 = vld [vmem:[#allocation2 + $0x1c] sm:$0xf]
        %v2117 = vld [vmem:[#allocation2 + $0x20] sm:$0xf]
        %v2118 = vld [vmem:[#allocation2 + $0x24] sm:$0xf]
        %v2119 = vld [vmem:[#allocation2 + $0x28] sm:$0xf]
        %v2120 = vld [vmem:[#allocation2 + $0x2c] sm:$0xf]
        %v2121 = vld [vmem:[#allocation2 + $0x30] sm:$0xf]
        %v2122 = vld [vmem:[#allocation2 + $0x34] sm:$0xf]
        %v2123 = vld [vmem:[#allocation2 + $0x38] sm:$0xf]
        %v2124 = vld [vmem:[#allocation2 + $0x3c] sm:$0xf]
        %v2125 = vld [vmem:[#allocation2 + $0x40] sm:$0x3]
        %v2139 = vrot.slane %v2113, 6
        %v2140 = vrot.slane %v2139, 4
        %v2141 = vrot.slane %v2114, 6
        %v2142 = vsel %vm862, %v2140, %v2141
        %v2143 = vrot.slane %v2141, 4
        %v2144 = vrot.slane %v2115, 6
        %v2145 = vsel %vm862, %v2143, %v2144
        %v2146 = vrot.slane %v2144, 4
        %v2147 = vrot.slane %v2116, 6
        %v2148 = vsel %vm862, %v2146, %v2147
        %v2149 = vrot.slane %v2147, 4
        %v2150 = vrot.slane %v2117, 6
        %v2151 = vsel %vm862, %v2149, %v2150
        %v2152 = vrot.slane %v2150, 4
        %v2153 = vrot.slane %v2118, 6
        %v2154 = vsel %vm862, %v2152, %v2153
        %v2155 = vrot.slane %v2153, 4
        %v2156 = vrot.slane %v2119, 6
        %v2157 = vsel %vm862, %v2155, %v2156
        %v2158 = vrot.slane %v2156, 4
        %v2159 = vrot.slane %v2120, 6
        %v2160 = vsel %vm862, %v2158, %v2159
        %v2161 = vrot.slane %v2159, 4
        %v2162 = vrot.slane %v2121, 6
        %v2163 = vsel %vm862, %v2161, %v2162
        %v2164 = vrot.slane %v2162, 4
        %v2165 = vrot.slane %v2122, 6
        %v2166 = vsel %vm862, %v2164, %v2165
        %v2167 = vrot.slane %v2165, 4
        %v2168 = vrot.slane %v2123, 6
        %v2169 = vsel %vm862, %v2167, %v2168
        %v2170 = vrot.slane %v2168, 4
        %v2171 = vrot.slane %v2124, 6
        %v2172 = vsel %vm862, %v2170, %v2171
        %v2173 = vrot.slane %v2171, 4
        %v2174 = vrot.slane %v2125, 6
        %v2175 = vsel %vm862, %v2173, %v2174
        %2176 = vrot.lane.b32.xlu0 %v2142, 64
        %v2177 = vpop.permute.xlu0 %2176
        %2178 = vrot.lane.b32.xlu0 %v2145, 64
        %v2179 = vpop.permute.xlu0 %2178
        %2180 = vrot.lane.b32.xlu0 %v2148, 64
        %v2181 = vpop.permute.xlu0 %2180
        %2182 = vrot.lane.b32.xlu0 %v2151, 64
        %v2183 = vpop.permute.xlu0 %2182
        %2184 = vrot.lane.b32.xlu0 %v2154, 64
        %v2185 = vpop.permute.xlu0 %2184
        %2186 = vrot.lane.b32.xlu0 %v2157, 64
        %v2187 = vpop.permute.xlu0 %2186
        %2188 = vrot.lane.b32.xlu0 %v2160, 64
        %v2189 = vpop.permute.xlu0 %2188
        %2190 = vrot.lane.b32.xlu0 %v2163, 64
        %v2191 = vpop.permute.xlu0 %2190
        %2192 = vrot.lane.b32.xlu0 %v2166, 64
        %v2193 = vpop.permute.xlu0 %2192
        %2194 = vrot.lane.b32.xlu0 %v2169, 64
        %v2195 = vpop.permute.xlu0 %2194
        %2196 = vrot.lane.b32.xlu0 %v2172, 64
        %v2197 = vpop.permute.xlu0 %2196
        %2198 = vrot.lane.b32.xlu0 %v2175, 64
        %v2199 = vpop.permute.xlu0 %2198
        %2212 = vst.msk [vmem:[#allocation3 + $0x1c] sm:$0xf] %vm539, %v2177
        %2213 = vst.msk [vmem:[#allocation3 + $0x50] sm:$0xf] %vm539, %v2179
        %2214 = vst.msk [vmem:[#allocation3 + $0x84] sm:$0xf] %vm539, %v2181
        %2215 = vst.msk [vmem:[#allocation3 + $0xb8] sm:$0xf] %vm539, %v2183
        %2216 = vst.msk [vmem:[#allocation3 + $0xec] sm:$0xf] %vm539, %v2185
        %2217 = vst.msk [vmem:[#allocation3 + $0x120] sm:$0xf] %vm539, %v2187
        %2218 = vst.msk [vmem:[#allocation3 + $0x154] sm:$0xf] %vm539, %v2189
        %2219 = vst.msk [vmem:[#allocation3 + $0x188] sm:$0xf] %vm539, %v2191
        %2220 = vst.msk [vmem:[#allocation3 + $0x1bc] sm:$0xf] %vm539, %v2193
        %2221 = vst.msk [vmem:[#allocation3 + $0x1f0] sm:$0xf] %vm539, %v2195
        %2222 = vst.msk [vmem:[#allocation3 + $0x224] sm:$0xf] %vm539, %v2197
        %2223 = vst.msk [vmem:[#allocation3 + $0x258] sm:$0xf] %vm539, %v2199
        %v2224 = vld [vmem:[#allocation2 + $0x10] sm:$0xc]
        %v2225 = vld [vmem:[#allocation2 + $0x14] sm:$0xf]
        %v2226 = vld [vmem:[#allocation2 + $0x18] sm:$0xf]
        %v2227 = vld [vmem:[#allocation2 + $0x1c] sm:$0xf]
        %v2228 = vld [vmem:[#allocation2 + $0x20] sm:$0xf]
        %v2229 = vld [vmem:[#allocation2 + $0x24] sm:$0xf]
        %v2230 = vld [vmem:[#allocation2 + $0x28] sm:$0xf]
        %v2231 = vld [vmem:[#allocation2 + $0x2c] sm:$0xf]
        %v2232 = vld [vmem:[#allocation2 + $0x30] sm:$0xf]
        %v2233 = vld [vmem:[#allocation2 + $0x34] sm:$0xf]
        %v2234 = vld [vmem:[#allocation2 + $0x38] sm:$0xf]
        %v2235 = vld [vmem:[#allocation2 + $0x3c] sm:$0xf]
        %v2236 = vld [vmem:[#allocation2 + $0x40] sm:$0x7]
        %v2238 = vshrl.u32 %v2224, 16
        %v2240 = vrot.slane %v2238, 6
        %v2241 = vshll.u32 %v2224, 16
        %v2243 = vrot.slane %v2241, 7
        %v2244 = vor.u32 %v2240, %v2243
        %v2245 = vrot.slane %v2244, 4
        %v2247 = vshrl.u32 %v2225, 16
        %v2249 = vrot.slane %v2247, 6
        %v2250 = vshll.u32 %v2225, 16
        %v2252 = vrot.slane %v2250, 7
        %v2253 = vor.u32 %v2249, %v2252
        %v2254 = vsel %vm1050, %v2245, %v2253
        %v2255 = vrot.slane %v2253, 4
        %v2257 = vshrl.u32 %v2226, 16
        %v2259 = vrot.slane %v2257, 6
        %v2260 = vshll.u32 %v2226, 16
        %v2262 = vrot.slane %v2260, 7
        %v2263 = vor.u32 %v2259, %v2262
        %v2264 = vsel %vm1050, %v2255, %v2263
        %v2265 = vrot.slane %v2263, 4
        %v2267 = vshrl.u32 %v2227, 16
        %v2269 = vrot.slane %v2267, 6
        %v2270 = vshll.u32 %v2227, 16
        %v2272 = vrot.slane %v2270, 7
        %v2273 = vor.u32 %v2269, %v2272
        %v2274 = vsel %vm1050, %v2265, %v2273
        %v2275 = vrot.slane %v2273, 4
        %v2277 = vshrl.u32 %v2228, 16
        %v2279 = vrot.slane %v2277, 6
        %v2280 = vshll.u32 %v2228, 16
        %v2282 = vrot.slane %v2280, 7
        %v2283 = vor.u32 %v2279, %v2282
        %v2284 = vsel %vm1050, %v2275, %v2283
        %v2285 = vrot.slane %v2283, 4
        %v2287 = vshrl.u32 %v2229, 16
        %v2289 = vrot.slane %v2287, 6
        %v2290 = vshll.u32 %v2229, 16
        %v2292 = vrot.slane %v2290, 7
        %v2293 = vor.u32 %v2289, %v2292
        %v2294 = vsel %vm1050, %v2285, %v2293
        %v2295 = vrot.slane %v2293, 4
        %v2297 = vshrl.u32 %v2230, 16
        %v2299 = vrot.slane %v2297, 6
        %v2300 = vshll.u32 %v2230, 16
        %v2302 = vrot.slane %v2300, 7
        %v2303 = vor.u32 %v2299, %v2302
        %v2304 = vsel %vm1050, %v2295, %v2303
        %v2305 = vrot.slane %v2303, 4
        %v2307 = vshrl.u32 %v2231, 16
        %v2309 = vrot.slane %v2307, 6
        %v2310 = vshll.u32 %v2231, 16
        %v2312 = vrot.slane %v2310, 7
        %v2313 = vor.u32 %v2309, %v2312
        %v2314 = vsel %vm1050, %v2305, %v2313
        %v2315 = vrot.slane %v2313, 4
        %v2317 = vshrl.u32 %v2232, 16
        %v2319 = vrot.slane %v2317, 6
        %v2320 = vshll.u32 %v2232, 16
        %v2322 = vrot.slane %v2320, 7
        %v2323 = vor.u32 %v2319, %v2322
        %v2324 = vsel %vm1050, %v2315, %v2323
        %v2325 = vrot.slane %v2323, 4
        %v2327 = vshrl.u32 %v2233, 16
        %v2329 = vrot.slane %v2327, 6
        %v2330 = vshll.u32 %v2233, 16
        %v2332 = vrot.slane %v2330, 7
        %v2333 = vor.u32 %v2329, %v2332
        %v2334 = vsel %vm1050, %v2325, %v2333
        %v2335 = vrot.slane %v2333, 4
        %v2337 = vshrl.u32 %v2234, 16
        %v2339 = vrot.slane %v2337, 6
        %v2340 = vshll.u32 %v2234, 16
        %v2342 = vrot.slane %v2340, 7
        %v2343 = vor.u32 %v2339, %v2342
        %v2344 = vsel %vm1050, %v2335, %v2343
        %v2345 = vrot.slane %v2343, 4
        %v2347 = vshrl.u32 %v2235, 16
        %v2349 = vrot.slane %v2347, 6
        %v2350 = vshll.u32 %v2235, 16
        %v2352 = vrot.slane %v2350, 7
        %v2353 = vor.u32 %v2349, %v2352
        %v2354 = vsel %vm1050, %v2345, %v2353
        %v2355 = vrot.slane %v2353, 4
        %v2357 = vshrl.u32 %v2236, 16
        %v2359 = vrot.slane %v2357, 6
        %v2360 = vshll.u32 %v2236, 16
        %v2362 = vrot.slane %v2360, 7
        %v2363 = vor.u32 %v2359, %v2362
        %v2364 = vsel %vm1050, %v2355, %v2363
        %2377 = vst.msk [vmem:[#allocation3 + $0x20] sm:$0xf] %vm258, %v2254
        %2378 = vst.msk [vmem:[#allocation3 + $0x54] sm:$0xf] %vm258, %v2264
        %2379 = vst.msk [vmem:[#allocation3 + $0x88] sm:$0xf] %vm258, %v2274
        %2380 = vst.msk [vmem:[#allocation3 + $0xbc] sm:$0xf] %vm258, %v2284
        %2381 = vst.msk [vmem:[#allocation3 + $0xf0] sm:$0xf] %vm258, %v2294
        %2382 = vst.msk [vmem:[#allocation3 + $0x124] sm:$0xf] %vm258, %v2304
        %2383 = vst.msk [vmem:[#allocation3 + $0x158] sm:$0xf] %vm258, %v2314
        %2384 = vst.msk [vmem:[#allocation3 + $0x18c] sm:$0xf] %vm258, %v2324
        %2385 = vst.msk [vmem:[#allocation3 + $0x1c0] sm:$0xf] %vm258, %v2334
        %2386 = vst.msk [vmem:[#allocation3 + $0x1f4] sm:$0xf] %vm258, %v2344
        %2387 = vst.msk [vmem:[#allocation3 + $0x228] sm:$0xf] %vm258, %v2354
        %2388 = vst.msk [vmem:[#allocation3 + $0x25c] sm:$0xf] %vm258, %v2364
        %v2389 = vld [vmem:[#allocation2 + $0x10] sm:$0x8]
        %v2390 = vld [vmem:[#allocation2 + $0x14] sm:$0xf]
        %v2391 = vld [vmem:[#allocation2 + $0x18] sm:$0xf]
        %v2392 = vld [vmem:[#allocation2 + $0x1c] sm:$0xf]
        %v2393 = vld [vmem:[#allocation2 + $0x20] sm:$0xf]
        %v2394 = vld [vmem:[#allocation2 + $0x24] sm:$0xf]
        %v2395 = vld [vmem:[#allocation2 + $0x28] sm:$0xf]
        %v2396 = vld [vmem:[#allocation2 + $0x2c] sm:$0xf]
        %v2397 = vld [vmem:[#allocation2 + $0x30] sm:$0xf]
        %v2398 = vld [vmem:[#allocation2 + $0x34] sm:$0xf]
        %v2399 = vld [vmem:[#allocation2 + $0x38] sm:$0xf]
        %v2400 = vld [vmem:[#allocation2 + $0x3c] sm:$0xf]
        %v2401 = vld [vmem:[#allocation2 + $0x40] sm:$0x7]
        %v2415 = vrot.slane %v2389, 7
        %v2416 = vrot.slane %v2415, 4
        %v2417 = vrot.slane %v2390, 7
        %v2418 = vsel %vm1231, %v2416, %v2417
        %v2419 = vrot.slane %v2417, 4
        %v2420 = vrot.slane %v2391, 7
        %v2421 = vsel %vm1231, %v2419, %v2420
        %v2422 = vrot.slane %v2420, 4
        %v2423 = vrot.slane %v2392, 7
        %v2424 = vsel %vm1231, %v2422, %v2423
        %v2425 = vrot.slane %v2423, 4
        %v2426 = vrot.slane %v2393, 7
        %v2427 = vsel %vm1231, %v2425, %v2426
        %v2428 = vrot.slane %v2426, 4
        %v2429 = vrot.slane %v2394, 7
        %v2430 = vsel %vm1231, %v2428, %v2429
        %v2431 = vrot.slane %v2429, 4
        %v2432 = vrot.slane %v2395, 7
        %v2433 = vsel %vm1231, %v2431, %v2432
        %v2434 = vrot.slane %v2432, 4
        %v2435 = vrot.slane %v2396, 7
        %v2436 = vsel %vm1231, %v2434, %v2435
        %v2437 = vrot.slane %v2435, 4
        %v2438 = vrot.slane %v2397, 7
        %v2439 = vsel %vm1231, %v2437, %v2438
        %v2440 = vrot.slane %v2438, 4
        %v2441 = vrot.slane %v2398, 7
        %v2442 = vsel %vm1231, %v2440, %v2441
        %v2443 = vrot.slane %v2441, 4
        %v2444 = vrot.slane %v2399, 7
        %v2445 = vsel %vm1231, %v2443, %v2444
        %v2446 = vrot.slane %v2444, 4
        %v2447 = vrot.slane %v2400, 7
        %v2448 = vsel %vm1231, %v2446, %v2447
        %v2449 = vrot.slane %v2447, 4
        %v2450 = vrot.slane %v2401, 7
        %v2451 = vsel %vm1231, %v2449, %v2450
        %2452 = vrot.lane.b32.xlu0 %v2418, 64
        %v2453 = vpop.permute.xlu0 %2452
        %2454 = vrot.lane.b32.xlu0 %v2421, 64
        %v2455 = vpop.permute.xlu0 %2454
        %2456 = vrot.lane.b32.xlu0 %v2424, 64
        %v2457 = vpop.permute.xlu0 %2456
        %2458 = vrot.lane.b32.xlu0 %v2427, 64
        %v2459 = vpop.permute.xlu0 %2458
        %2460 = vrot.lane.b32.xlu0 %v2430, 64
        %v2461 = vpop.permute.xlu0 %2460
        %2462 = vrot.lane.b32.xlu0 %v2433, 64
        %v2463 = vpop.permute.xlu0 %2462
        %2464 = vrot.lane.b32.xlu0 %v2436, 64
        %v2465 = vpop.permute.xlu0 %2464
        %2466 = vrot.lane.b32.xlu0 %v2439, 64
        %v2467 = vpop.permute.xlu0 %2466
        %2468 = vrot.lane.b32.xlu0 %v2442, 64
        %v2469 = vpop.permute.xlu0 %2468
        %2470 = vrot.lane.b32.xlu0 %v2445, 64
        %v2471 = vpop.permute.xlu0 %2470
        %2472 = vrot.lane.b32.xlu0 %v2448, 64
        %v2473 = vpop.permute.xlu0 %2472
        %2474 = vrot.lane.b32.xlu0 %v2451, 64
        %v2475 = vpop.permute.xlu0 %2474
        %2488 = vst.msk [vmem:[#allocation3 + $0x20] sm:$0xf] %vm539, %v2453
        %2489 = vst.msk [vmem:[#allocation3 + $0x54] sm:$0xf] %vm539, %v2455
        %2490 = vst.msk [vmem:[#allocation3 + $0x88] sm:$0xf] %vm539, %v2457
        %2491 = vst.msk [vmem:[#allocation3 + $0xbc] sm:$0xf] %vm539, %v2459
        %2492 = vst.msk [vmem:[#allocation3 + $0xf0] sm:$0xf] %vm539, %v2461
        %2493 = vst.msk [vmem:[#allocation3 + $0x124] sm:$0xf] %vm539, %v2463
        %2494 = vst.msk [vmem:[#allocation3 + $0x158] sm:$0xf] %vm539, %v2465
        %2495 = vst.msk [vmem:[#allocation3 + $0x18c] sm:$0xf] %vm539, %v2467
        %2496 = vst.msk [vmem:[#allocation3 + $0x1c0] sm:$0xf] %vm539, %v2469
        %2497 = vst.msk [vmem:[#allocation3 + $0x1f4] sm:$0xf] %vm539, %v2471
        %2498 = vst.msk [vmem:[#allocation3 + $0x228] sm:$0xf] %vm539, %v2473
        %2499 = vst.msk [vmem:[#allocation3 + $0x25c] sm:$0xf] %vm539, %v2475
        %v2500 = vld [vmem:[#allocation2 + $0x10] sm:$0x8]
        %v2501 = vld [vmem:[#allocation2 + $0x14] sm:$0xf]
        %v2502 = vld [vmem:[#allocation2 + $0x18] sm:$0xf]
        %v2503 = vld [vmem:[#allocation2 + $0x1c] sm:$0xf]
        %v2504 = vld [vmem:[#allocation2 + $0x20] sm:$0xf]
        %v2505 = vld [vmem:[#allocation2 + $0x24] sm:$0xf]
        %v2506 = vld [vmem:[#allocation2 + $0x28] sm:$0xf]
        %v2507 = vld [vmem:[#allocation2 + $0x2c] sm:$0xf]
        %v2508 = vld [vmem:[#allocation2 + $0x30] sm:$0xf]
        %v2509 = vld [vmem:[#allocation2 + $0x34] sm:$0xf]
        %v2510 = vld [vmem:[#allocation2 + $0x38] sm:$0xf]
        %v2511 = vld [vmem:[#allocation2 + $0x3c] sm:$0xf]
        %v2512 = vld [vmem:[#allocation2 + $0x40] sm:$0xf]
        %v2514 = vshrl.u32 %v2500, 16
        %v2516 = vrot.slane %v2514, 7
        %v2517 = vrot.slane %v2516, 4
        %v2519 = vshrl.u32 %v2501, 16
        %v2521 = vrot.slane %v2519, 7
        %v2522 = vshll.u32 %v2501, 16
        %v2524 = vor.u32 %v2521, %v2522
        %v2525 = vsel %vm1332, %v2517, %v2524
        %v2526 = vrot.slane %v2521, 4
        %v2528 = vshrl.u32 %v2502, 16
        %v2530 = vrot.slane %v2528, 7
        %v2531 = vshll.u32 %v2502, 16
        %v2533 = vor.u32 %v2530, %v2531
        %v2534 = vsel %vm1332, %v2526, %v2533
        %v2535 = vrot.slane %v2530, 4
        %v2537 = vshrl.u32 %v2503, 16
        %v2539 = vrot.slane %v2537, 7
        %v2540 = vshll.u32 %v2503, 16
        %v2542 = vor.u32 %v2539, %v2540
        %v2543 = vsel %vm1332, %v2535, %v2542
        %v2544 = vrot.slane %v2539, 4
        %v2546 = vshrl.u32 %v2504, 16
        %v2548 = vrot.slane %v2546, 7
        %v2549 = vshll.u32 %v2504, 16
        %v2551 = vor.u32 %v2548, %v2549
        %v2552 = vsel %vm1332, %v2544, %v2551
        %v2553 = vrot.slane %v2548, 4
        %v2555 = vshrl.u32 %v2505, 16
        %v2557 = vrot.slane %v2555, 7
        %v2558 = vshll.u32 %v2505, 16
        %v2560 = vor.u32 %v2557, %v2558
        %v2561 = vsel %vm1332, %v2553, %v2560
        %v2562 = vrot.slane %v2557, 4
        %v2564 = vshrl.u32 %v2506, 16
        %v2566 = vrot.slane %v2564, 7
        %v2567 = vshll.u32 %v2506, 16
        %v2569 = vor.u32 %v2566, %v2567
        %v2570 = vsel %vm1332, %v2562, %v2569
        %v2571 = vrot.slane %v2566, 4
        %v2573 = vshrl.u32 %v2507, 16
        %v2575 = vrot.slane %v2573, 7
        %v2576 = vshll.u32 %v2507, 16
        %v2578 = vor.u32 %v2575, %v2576
        %v2579 = vsel %vm1332, %v2571, %v2578
        %v2580 = vrot.slane %v2575, 4
        %v2582 = vshrl.u32 %v2508, 16
        %v2584 = vrot.slane %v2582, 7
        %v2585 = vshll.u32 %v2508, 16
        %v2587 = vor.u32 %v2584, %v2585
        %v2588 = vsel %vm1332, %v2580, %v2587
        %v2589 = vrot.slane %v2584, 4
        %v2591 = vshrl.u32 %v2509, 16
        %v2593 = vrot.slane %v2591, 7
        %v2594 = vshll.u32 %v2509, 16
        %v2596 = vor.u32 %v2593, %v2594
        %v2597 = vsel %vm1332, %v2589, %v2596
        %v2598 = vrot.slane %v2593, 4
        %v2600 = vshrl.u32 %v2510, 16
        %v2602 = vrot.slane %v2600, 7
        %v2603 = vshll.u32 %v2510, 16
        %v2605 = vor.u32 %v2602, %v2603
        %v2606 = vsel %vm1332, %v2598, %v2605
        %v2607 = vrot.slane %v2602, 4
        %v2609 = vshrl.u32 %v2511, 16
        %v2611 = vrot.slane %v2609, 7
        %v2612 = vshll.u32 %v2511, 16
        %v2614 = vor.u32 %v2611, %v2612
        %v2615 = vsel %vm1332, %v2607, %v2614
        %v2616 = vrot.slane %v2611, 4
        %v2618 = vshrl.u32 %v2512, 16
        %v2620 = vrot.slane %v2618, 7
        %v2621 = vshll.u32 %v2512, 16
        %v2623 = vor.u32 %v2620, %v2621
        %v2624 = vsel %vm1332, %v2616, %v2623
        %2637 = vst.msk [vmem:[#allocation3 + $0x24] sm:$0xf] %vm258, %v2525
        %2638 = vst.msk [vmem:[#allocation3 + $0x58] sm:$0xf] %vm258, %v2534
        %2639 = vst.msk [vmem:[#allocation3 + $0x8c] sm:$0xf] %vm258, %v2543
        %2640 = vst.msk [vmem:[#allocation3 + $0xc0] sm:$0xf] %vm258, %v2552
        %2641 = vst.msk [vmem:[#allocation3 + $0xf4] sm:$0xf] %vm258, %v2561
        %2642 = vst.msk [vmem:[#allocation3 + $0x128] sm:$0xf] %vm258, %v2570
        %2643 = vst.msk [vmem:[#allocation3 + $0x15c] sm:$0xf] %vm258, %v2579
        %2644 = vst.msk [vmem:[#allocation3 + $0x190] sm:$0xf] %vm258, %v2588
        %2645 = vst.msk [vmem:[#allocation3 + $0x1c4] sm:$0xf] %vm258, %v2597
        %2646 = vst.msk [vmem:[#allocation3 + $0x1f8] sm:$0xf] %vm258, %v2606
        %2647 = vst.msk [vmem:[#allocation3 + $0x22c] sm:$0xf] %vm258, %v2615
        %2648 = vst.msk [vmem:[#allocation3 + $0x260] sm:$0xf] %vm258, %v2624
        %v2649 = vld [vmem:[#allocation2 + $0x14] sm:$0xf]
        %v2650 = vld [vmem:[#allocation2 + $0x18] sm:$0xf]
        %v2651 = vld [vmem:[#allocation2 + $0x1c] sm:$0xf]
        %v2652 = vld [vmem:[#allocation2 + $0x20] sm:$0xf]
        %v2653 = vld [vmem:[#allocation2 + $0x24] sm:$0xf]
        %v2654 = vld [vmem:[#allocation2 + $0x28] sm:$0xf]
        %v2655 = vld [vmem:[#allocation2 + $0x2c] sm:$0xf]
        %v2656 = vld [vmem:[#allocation2 + $0x30] sm:$0xf]
        %v2657 = vld [vmem:[#allocation2 + $0x34] sm:$0xf]
        %v2658 = vld [vmem:[#allocation2 + $0x38] sm:$0xf]
        %v2659 = vld [vmem:[#allocation2 + $0x3c] sm:$0xf]
        %v2660 = vld [vmem:[#allocation2 + $0x40] sm:$0xf]
        %2673 = vrot.lane.b32.xlu0 %v2649, 64
        %v2674 = vpop.permute.xlu0 %2673
        %2675 = vrot.lane.b32.xlu0 %v2650, 64
        %v2676 = vpop.permute.xlu0 %2675
        %2677 = vrot.lane.b32.xlu0 %v2651, 64
        %v2678 = vpop.permute.xlu0 %2677
        %2679 = vrot.lane.b32.xlu0 %v2652, 64
        %v2680 = vpop.permute.xlu0 %2679
        %2681 = vrot.lane.b32.xlu0 %v2653, 64
        %v2682 = vpop.permute.xlu0 %2681
        %2683 = vrot.lane.b32.xlu0 %v2654, 64
        %v2684 = vpop.permute.xlu0 %2683
        %2685 = vrot.lane.b32.xlu0 %v2655, 64
        %v2686 = vpop.permute.xlu0 %2685
        %2687 = vrot.lane.b32.xlu0 %v2656, 64
        %v2688 = vpop.permute.xlu0 %2687
        %2689 = vrot.lane.b32.xlu0 %v2657, 64
        %v2690 = vpop.permute.xlu0 %2689
        %2691 = vrot.lane.b32.xlu0 %v2658, 64
        %v2692 = vpop.permute.xlu0 %2691
        %2693 = vrot.lane.b32.xlu0 %v2659, 64
        %v2694 = vpop.permute.xlu0 %2693
        %2695 = vrot.lane.b32.xlu0 %v2660, 64
        %v2696 = vpop.permute.xlu0 %2695
        %2709 = vst.msk [vmem:[#allocation3 + $0x24] sm:$0xf] %vm539, %v2674
        %2710 = vst.msk [vmem:[#allocation3 + $0x58] sm:$0xf] %vm539, %v2676
        %2711 = vst.msk [vmem:[#allocation3 + $0x8c] sm:$0xf] %vm539, %v2678
        %2712 = vst.msk [vmem:[#allocation3 + $0xc0] sm:$0xf] %vm539, %v2680
        %2713 = vst.msk [vmem:[#allocation3 + $0xf4] sm:$0xf] %vm539, %v2682
        %2714 = vst.msk [vmem:[#allocation3 + $0x128] sm:$0xf] %vm539, %v2684
        %2715 = vst.msk [vmem:[#allocation3 + $0x15c] sm:$0xf] %vm539, %v2686
        %2716 = vst.msk [vmem:[#allocation3 + $0x190] sm:$0xf] %vm539, %v2688
        %2717 = vst.msk [vmem:[#allocation3 + $0x1c4] sm:$0xf] %vm539, %v2690
        %2718 = vst.msk [vmem:[#allocation3 + $0x1f8] sm:$0xf] %vm539, %v2692
        %2719 = vst.msk [vmem:[#allocation3 + $0x22c] sm:$0xf] %vm539, %v2694
        %2720 = vst.msk [vmem:[#allocation3 + $0x260] sm:$0xf] %vm539, %v2696
        %v2721 = vld [vmem:[#allocation2 + $0x18] sm:$0xf]
        %v2722 = vld [vmem:[#allocation2 + $0x1c] sm:$0xf]
        %v2723 = vld [vmem:[#allocation2 + $0x20] sm:$0xf]
        %v2724 = vld [vmem:[#allocation2 + $0x24] sm:$0xf]
        %v2725 = vld [vmem:[#allocation2 + $0x28] sm:$0xf]
        %v2726 = vld [vmem:[#allocation2 + $0x2c] sm:$0xf]
        %v2727 = vld [vmem:[#allocation2 + $0x30] sm:$0xf]
        %v2728 = vld [vmem:[#allocation2 + $0x34] sm:$0xf]
        %v2729 = vld [vmem:[#allocation2 + $0x38] sm:$0xf]
        %v2730 = vld [vmem:[#allocation2 + $0x3c] sm:$0xf]
        %v2731 = vld [vmem:[#allocation2 + $0x40] sm:$0xf]
        %v2732 = vld [vmem:[#allocation2 + $0x44] sm:$0xf]
        %2733 = vst.msk [vmem:[#allocation3 + $0x28] sm:$0xf] %vm258, %v2721
        %2734 = vst.msk [vmem:[#allocation3 + $0x5c] sm:$0xf] %vm258, %v2722
        %2735 = vst.msk [vmem:[#allocation3 + $0x90] sm:$0xf] %vm258, %v2723
        %2736 = vst.msk [vmem:[#allocation3 + $0xc4] sm:$0xf] %vm258, %v2724
        %2737 = vst.msk [vmem:[#allocation3 + $0xf8] sm:$0xf] %vm258, %v2725
        %2738 = vst.msk [vmem:[#allocation3 + $0x12c] sm:$0xf] %vm258, %v2726
        %2739 = vst.msk [vmem:[#allocation3 + $0x160] sm:$0xf] %vm258, %v2727
        %2740 = vst.msk [vmem:[#allocation3 + $0x194] sm:$0xf] %vm258, %v2728
        %2741 = vst.msk [vmem:[#allocation3 + $0x1c8] sm:$0xf] %vm258, %v2729
        %2742 = vst.msk [vmem:[#allocation3 + $0x1fc] sm:$0xf] %vm258, %v2730
        %2743 = vst.msk [vmem:[#allocation3 + $0x230] sm:$0xf] %vm258, %v2731
        %2744 = vst.msk [vmem:[#allocation3 + $0x264] sm:$0xf] %vm258, %v2732
        %v2745 = vld [vmem:[#allocation2 + $0x18] sm:$0xf]
        %v2746 = vld [vmem:[#allocation2 + $0x1c] sm:$0xf]
        %v2747 = vld [vmem:[#allocation2 + $0x20] sm:$0xf]
        %v2748 = vld [vmem:[#allocation2 + $0x24] sm:$0xf]
        %v2749 = vld [vmem:[#allocation2 + $0x28] sm:$0xf]
        %v2750 = vld [vmem:[#allocation2 + $0x2c] sm:$0xf]
        %v2751 = vld [vmem:[#allocation2 + $0x30] sm:$0xf]
        %v2752 = vld [vmem:[#allocation2 + $0x34] sm:$0xf]
        %v2753 = vld [vmem:[#allocation2 + $0x38] sm:$0xf]
        %v2754 = vld [vmem:[#allocation2 + $0x3c] sm:$0xf]
        %v2755 = vld [vmem:[#allocation2 + $0x40] sm:$0xf]
        %v2756 = vld [vmem:[#allocation2 + $0x44] sm:$0xf]
        %v2757 = vld [vmem:[#allocation2 + $0x48] sm:$0x1]
        %v2759 = vshrl.u32 %v2745, 16
        %v2761 = vrot.slane %v2759, 4
        %v2762 = vshll.u32 %v2745, 16
        %v2764 = vrot.slane %v2762, 5
        %v2765 = vor.u32 %v2761, %v2764
        %v2766 = vrot.slane %v2765, 4
        %v2768 = vshll.u32 %v2746, 16
        %v2770 = vrot.slane %v2768, 5
        %v2771 = vsel %vm378, %v2766, %v2770
        %v2772 = vshrl.u32 %v2746, 16
        %v2774 = vrot.slane %v2772, 4
        %v2775 = vor.u32 %v2774, %v2770
        %v2776 = vrot.slane %v2775, 4
        %v2778 = vshll.u32 %v2747, 16
        %v2780 = vrot.slane %v2778, 5
        %v2781 = vsel %vm378, %v2776, %v2780
        %v2782 = vshrl.u32 %v2747, 16
        %v2784 = vrot.slane %v2782, 4
        %v2785 = vor.u32 %v2784, %v2780
        %v2786 = vrot.slane %v2785, 4
        %v2788 = vshll.u32 %v2748, 16
        %v2790 = vrot.slane %v2788, 5
        %v2791 = vsel %vm378, %v2786, %v2790
        %v2792 = vshrl.u32 %v2748, 16
        %v2794 = vrot.slane %v2792, 4
        %v2795 = vor.u32 %v2794, %v2790
        %v2796 = vrot.slane %v2795, 4
        %v2798 = vshll.u32 %v2749, 16
        %v2800 = vrot.slane %v2798, 5
        %v2801 = vsel %vm378, %v2796, %v2800
        %v2802 = vshrl.u32 %v2749, 16
        %v2804 = vrot.slane %v2802, 4
        %v2805 = vor.u32 %v2804, %v2800
        %v2806 = vrot.slane %v2805, 4
        %v2808 = vshll.u32 %v2750, 16
        %v2810 = vrot.slane %v2808, 5
        %v2811 = vsel %vm378, %v2806, %v2810
        %v2812 = vshrl.u32 %v2750, 16
        %v2814 = vrot.slane %v2812, 4
        %v2815 = vor.u32 %v2814, %v2810
        %v2816 = vrot.slane %v2815, 4
        %v2818 = vshll.u32 %v2751, 16
        %v2820 = vrot.slane %v2818, 5
        %v2821 = vsel %vm378, %v2816, %v2820
        %v2822 = vshrl.u32 %v2751, 16
        %v2824 = vrot.slane %v2822, 4
        %v2825 = vor.u32 %v2824, %v2820
        %v2826 = vrot.slane %v2825, 4
        %v2828 = vshll.u32 %v2752, 16
        %v2830 = vrot.slane %v2828, 5
        %v2831 = vsel %vm378, %v2826, %v2830
        %v2832 = vshrl.u32 %v2752, 16
        %v2834 = vrot.slane %v2832, 4
        %v2835 = vor.u32 %v2834, %v2830
        %v2836 = vrot.slane %v2835, 4
        %v2838 = vshll.u32 %v2753, 16
        %v2840 = vrot.slane %v2838, 5
        %v2841 = vsel %vm378, %v2836, %v2840
        %v2842 = vshrl.u32 %v2753, 16
        %v2844 = vrot.slane %v2842, 4
        %v2845 = vor.u32 %v2844, %v2840
        %v2846 = vrot.slane %v2845, 4
        %v2848 = vshll.u32 %v2754, 16
        %v2850 = vrot.slane %v2848, 5
        %v2851 = vsel %vm378, %v2846, %v2850
        %v2852 = vshrl.u32 %v2754, 16
        %v2854 = vrot.slane %v2852, 4
        %v2855 = vor.u32 %v2854, %v2850
        %v2856 = vrot.slane %v2855, 4
        %v2858 = vshll.u32 %v2755, 16
        %v2860 = vrot.slane %v2858, 5
        %v2861 = vsel %vm378, %v2856, %v2860
        %v2862 = vshrl.u32 %v2755, 16
        %v2864 = vrot.slane %v2862, 4
        %v2865 = vor.u32 %v2864, %v2860
        %v2866 = vrot.slane %v2865, 4
        %v2868 = vshll.u32 %v2756, 16
        %v2870 = vrot.slane %v2868, 5
        %v2871 = vsel %vm378, %v2866, %v2870
        %v2872 = vshrl.u32 %v2756, 16
        %v2874 = vrot.slane %v2872, 4
        %v2875 = vor.u32 %v2874, %v2870
        %v2876 = vrot.slane %v2875, 4
        %v2878 = vshll.u32 %v2757, 16
        %v2880 = vrot.slane %v2878, 5
        %v2881 = vsel %vm378, %v2876, %v2880
        %2882 = vrot.lane.b32.xlu0 %v2771, 64
        %v2883 = vpop.permute.xlu0 %2882
        %2884 = vrot.lane.b32.xlu0 %v2781, 64
        %v2885 = vpop.permute.xlu0 %2884
        %2886 = vrot.lane.b32.xlu0 %v2791, 64
        %v2887 = vpop.permute.xlu0 %2886
        %2888 = vrot.lane.b32.xlu0 %v2801, 64
        %v2889 = vpop.permute.xlu0 %2888
        %2890 = vrot.lane.b32.xlu0 %v2811, 64
        %v2891 = vpop.permute.xlu0 %2890
        %2892 = vrot.lane.b32.xlu0 %v2821, 64
        %v2893 = vpop.permute.xlu0 %2892
        %2894 = vrot.lane.b32.xlu0 %v2831, 64
        %v2895 = vpop.permute.xlu0 %2894
        %2896 = vrot.lane.b32.xlu0 %v2841, 64
        %v2897 = vpop.permute.xlu0 %2896
        %2898 = vrot.lane.b32.xlu0 %v2851, 64
        %v2899 = vpop.permute.xlu0 %2898
        %2900 = vrot.lane.b32.xlu0 %v2861, 64
        %v2901 = vpop.permute.xlu0 %2900
        %2902 = vrot.lane.b32.xlu0 %v2871, 64
        %v2903 = vpop.permute.xlu0 %2902
        %2904 = vrot.lane.b32.xlu0 %v2881, 64
        %v2905 = vpop.permute.xlu0 %2904
        %2918 = vst.msk [vmem:[#allocation3 + $0x28] sm:$0xf] %vm539, %v2883
        %2919 = vst.msk [vmem:[#allocation3 + $0x5c] sm:$0xf] %vm539, %v2885
        %2920 = vst.msk [vmem:[#allocation3 + $0x90] sm:$0xf] %vm539, %v2887
        %2921 = vst.msk [vmem:[#allocation3 + $0xc4] sm:$0xf] %vm539, %v2889
        %2922 = vst.msk [vmem:[#allocation3 + $0xf8] sm:$0xf] %vm539, %v2891
        %2923 = vst.msk [vmem:[#allocation3 + $0x12c] sm:$0xf] %vm539, %v2893
        %2924 = vst.msk [vmem:[#allocation3 + $0x160] sm:$0xf] %vm539, %v2895
        %2925 = vst.msk [vmem:[#allocation3 + $0x194] sm:$0xf] %vm539, %v2897
        %2926 = vst.msk [vmem:[#allocation3 + $0x1c8] sm:$0xf] %vm539, %v2899
        %2927 = vst.msk [vmem:[#allocation3 + $0x1fc] sm:$0xf] %vm539, %v2901
        %2928 = vst.msk [vmem:[#allocation3 + $0x230] sm:$0xf] %vm539, %v2903
        %2929 = vst.msk [vmem:[#allocation3 + $0x264] sm:$0xf] %vm539, %v2905
        %v2930 = vld [vmem:[#allocation2 + $0x18] sm:$0xe]
        %v2931 = vld [vmem:[#allocation2 + $0x1c] sm:$0xf]
        %v2932 = vld [vmem:[#allocation2 + $0x20] sm:$0xf]
        %v2933 = vld [vmem:[#allocation2 + $0x24] sm:$0xf]
        %v2934 = vld [vmem:[#allocation2 + $0x28] sm:$0xf]
        %v2935 = vld [vmem:[#allocation2 + $0x2c] sm:$0xf]
        %v2936 = vld [vmem:[#allocation2 + $0x30] sm:$0xf]
        %v2937 = vld [vmem:[#allocation2 + $0x34] sm:$0xf]
        %v2938 = vld [vmem:[#allocation2 + $0x38] sm:$0xf]
        %v2939 = vld [vmem:[#allocation2 + $0x3c] sm:$0xf]
        %v2940 = vld [vmem:[#allocation2 + $0x40] sm:$0xf]
        %v2941 = vld [vmem:[#allocation2 + $0x44] sm:$0xf]
        %v2942 = vld [vmem:[#allocation2 + $0x48] sm:$0x1]
        %v2956 = vrot.slane %v2930, 5
        %v2957 = vrot.slane %v2956, 4
        %v2958 = vrot.slane %v2931, 5
        %v2959 = vsel %vm580, %v2957, %v2958
        %v2960 = vrot.slane %v2958, 4
        %v2961 = vrot.slane %v2932, 5
        %v2962 = vsel %vm580, %v2960, %v2961
        %v2963 = vrot.slane %v2961, 4
        %v2964 = vrot.slane %v2933, 5
        %v2965 = vsel %vm580, %v2963, %v2964
        %v2966 = vrot.slane %v2964, 4
        %v2967 = vrot.slane %v2934, 5
        %v2968 = vsel %vm580, %v2966, %v2967
        %v2969 = vrot.slane %v2967, 4
        %v2970 = vrot.slane %v2935, 5
        %v2971 = vsel %vm580, %v2969, %v2970
        %v2972 = vrot.slane %v2970, 4
        %v2973 = vrot.slane %v2936, 5
        %v2974 = vsel %vm580, %v2972, %v2973
        %v2975 = vrot.slane %v2973, 4
        %v2976 = vrot.slane %v2937, 5
        %v2977 = vsel %vm580, %v2975, %v2976
        %v2978 = vrot.slane %v2976, 4
        %v2979 = vrot.slane %v2938, 5
        %v2980 = vsel %vm580, %v2978, %v2979
        %v2981 = vrot.slane %v2979, 4
        %v2982 = vrot.slane %v2939, 5
        %v2983 = vsel %vm580, %v2981, %v2982
        %v2984 = vrot.slane %v2982, 4
        %v2985 = vrot.slane %v2940, 5
        %v2986 = vsel %vm580, %v2984, %v2985
        %v2987 = vrot.slane %v2985, 4
        %v2988 = vrot.slane %v2941, 5
        %v2989 = vsel %vm580, %v2987, %v2988
        %v2990 = vrot.slane %v2988, 4
        %v2991 = vrot.slane %v2942, 5
        %v2992 = vsel %vm580, %v2990, %v2991
        %3005 = vst.msk [vmem:[#allocation3 + $0x2c] sm:$0xf] %vm258, %v2959
        %3006 = vst.msk [vmem:[#allocation3 + $0x60] sm:$0xf] %vm258, %v2962
        %3007 = vst.msk [vmem:[#allocation3 + $0x94] sm:$0xf] %vm258, %v2965
        %3008 = vst.msk [vmem:[#allocation3 + $0xc8] sm:$0xf] %vm258, %v2968
        %3009 = vst.msk [vmem:[#allocation3 + $0xfc] sm:$0xf] %vm258, %v2971
        %3010 = vst.msk [vmem:[#allocation3 + $0x130] sm:$0xf] %vm258, %v2974
        %3011 = vst.msk [vmem:[#allocation3 + $0x164] sm:$0xf] %vm258, %v2977
        %3012 = vst.msk [vmem:[#allocation3 + $0x198] sm:$0xf] %vm258, %v2980
        %3013 = vst.msk [vmem:[#allocation3 + $0x1cc] sm:$0xf] %vm258, %v2983
        %3014 = vst.msk [vmem:[#allocation3 + $0x200] sm:$0xf] %vm258, %v2986
        %3015 = vst.msk [vmem:[#allocation3 + $0x234] sm:$0xf] %vm258, %v2989
        %3016 = vst.msk [vmem:[#allocation3 + $0x268] sm:$0xf] %vm258, %v2992
        %v3017 = vld [vmem:[#allocation2 + $0x18] sm:$0xe]
        %v3018 = vld [vmem:[#allocation2 + $0x1c] sm:$0xf]
        %v3019 = vld [vmem:[#allocation2 + $0x20] sm:$0xf]
        %v3020 = vld [vmem:[#allocation2 + $0x24] sm:$0xf]
        %v3021 = vld [vmem:[#allocation2 + $0x28] sm:$0xf]
        %v3022 = vld [vmem:[#allocation2 + $0x2c] sm:$0xf]
        %v3023 = vld [vmem:[#allocation2 + $0x30] sm:$0xf]
        %v3024 = vld [vmem:[#allocation2 + $0x34] sm:$0xf]
        %v3025 = vld [vmem:[#allocation2 + $0x38] sm:$0xf]
        %v3026 = vld [vmem:[#allocation2 + $0x3c] sm:$0xf]
        %v3027 = vld [vmem:[#allocation2 + $0x40] sm:$0xf]
        %v3028 = vld [vmem:[#allocation2 + $0x44] sm:$0xf]
        %v3029 = vld [vmem:[#allocation2 + $0x48] sm:$0x3]
        %v3031 = vshrl.u32 %v3017, 16
        %v3033 = vrot.slane %v3031, 5
        %v3034 = vshll.u32 %v3017, 16
        %v3036 = vrot.slane %v3034, 6
        %v3037 = vor.u32 %v3033, %v3036
        %v3038 = vrot.slane %v3037, 4
        %v3040 = vshrl.u32 %v3018, 16
        %v3042 = vrot.slane %v3040, 5
        %v3043 = vshll.u32 %v3018, 16
        %v3045 = vrot.slane %v3043, 6
        %v3046 = vor.u32 %v3042, %v3045
        %v3047 = vsel %vm657, %v3038, %v3046
        %v3048 = vrot.slane %v3046, 4
        %v3050 = vshrl.u32 %v3019, 16
        %v3052 = vrot.slane %v3050, 5
        %v3053 = vshll.u32 %v3019, 16
        %v3055 = vrot.slane %v3053, 6
        %v3056 = vor.u32 %v3052, %v3055
        %v3057 = vsel %vm657, %v3048, %v3056
        %v3058 = vrot.slane %v3056, 4
        %v3060 = vshrl.u32 %v3020, 16
        %v3062 = vrot.slane %v3060, 5
        %v3063 = vshll.u32 %v3020, 16
        %v3065 = vrot.slane %v3063, 6
        %v3066 = vor.u32 %v3062, %v3065
        %v3067 = vsel %vm657, %v3058, %v3066
        %v3068 = vrot.slane %v3066, 4
        %v3070 = vshrl.u32 %v3021, 16
        %v3072 = vrot.slane %v3070, 5
        %v3073 = vshll.u32 %v3021, 16
        %v3075 = vrot.slane %v3073, 6
        %v3076 = vor.u32 %v3072, %v3075
        %v3077 = vsel %vm657, %v3068, %v3076
        %v3078 = vrot.slane %v3076, 4
        %v3080 = vshrl.u32 %v3022, 16
        %v3082 = vrot.slane %v3080, 5
        %v3083 = vshll.u32 %v3022, 16
        %v3085 = vrot.slane %v3083, 6
        %v3086 = vor.u32 %v3082, %v3085
        %v3087 = vsel %vm657, %v3078, %v3086
        %v3088 = vrot.slane %v3086, 4
        %v3090 = vshrl.u32 %v3023, 16
        %v3092 = vrot.slane %v3090, 5
        %v3093 = vshll.u32 %v3023, 16
        %v3095 = vrot.slane %v3093, 6
        %v3096 = vor.u32 %v3092, %v3095
        %v3097 = vsel %vm657, %v3088, %v3096
        %v3098 = vrot.slane %v3096, 4
        %v3100 = vshrl.u32 %v3024, 16
        %v3102 = vrot.slane %v3100, 5
        %v3103 = vshll.u32 %v3024, 16
        %v3105 = vrot.slane %v3103, 6
        %v3106 = vor.u32 %v3102, %v3105
        %v3107 = vsel %vm657, %v3098, %v3106
        %v3108 = vrot.slane %v3106, 4
        %v3110 = vshrl.u32 %v3025, 16
        %v3112 = vrot.slane %v3110, 5
        %v3113 = vshll.u32 %v3025, 16
        %v3115 = vrot.slane %v3113, 6
        %v3116 = vor.u32 %v3112, %v3115
        %v3117 = vsel %vm657, %v3108, %v3116
        %v3118 = vrot.slane %v3116, 4
        %v3120 = vshrl.u32 %v3026, 16
        %v3122 = vrot.slane %v3120, 5
        %v3123 = vshll.u32 %v3026, 16
        %v3125 = vrot.slane %v3123, 6
        %v3126 = vor.u32 %v3122, %v3125
        %v3127 = vsel %vm657, %v3118, %v3126
        %v3128 = vrot.slane %v3126, 4
        %v3130 = vshrl.u32 %v3027, 16
        %v3132 = vrot.slane %v3130, 5
        %v3133 = vshll.u32 %v3027, 16
        %v3135 = vrot.slane %v3133, 6
        %v3136 = vor.u32 %v3132, %v3135
        %v3137 = vsel %vm657, %v3128, %v3136
        %v3138 = vrot.slane %v3136, 4
        %v3140 = vshrl.u32 %v3028, 16
        %v3142 = vrot.slane %v3140, 5
        %v3143 = vshll.u32 %v3028, 16
        %v3145 = vrot.slane %v3143, 6
        %v3146 = vor.u32 %v3142, %v3145
        %v3147 = vsel %vm657, %v3138, %v3146
        %v3148 = vrot.slane %v3146, 4
        %v3150 = vshrl.u32 %v3029, 16
        %v3152 = vrot.slane %v3150, 5
        %v3153 = vshll.u32 %v3029, 16
        %v3155 = vrot.slane %v3153, 6
        %v3156 = vor.u32 %v3152, %v3155
        %v3157 = vsel %vm657, %v3148, %v3156
        %3158 = vrot.lane.b32.xlu0 %v3047, 64
        %v3159 = vpop.permute.xlu0 %3158
        %3160 = vrot.lane.b32.xlu0 %v3057, 64
        %v3161 = vpop.permute.xlu0 %3160
        %3162 = vrot.lane.b32.xlu0 %v3067, 64
        %v3163 = vpop.permute.xlu0 %3162
        %3164 = vrot.lane.b32.xlu0 %v3077, 64
        %v3165 = vpop.permute.xlu0 %3164
        %3166 = vrot.lane.b32.xlu0 %v3087, 64
        %v3167 = vpop.permute.xlu0 %3166
        %3168 = vrot.lane.b32.xlu0 %v3097, 64
        %v3169 = vpop.permute.xlu0 %3168
        %3170 = vrot.lane.b32.xlu0 %v3107, 64
        %v3171 = vpop.permute.xlu0 %3170
        %3172 = vrot.lane.b32.xlu0 %v3117, 64
        %v3173 = vpop.permute.xlu0 %3172
        %3174 = vrot.lane.b32.xlu0 %v3127, 64
        %v3175 = vpop.permute.xlu0 %3174
        %3176 = vrot.lane.b32.xlu0 %v3137, 64
        %v3177 = vpop.permute.xlu0 %3176
        %3178 = vrot.lane.b32.xlu0 %v3147, 64
        %v3179 = vpop.permute.xlu0 %3178
        %3180 = vrot.lane.b32.xlu0 %v3157, 64
        %v3181 = vpop.permute.xlu0 %3180
        %3194 = vst.msk [vmem:[#allocation3 + $0x2c] sm:$0xf] %vm539, %v3159
        %3195 = vst.msk [vmem:[#allocation3 + $0x60] sm:$0xf] %vm539, %v3161
        %3196 = vst.msk [vmem:[#allocation3 + $0x94] sm:$0xf] %vm539, %v3163
        %3197 = vst.msk [vmem:[#allocation3 + $0xc8] sm:$0xf] %vm539, %v3165
        %3198 = vst.msk [vmem:[#allocation3 + $0xfc] sm:$0xf] %vm539, %v3167
        %3199 = vst.msk [vmem:[#allocation3 + $0x130] sm:$0xf] %vm539, %v3169
        %3200 = vst.msk [vmem:[#allocation3 + $0x164] sm:$0xf] %vm539, %v3171
        %3201 = vst.msk [vmem:[#allocation3 + $0x198] sm:$0xf] %vm539, %v3173
        %3202 = vst.msk [vmem:[#allocation3 + $0x1cc] sm:$0xf] %vm539, %v3175
        %3203 = vst.msk [vmem:[#allocation3 + $0x200] sm:$0xf] %vm539, %v3177
        %3204 = vst.msk [vmem:[#allocation3 + $0x234] sm:$0xf] %vm539, %v3179
        %3205 = vst.msk [vmem:[#allocation3 + $0x268] sm:$0xf] %vm539, %v3181
        %v3206 = vld [vmem:[#allocation2 + $0x18] sm:$0xc]
        %v3207 = vld [vmem:[#allocation2 + $0x1c] sm:$0xf]
        %v3208 = vld [vmem:[#allocation2 + $0x20] sm:$0xf]
        %v3209 = vld [vmem:[#allocation2 + $0x24] sm:$0xf]
        %v3210 = vld [vmem:[#allocation2 + $0x28] sm:$0xf]
        %v3211 = vld [vmem:[#allocation2 + $0x2c] sm:$0xf]
        %v3212 = vld [vmem:[#allocation2 + $0x30] sm:$0xf]
        %v3213 = vld [vmem:[#allocation2 + $0x34] sm:$0xf]
        %v3214 = vld [vmem:[#allocation2 + $0x38] sm:$0xf]
        %v3215 = vld [vmem:[#allocation2 + $0x3c] sm:$0xf]
        %v3216 = vld [vmem:[#allocation2 + $0x40] sm:$0xf]
        %v3217 = vld [vmem:[#allocation2 + $0x44] sm:$0xf]
        %v3218 = vld [vmem:[#allocation2 + $0x48] sm:$0x3]
        %v3232 = vrot.slane %v3206, 6
        %v3233 = vrot.slane %v3232, 4
        %v3234 = vrot.slane %v3207, 6
        %v3235 = vsel %vm862, %v3233, %v3234
        %v3236 = vrot.slane %v3234, 4
        %v3237 = vrot.slane %v3208, 6
        %v3238 = vsel %vm862, %v3236, %v3237
        %v3239 = vrot.slane %v3237, 4
        %v3240 = vrot.slane %v3209, 6
        %v3241 = vsel %vm862, %v3239, %v3240
        %v3242 = vrot.slane %v3240, 4
        %v3243 = vrot.slane %v3210, 6
        %v3244 = vsel %vm862, %v3242, %v3243
        %v3245 = vrot.slane %v3243, 4
        %v3246 = vrot.slane %v3211, 6
        %v3247 = vsel %vm862, %v3245, %v3246
        %v3248 = vrot.slane %v3246, 4
        %v3249 = vrot.slane %v3212, 6
        %v3250 = vsel %vm862, %v3248, %v3249
        %v3251 = vrot.slane %v3249, 4
        %v3252 = vrot.slane %v3213, 6
        %v3253 = vsel %vm862, %v3251, %v3252
        %v3254 = vrot.slane %v3252, 4
        %v3255 = vrot.slane %v3214, 6
        %v3256 = vsel %vm862, %v3254, %v3255
        %v3257 = vrot.slane %v3255, 4
        %v3258 = vrot.slane %v3215, 6
        %v3259 = vsel %vm862, %v3257, %v3258
        %v3260 = vrot.slane %v3258, 4
        %v3261 = vrot.slane %v3216, 6
        %v3262 = vsel %vm862, %v3260, %v3261
        %v3263 = vrot.slane %v3261, 4
        %v3264 = vrot.slane %v3217, 6
        %v3265 = vsel %vm862, %v3263, %v3264
        %v3266 = vrot.slane %v3264, 4
        %v3267 = vrot.slane %v3218, 6
        %v3268 = vsel %vm862, %v3266, %v3267
        %3281 = vst.msk [vmem:[#allocation3 + $0x30] sm:$0xf] %vm258, %v3235
        %3282 = vst.msk [vmem:[#allocation3 + $0x64] sm:$0xf] %vm258, %v3238
        %3283 = vst.msk [vmem:[#allocation3 + $0x98] sm:$0xf] %vm258, %v3241
        %3284 = vst.msk [vmem:[#allocation3 + $0xcc] sm:$0xf] %vm258, %v3244
        %3285 = vst.msk [vmem:[#allocation3 + $0x100] sm:$0xf] %vm258, %v3247
        %3286 = vst.msk [vmem:[#allocation3 + $0x134] sm:$0xf] %vm258, %v3250
        %3287 = vst.msk [vmem:[#allocation3 + $0x168] sm:$0xf] %vm258, %v3253
        %3288 = vst.msk [vmem:[#allocation3 + $0x19c] sm:$0xf] %vm258, %v3256
        %3289 = vst.msk [vmem:[#allocation3 + $0x1d0] sm:$0xf] %vm258, %v3259
        %3290 = vst.msk [vmem:[#allocation3 + $0x204] sm:$0xf] %vm258, %v3262
        %3291 = vst.msk [vmem:[#allocation3 + $0x238] sm:$0xf] %vm258, %v3265
        %3292 = vst.msk [vmem:[#allocation3 + $0x26c] sm:$0xf] %vm258, %v3268
        %v3293 = vld [vmem:[#allocation3] sm:$0xff]
        %v3294 = vld [vmem:[#allocation3 + $0x8] sm:$0xff]
        %v3295 = vld [vmem:[#allocation3 + $0x10] sm:$0xff]
        %v3296 = vld [vmem:[#allocation3 + $0x18] sm:$0xff]
        %v3297 = vld [vmem:[#allocation3 + $0x20] sm:$0xff]
        %v3298 = vld [vmem:[#allocation3 + $0x28] sm:$0xff]
        %v3299 = vld [vmem:[#allocation3 + $0x30] sm:$0xf]
        %v3300 = vld [vmem:[#allocation3 + $0x34] sm:$0xff]
        %v3301 = vld [vmem:[#allocation3 + $0x3c] sm:$0xff]
        %v3302 = vld [vmem:[#allocation3 + $0x44] sm:$0xff]
        %v3303 = vld [vmem:[#allocation3 + $0x4c] sm:$0xff]
        %v3304 = vld [vmem:[#allocation3 + $0x54] sm:$0xff]
        %v3305 = vld [vmem:[#allocation3 + $0x5c] sm:$0xff]
        %v3306 = vld [vmem:[#allocation3 + $0x64] sm:$0xf]
        %v3307 = vld [vmem:[#allocation3 + $0x68] sm:$0xff]
        %v3308 = vld [vmem:[#allocation3 + $0x70] sm:$0xff]
        %v3309 = vld [vmem:[#allocation3 + $0x78] sm:$0xff]
        %v3310 = vld [vmem:[#allocation3 + $0x80] sm:$0xff]
        %v3311 = vld [vmem:[#allocation3 + $0x88] sm:$0xff]
        %v3312 = vld [vmem:[#allocation3 + $0x90] sm:$0xff]
        %v3313 = vld [vmem:[#allocation3 + $0x98] sm:$0xf]
        %v3314 = vld [vmem:[#allocation3 + $0x9c] sm:$0xff]
        %v3315 = vld [vmem:[#allocation3 + $0xa4] sm:$0xff]
        %v3316 = vld [vmem:[#allocation3 + $0xac] sm:$0xff]
        %v3317 = vld [vmem:[#allocation3 + $0xb4] sm:$0xff]
        %v3318 = vld [vmem:[#allocation3 + $0xbc] sm:$0xff]
        %v3319 = vld [vmem:[#allocation3 + $0xc4] sm:$0xff]
        %v3320 = vld [vmem:[#allocation3 + $0xcc] sm:$0xf]
        %v3321 = vld [vmem:[#allocation3 + $0xd0] sm:$0xff]
        %v3322 = vld [vmem:[#allocation3 + $0xd8] sm:$0xff]
        %v3323 = vld [vmem:[#allocation3 + $0xe0] sm:$0xff]
        %v3324 = vld [vmem:[#allocation3 + $0xe8] sm:$0xff]
        %v3325 = vld [vmem:[#allocation3 + $0xf0] sm:$0xff]
        %v3326 = vld [vmem:[#allocation3 + $0xf8] sm:$0xff]
        %v3327 = vld [vmem:[#allocation3 + $0x100] sm:$0xf]
        %v3328 = vld [vmem:[#allocation3 + $0x104] sm:$0xff]
        %v3329 = vld [vmem:[#allocation3 + $0x10c] sm:$0xff]
        %v3330 = vld [vmem:[#allocation3 + $0x114] sm:$0xff]
        %v3331 = vld [vmem:[#allocation3 + $0x11c] sm:$0xff]
        %v3332 = vld [vmem:[#allocation3 + $0x124] sm:$0xff]
        %v3333 = vld [vmem:[#allocation3 + $0x12c] sm:$0xff]
        %v3334 = vld [vmem:[#allocation3 + $0x134] sm:$0xf]
        %v3335 = vld [vmem:[#allocation3 + $0x138] sm:$0xff]
        %v3336 = vld [vmem:[#allocation3 + $0x140] sm:$0xff]
        %v3337 = vld [vmem:[#allocation3 + $0x148] sm:$0xff]
        %v3338 = vld [vmem:[#allocation3 + $0x150] sm:$0xff]
        %v3339 = vld [vmem:[#allocation3 + $0x158] sm:$0xff]
        %v3340 = vld [vmem:[#allocation3 + $0x160] sm:$0xff]
        %v3341 = vld [vmem:[#allocation3 + $0x168] sm:$0xf]
        %v3342 = vld [vmem:[#allocation3 + $0x16c] sm:$0xff]
        %v3343 = vld [vmem:[#allocation3 + $0x174] sm:$0xff]
        %v3344 = vld [vmem:[#allocation3 + $0x17c] sm:$0xff]
        %v3345 = vld [vmem:[#allocation3 + $0x184] sm:$0xff]
        %v3346 = vld [vmem:[#allocation3 + $0x18c] sm:$0xff]
        %v3347 = vld [vmem:[#allocation3 + $0x194] sm:$0xff]
        %v3348 = vld [vmem:[#allocation3 + $0x19c] sm:$0xf]
        %v3349 = vld [vmem:[#allocation3 + $0x1a0] sm:$0xff]
        %v3350 = vld [vmem:[#allocation3 + $0x1a8] sm:$0xff]
        %v3351 = vld [vmem:[#allocation3 + $0x1b0] sm:$0xff]
        %v3352 = vld [vmem:[#allocation3 + $0x1b8] sm:$0xff]
        %v3353 = vld [vmem:[#allocation3 + $0x1c0] sm:$0xff]
        %v3354 = vld [vmem:[#allocation3 + $0x1c8] sm:$0xff]
        %v3355 = vld [vmem:[#allocation3 + $0x1d0] sm:$0xf]
        %v3356 = vld [vmem:[#allocation3 + $0x1d4] sm:$0xff]
        %v3357 = vld [vmem:[#allocation3 + $0x1dc] sm:$0xff]
        %v3358 = vld [vmem:[#allocation3 + $0x1e4] sm:$0xff]
        %v3359 = vld [vmem:[#allocation3 + $0x1ec] sm:$0xff]
        %v3360 = vld [vmem:[#allocation3 + $0x1f4] sm:$0xff]
        %v3361 = vld [vmem:[#allocation3 + $0x1fc] sm:$0xff]
        %v3362 = vld [vmem:[#allocation3 + $0x204] sm:$0xf]
        %v3363 = vld [vmem:[#allocation3 + $0x208] sm:$0xff]
        %v3364 = vld [vmem:[#allocation3 + $0x210] sm:$0xff]
        %v3365 = vld [vmem:[#allocation3 + $0x218] sm:$0xff]
        %v3366 = vld [vmem:[#allocation3 + $0x220] sm:$0xff]
        %v3367 = vld [vmem:[#allocation3 + $0x228] sm:$0xff]
        %v3368 = vld [vmem:[#allocation3 + $0x230] sm:$0xff]
        %v3369 = vld [vmem:[#allocation3 + $0x238] sm:$0xf]
        %v3370 = vld [vmem:[#allocation3 + $0x23c] sm:$0xff]
        %v3371 = vld [vmem:[#allocation3 + $0x244] sm:$0xff]
        %v3372 = vld [vmem:[#allocation3 + $0x24c] sm:$0xff]
        %v3373 = vld [vmem:[#allocation3 + $0x254] sm:$0xff]
        %v3374 = vld [vmem:[#allocation3 + $0x25c] sm:$0xff]
        %v3375 = vld [vmem:[#allocation3 + $0x264] sm:$0xff]
        %v3376 = vld [vmem:[#allocation3 + $0x26c] sm:$0xf]
        %v3377 = vld [vmem:[%s1] sm:$0xf]
        %v3378 = vld [vmem:[%s1 + $0x4] sm:$0xf]
        %v3379 = vld [vmem:[%s1 + $0x8] sm:$0xf]
        %v3380 = vld [vmem:[%s1 + $0xc] sm:$0xf]
        %v3381 = vld [vmem:[%s1 + $0x10] sm:$0xf]
        %v3382 = vld [vmem:[%s1 + $0x14] sm:$0xf]
        %v3383 = vld [vmem:[%s1 + $0x18] sm:$0xf]
        %v3384 = vld [vmem:[%s1 + $0x1c] sm:$0xf]
        %v3385 = vld [vmem:[%s1 + $0x20] sm:$0xf]
        %v3386 = vld [vmem:[%s1 + $0x24] sm:$0xf]
        %v3387 = vld [vmem:[%s1 + $0x28] sm:$0xf]
        %v3388 = vld [vmem:[%s1 + $0x2c] sm:$0xf]
        %v3389 = vld [vmem:[%s1 + $0x30] sm:$0xf]
        %v3390 = vld [vmem:[%s1 + $0x34] sm:$0xf]
        %v3391 = vld [vmem:[%s1 + $0x38] sm:$0xf]
        %v3392 = vld [vmem:[%s1 + $0x3c] sm:$0xf]
        %v3393 = vld [vmem:[%s1 + $0x40] sm:$0xf]
        %v3394 = vld [vmem:[%s1 + $0x44] sm:$0xf]
        %v3395 = vld [vmem:[%s1 + $0x48] sm:$0xf]
        %v3396 = vld [vmem:[%s1 + $0x4c] sm:$0xf]
        %v3397 = vld [vmem:[%s1 + $0x50] sm:$0xf]
        %v3398 = vld [vmem:[%s1 + $0x54] sm:$0xf]
        %v3399 = vld [vmem:[%s1 + $0x58] sm:$0xf]
        %v3400 = vld [vmem:[%s1 + $0x5c] sm:$0xf]
        %v3401 = vld [vmem:[%s1 + $0x60] sm:$0xf]
        %v3402 = vld [vmem:[%s1 + $0x64] sm:$0xf]
        %v3403 = vld [vmem:[%s1 + $0x68] sm:$0xf]
        %v3404 = vld [vmem:[%s1 + $0x6c] sm:$0xf]
        %v3405 = vld [vmem:[%s1 + $0x70] sm:$0xf]
        %v3406 = vld [vmem:[%s1 + $0x74] sm:$0xf]
        %v3407 = vld [vmem:[%s1 + $0x78] sm:$0xf]
        %v3408 = vld [vmem:[%s1 + $0x7c] sm:$0xf]
        %v3409 = vld [vmem:[%s1 + $0x80] sm:$0xf]
        %v3410 = vld [vmem:[%s1 + $0x84] sm:$0xf]
        %v3411 = vld [vmem:[%s1 + $0x88] sm:$0xf]
        %v3412 = vld [vmem:[%s1 + $0x8c] sm:$0xf]
        %v3413 = vld [vmem:[%s1 + $0x90] sm:$0xf]
        %v3414 = vld [vmem:[%s1 + $0x94] sm:$0xf]
        %v3415 = vld [vmem:[%s1 + $0x98] sm:$0xf]
        %v3416 = vld [vmem:[%s1 + $0x9c] sm:$0xf]
        %v3417 = vld [vmem:[%s1 + $0xa0] sm:$0xf]
        %v3418 = vld [vmem:[%s1 + $0xa4] sm:$0xf]
        %v3419 = vld [vmem:[%s1 + $0xa8] sm:$0xf]
        %v3420 = vld [vmem:[%s1 + $0xac] sm:$0xf]
        %v3421 = vld [vmem:[%s1 + $0xb0] sm:$0xf]
        %v3422 = vld [vmem:[%s1 + $0xb4] sm:$0xf]
        %v3423 = vld [vmem:[%s1 + $0xb8] sm:$0xf]
        %v3424 = vld [vmem:[%s1 + $0xbc] sm:$0xf]
        %v3425 = vld [vmem:[%s1 + $0xc0] sm:$0xf]
        %v3426 = vld [vmem:[%s1 + $0xc4] sm:$0xf]
        %v3427 = vld [vmem:[%s1 + $0xc8] sm:$0xf]
        %v3428 = vld [vmem:[%s1 + $0xcc] sm:$0xf]
        %v3429 = vld [vmem:[%s1 + $0xd0] sm:$0xf]
        %v3430 = vld [vmem:[%s1 + $0xd4] sm:$0xf]
        %v3431 = vld [vmem:[%s1 + $0xd8] sm:$0xf]
        %v3432 = vld [vmem:[%s1 + $0xdc] sm:$0xf]
        %v3433 = vld [vmem:[%s1 + $0xe0] sm:$0xf]
        %v3434 = vld [vmem:[%s1 + $0xe4] sm:$0xf]
        %v3435 = vld [vmem:[%s1 + $0xe8] sm:$0xf]
        %v3436 = vld [vmem:[%s1 + $0xec] sm:$0xf]
        %v3437 = vld [vmem:[%s1 + $0xf0] sm:$0xf]
        %v3438 = vld [vmem:[%s1 + $0xf4] sm:$0xf]
        %v3439 = vld [vmem:[%s1 + $0xf8] sm:$0xf]
        %v3440 = vld [vmem:[%s1 + $0xfc] sm:$0xf]
        %v3441 = vld [vmem:[%s1 + $0x100] sm:$0xf]
        %v3442 = vld [vmem:[%s1 + $0x104] sm:$0xf]
        %v3443 = vld [vmem:[%s1 + $0x108] sm:$0xf]
        %v3444 = vld [vmem:[%s1 + $0x10c] sm:$0xf]
        %v3445 = vld [vmem:[%s1 + $0x110] sm:$0xf]
        %v3446 = vld [vmem:[%s1 + $0x114] sm:$0xf]
        %v3447 = vld [vmem:[%s1 + $0x118] sm:$0xf]
        %v3448 = vld [vmem:[%s1 + $0x11c] sm:$0xf]
        %v3449 = vld [vmem:[%s1 + $0x120] sm:$0xf]
        %v3450 = vld [vmem:[%s1 + $0x124] sm:$0xf]
        %v3451 = vld [vmem:[%s1 + $0x128] sm:$0xf]
        %v3452 = vld [vmem:[%s1 + $0x12c] sm:$0xf]
        %v3453 = vld [vmem:[%s1 + $0x130] sm:$0xf]
        %v3454 = vld [vmem:[%s1 + $0x134] sm:$0xf]
        %v3455 = vld [vmem:[%s1 + $0x138] sm:$0xf]
        %v3456 = vld [vmem:[%s1 + $0x13c] sm:$0xf]
        %v3457 = vld [vmem:[%s1 + $0x140] sm:$0xf]
        %v3458 = vld [vmem:[%s1 + $0x144] sm:$0xf]
        %v3459 = vld [vmem:[%s1 + $0x148] sm:$0xf]
        %v3460 = vld [vmem:[%s1 + $0x14c] sm:$0xf]
        %v3461 = vld [vmem:[%s1 + $0x150] sm:$0xf]
        %v3462 = vld [vmem:[%s1 + $0x154] sm:$0xf]
        %v3463 = vld [vmem:[%s1 + $0x158] sm:$0xf]
        %v3464 = vld [vmem:[%s1 + $0x15c] sm:$0xf]
        %v3465 = vld [vmem:[%s1 + $0x160] sm:$0xf]
        %v3466 = vld [vmem:[%s1 + $0x164] sm:$0xf]
        %v3467 = vld [vmem:[%s1 + $0x168] sm:$0xf]
        %v3468 = vld [vmem:[%s1 + $0x16c] sm:$0xf]
        %v3469 = vld [vmem:[%s1 + $0x170] sm:$0xf]
        %v3470 = vld [vmem:[%s1 + $0x174] sm:$0xf]
        %v3471 = vld [vmem:[%s1 + $0x178] sm:$0xf]
        %v3472 = vld [vmem:[%s1 + $0x17c] sm:$0xf]
        %v3473 = vld [vmem:[%s1 + $0x180] sm:$0xf]
        %v3474 = vld [vmem:[%s1 + $0x184] sm:$0xf]
        %v3475 = vld [vmem:[%s1 + $0x188] sm:$0xf]
        %v3476 = vld [vmem:[%s1 + $0x18c] sm:$0xf]
        %v3477 = vld [vmem:[%s1 + $0x190] sm:$0xf]
        %v3478 = vld [vmem:[%s1 + $0x194] sm:$0xf]
        %v3479 = vld [vmem:[%s1 + $0x198] sm:$0xf]
        %v3480 = vld [vmem:[%s1 + $0x19c] sm:$0xf]
        %v3481 = vld [vmem:[%s1 + $0x1a0] sm:$0xf]
        %v3482 = vld [vmem:[%s1 + $0x1a4] sm:$0xf]
        %v3483 = vld [vmem:[%s1 + $0x1a8] sm:$0xf]
        %v3484 = vld [vmem:[%s1 + $0x1ac] sm:$0xf]
        %v3485 = vld [vmem:[%s1 + $0x1b0] sm:$0xf]
        %v3486 = vld [vmem:[%s1 + $0x1b4] sm:$0xf]
        %v3487 = vld [vmem:[%s1 + $0x1b8] sm:$0xf]
        %v3488 = vld [vmem:[%s1 + $0x1bc] sm:$0xf]
        %v3489 = vld [vmem:[%s1 + $0x1c0] sm:$0xf]
        %v3490 = vld [vmem:[%s1 + $0x1c4] sm:$0xf]
        %v3491 = vld [vmem:[%s1 + $0x1c8] sm:$0xf]
        %v3492 = vld [vmem:[%s1 + $0x1cc] sm:$0xf]
        %v3493 = vld [vmem:[%s1 + $0x1d0] sm:$0xf]
        %v3494 = vld [vmem:[%s1 + $0x1d4] sm:$0xf]
        %v3495 = vld [vmem:[%s1 + $0x1d8] sm:$0xf]
        %v3496 = vld [vmem:[%s1 + $0x1dc] sm:$0xf]
        %v3497 = vld [vmem:[%s1 + $0x1e0] sm:$0xf]
        %v3498 = vld [vmem:[%s1 + $0x1e4] sm:$0xf]
        %v3499 = vld [vmem:[%s1 + $0x1e8] sm:$0xf]
        %v3500 = vld [vmem:[%s1 + $0x1ec] sm:$0xf]
        %v3501 = vld [vmem:[%s1 + $0x1f0] sm:$0xf]
        %v3502 = vld [vmem:[%s1 + $0x1f4] sm:$0xf]
        %v3503 = vld [vmem:[%s1 + $0x1f8] sm:$0xf]
        %v3504 = vld [vmem:[%s1 + $0x1fc] sm:$0xf]
        %v3505 = vld [vmem:[%s1 + $0x200] sm:$0xf]
        %v3506 = vld [vmem:[%s1 + $0x204] sm:$0xf]
        %v3507 = vld [vmem:[%s1 + $0x208] sm:$0xf]
        %v3508 = vld [vmem:[%s1 + $0x20c] sm:$0xf]
        %v3509 = vld [vmem:[%s1 + $0x210] sm:$0xf]
        %v3510 = vld [vmem:[%s1 + $0x214] sm:$0xf]
        %v3511 = vld [vmem:[%s1 + $0x218] sm:$0xf]
        %v3512 = vld [vmem:[%s1 + $0x21c] sm:$0xf]
        %v3513 = vld [vmem:[%s1 + $0x220] sm:$0xf]
        %v3514 = vld [vmem:[%s1 + $0x224] sm:$0xf]
        %v3515 = vld [vmem:[%s1 + $0x228] sm:$0xf]
        %v3516 = vld [vmem:[%s1 + $0x22c] sm:$0xf]
        %v3517 = vld [vmem:[%s1 + $0x230] sm:$0xf]
        %v3518 = vld [vmem:[%s1 + $0x234] sm:$0xf]
        %v3519 = vld [vmem:[%s1 + $0x238] sm:$0xf]
        %v3520 = vld [vmem:[%s1 + $0x23c] sm:$0xf]
        %v3521 = vld [vmem:[%s1 + $0x240] sm:$0xf]
        %v3522 = vld [vmem:[%s1 + $0x244] sm:$0xf]
        %v3523 = vld [vmem:[%s1 + $0x248] sm:$0xf]
        %v3524 = vld [vmem:[%s1 + $0x24c] sm:$0xf]
        %v3525 = vld [vmem:[%s1 + $0x250] sm:$0xf]
        %v3526 = vld [vmem:[%s1 + $0x254] sm:$0xf]
        %v3527 = vld [vmem:[%s1 + $0x258] sm:$0xf]
        %v3528 = vld [vmem:[%s1 + $0x25c] sm:$0xf]
        %v3529 = vld [vmem:[%s1 + $0x260] sm:$0xf]
        %v3530 = vld [vmem:[%s1 + $0x264] sm:$0xf]
        %v3531 = vld [vmem:[%s1 + $0x268] sm:$0xf]
        %v3532 = vld [vmem:[%s1 + $0x26c] sm:$0xf]
        %v3533 = vld [vmem:[%s1 + $0x270] sm:$0xf]
        %v3534 = vld [vmem:[%s1 + $0x274] sm:$0xf]
        %v3535 = vld [vmem:[%s1 + $0x278] sm:$0xf]
        %v3536 = vld [vmem:[%s1 + $0x27c] sm:$0xf]
        %v3537 = vld [vmem:[%s1 + $0x280] sm:$0xf]
        %v3538 = vld [vmem:[%s1 + $0x284] sm:$0xf]
        %v3539 = vld [vmem:[%s1 + $0x288] sm:$0xf]
        %v3540 = vld [vmem:[%s1 + $0x28c] sm:$0xf]
        %v3541 = vld [vmem:[%s1 + $0x290] sm:$0xf]
        %v3542 = vld [vmem:[%s1 + $0x294] sm:$0xf]
        %v3543 = vld [vmem:[%s1 + $0x298] sm:$0xf]
        %v3544 = vld [vmem:[%s1 + $0x29c] sm:$0xf]
        %v3545 = vld [vmem:[%s1 + $0x2a0] sm:$0xf]
        %v3546 = vld [vmem:[%s1 + $0x2a4] sm:$0xf]
        %v3547 = vld [vmem:[%s1 + $0x2a8] sm:$0xf]
        %v3548 = vld [vmem:[%s1 + $0x2ac] sm:$0xf]
        %v3549 = vld [vmem:[%s1 + $0x2b0] sm:$0xf]
        %v3550 = vld [vmem:[%s1 + $0x2b4] sm:$0xf]
        %v3551 = vld [vmem:[%s1 + $0x2b8] sm:$0xf]
        %v3552 = vld [vmem:[%s1 + $0x2bc] sm:$0xf]
        %v3553 = vld [vmem:[%s1 + $0x2c0] sm:$0xf]
        %v3554 = vld [vmem:[%s1 + $0x2c4] sm:$0xf]
        %v3555 = vld [vmem:[%s1 + $0x2c8] sm:$0xf]
        %v3556 = vld [vmem:[%s1 + $0x2cc] sm:$0xf]
        %v3557 = vld [vmem:[%s1 + $0x2d0] sm:$0xf]
        %v3558 = vld [vmem:[%s1 + $0x2d4] sm:$0xf]
        %v3559 = vld [vmem:[%s1 + $0x2d8] sm:$0xf]
        %v3560 = vld [vmem:[%s1 + $0x2dc] sm:$0xf]
        %v3561 = vld [vmem:[%s1 + $0x2e0] sm:$0xf]
        %v3562 = vld [vmem:[%s1 + $0x2e4] sm:$0xf]
        %v3563 = vld [vmem:[%s1 + $0x2e8] sm:$0xf]
        %v3564 = vld [vmem:[%s1 + $0x2ec] sm:$0xf]
        %v3565 = vld [vmem:[%s1 + $0x2f0] sm:$0xf]
        %v3566 = vld [vmem:[%s1 + $0x2f4] sm:$0xf]
        %v3567 = vld [vmem:[%s1 + $0x2f8] sm:$0xf]
        %v3568 = vld [vmem:[%s1 + $0x2fc] sm:$0xf]
        %v3569 = vld [vmem:[%s1 + $0x300] sm:$0xf]
        %v3570 = vld [vmem:[%s1 + $0x304] sm:$0xf]
        %v3571 = vld [vmem:[%s1 + $0x308] sm:$0xf]
        %v3572 = vld [vmem:[%s1 + $0x30c] sm:$0xf]
        %v3573 = vld [vmem:[%s1 + $0x310] sm:$0xf]
        %v3574 = vld [vmem:[%s1 + $0x314] sm:$0xf]
        %v3575 = vld [vmem:[%s1 + $0x318] sm:$0xf]
        %v3576 = vld [vmem:[%s1 + $0x31c] sm:$0xf]
        %v3661 = vunpack.c.l.b16 %v3293
        %v3662 = vunpack.c.h.b16 %v3293
        %v3663 = vunpack.c.l.b16 %v3294
        %v3664 = vunpack.c.h.b16 %v3294
        %v3665 = vunpack.c.l.b16 %v3295
        %v3666 = vunpack.c.h.b16 %v3295
        %v3667 = vunpack.c.l.b16 %v3296
        %v3668 = vunpack.c.h.b16 %v3296
        %v3669 = vunpack.c.l.b16 %v3297
        %v3670 = vunpack.c.h.b16 %v3297
        %v3671 = vunpack.c.l.b16 %v3298
        %v3672 = vunpack.c.h.b16 %v3298
        %v3673 = vunpack.c.l.b16 %v3299
        %v3674 = vunpack.c.l.b16 %v3300
        %v3675 = vunpack.c.h.b16 %v3300
        %v3676 = vunpack.c.l.b16 %v3301
        %v3677 = vunpack.c.h.b16 %v3301
        %v3678 = vunpack.c.l.b16 %v3302
        %v3679 = vunpack.c.h.b16 %v3302
        %v3680 = vunpack.c.l.b16 %v3303
        %v3681 = vunpack.c.h.b16 %v3303
        %v3682 = vunpack.c.l.b16 %v3304
        %v3683 = vunpack.c.h.b16 %v3304
        %v3684 = vunpack.c.l.b16 %v3305
        %v3685 = vunpack.c.h.b16 %v3305
        %v3686 = vunpack.c.l.b16 %v3306
        %v3687 = vunpack.c.l.b16 %v3307
        %v3688 = vunpack.c.h.b16 %v3307
        %v3689 = vunpack.c.l.b16 %v3308
        %v3690 = vunpack.c.h.b16 %v3308
        %v3691 = vunpack.c.l.b16 %v3309
        %v3692 = vunpack.c.h.b16 %v3309
        %v3693 = vunpack.c.l.b16 %v3310
        %v3694 = vunpack.c.h.b16 %v3310
        %v3695 = vunpack.c.l.b16 %v3311
        %v3696 = vunpack.c.h.b16 %v3311
        %v3697 = vunpack.c.l.b16 %v3312
        %v3698 = vunpack.c.h.b16 %v3312
        %v3699 = vunpack.c.l.b16 %v3313
        %v3700 = vunpack.c.l.b16 %v3314
        %v3701 = vunpack.c.h.b16 %v3314
        %v3702 = vunpack.c.l.b16 %v3315
        %v3703 = vunpack.c.h.b16 %v3315
        %v3704 = vunpack.c.l.b16 %v3316
        %v3705 = vunpack.c.h.b16 %v3316
        %v3706 = vunpack.c.l.b16 %v3317
        %v3707 = vunpack.c.h.b16 %v3317
        %v3708 = vunpack.c.l.b16 %v3318
        %v3709 = vunpack.c.h.b16 %v3318
        %v3710 = vunpack.c.l.b16 %v3319
        %v3711 = vunpack.c.h.b16 %v3319
        %v3712 = vunpack.c.l.b16 %v3320
        %v3713 = vunpack.c.l.b16 %v3321
        %v3714 = vunpack.c.h.b16 %v3321
        %v3715 = vunpack.c.l.b16 %v3322
        %v3716 = vunpack.c.h.b16 %v3322
        %v3717 = vunpack.c.l.b16 %v3323
        %v3718 = vunpack.c.h.b16 %v3323
        %v3719 = vunpack.c.l.b16 %v3324
        %v3720 = vunpack.c.h.b16 %v3324
        %v3721 = vunpack.c.l.b16 %v3325
        %v3722 = vunpack.c.h.b16 %v3325
        %v3723 = vunpack.c.l.b16 %v3326
        %v3724 = vunpack.c.h.b16 %v3326
        %v3725 = vunpack.c.l.b16 %v3327
        %v3726 = vunpack.c.l.b16 %v3328
        %v3727 = vunpack.c.h.b16 %v3328
        %v3728 = vunpack.c.l.b16 %v3329
        %v3729 = vunpack.c.h.b16 %v3329
        %v3730 = vunpack.c.l.b16 %v3330
        %v3731 = vunpack.c.h.b16 %v3330
        %v3732 = vunpack.c.l.b16 %v3331
        %v3733 = vunpack.c.h.b16 %v3331
        %v3734 = vunpack.c.l.b16 %v3332
        %v3735 = vunpack.c.h.b16 %v3332
        %v3736 = vunpack.c.l.b16 %v3333
        %v3737 = vunpack.c.h.b16 %v3333
        %v3738 = vunpack.c.l.b16 %v3334
        %v3739 = vunpack.c.l.b16 %v3335
        %v3740 = vunpack.c.h.b16 %v3335
        %v3741 = vunpack.c.l.b16 %v3336
        %v3742 = vunpack.c.h.b16 %v3336
        %v3743 = vunpack.c.l.b16 %v3337
        %v3744 = vunpack.c.h.b16 %v3337
        %v3745 = vunpack.c.l.b16 %v3338
        %v3746 = vunpack.c.h.b16 %v3338
        %v3747 = vunpack.c.l.b16 %v3339
        %v3748 = vunpack.c.h.b16 %v3339
        %v3749 = vunpack.c.l.b16 %v3340
        %v3750 = vunpack.c.h.b16 %v3340
        %v3751 = vunpack.c.l.b16 %v3341
        %v3752 = vunpack.c.l.b16 %v3342
        %v3753 = vunpack.c.h.b16 %v3342
        %v3754 = vunpack.c.l.b16 %v3343
        %v3755 = vunpack.c.h.b16 %v3343
        %v3756 = vunpack.c.l.b16 %v3344
        %v3757 = vunpack.c.h.b16 %v3344
        %v3758 = vunpack.c.l.b16 %v3345
        %v3759 = vunpack.c.h.b16 %v3345
        %v3760 = vunpack.c.l.b16 %v3346
        %v3761 = vunpack.c.h.b16 %v3346
        %v3762 = vunpack.c.l.b16 %v3347
        %v3763 = vunpack.c.h.b16 %v3347
        %v3764 = vunpack.c.l.b16 %v3348
        %v3765 = vunpack.c.l.b16 %v3349
        %v3766 = vunpack.c.h.b16 %v3349
        %v3767 = vunpack.c.l.b16 %v3350
        %v3768 = vunpack.c.h.b16 %v3350
        %v3769 = vunpack.c.l.b16 %v3351
        %v3770 = vunpack.c.h.b16 %v3351
        %v3771 = vunpack.c.l.b16 %v3352
        %v3772 = vunpack.c.h.b16 %v3352
        %v3773 = vunpack.c.l.b16 %v3353
        %v3774 = vunpack.c.h.b16 %v3353
        %v3775 = vunpack.c.l.b16 %v3354
        %v3776 = vunpack.c.h.b16 %v3354
        %v3777 = vunpack.c.l.b16 %v3355
        %v3778 = vunpack.c.l.b16 %v3356
        %v3779 = vunpack.c.h.b16 %v3356
        %v3780 = vunpack.c.l.b16 %v3357
        %v3781 = vunpack.c.h.b16 %v3357
        %v3782 = vunpack.c.l.b16 %v3358
        %v3783 = vunpack.c.h.b16 %v3358
        %v3784 = vunpack.c.l.b16 %v3359
        %v3785 = vunpack.c.h.b16 %v3359
        %v3786 = vunpack.c.l.b16 %v3360
        %v3787 = vunpack.c.h.b16 %v3360
        %v3788 = vunpack.c.l.b16 %v3361
        %v3789 = vunpack.c.h.b16 %v3361
        %v3790 = vunpack.c.l.b16 %v3362
        %v3791 = vunpack.c.l.b16 %v3363
        %v3792 = vunpack.c.h.b16 %v3363
        %v3793 = vunpack.c.l.b16 %v3364
        %v3794 = vunpack.c.h.b16 %v3364
        %v3795 = vunpack.c.l.b16 %v3365
        %v3796 = vunpack.c.h.b16 %v3365
        %v3797 = vunpack.c.l.b16 %v3366
        %v3798 = vunpack.c.h.b16 %v3366
        %v3799 = vunpack.c.l.b16 %v3367
        %v3800 = vunpack.c.h.b16 %v3367
        %v3801 = vunpack.c.l.b16 %v3368
        %v3802 = vunpack.c.h.b16 %v3368
        %v3803 = vunpack.c.l.b16 %v3369
        %v3804 = vunpack.c.l.b16 %v3370
        %v3805 = vunpack.c.h.b16 %v3370
        %v3806 = vunpack.c.l.b16 %v3371
        %v3807 = vunpack.c.h.b16 %v3371
        %v3808 = vunpack.c.l.b16 %v3372
        %v3809 = vunpack.c.h.b16 %v3372
        %v3810 = vunpack.c.l.b16 %v3373
        %v3811 = vunpack.c.h.b16 %v3373
        %v3812 = vunpack.c.l.b16 %v3374
        %v3813 = vunpack.c.h.b16 %v3374
        %v3814 = vunpack.c.l.b16 %v3375
        %v3815 = vunpack.c.h.b16 %v3375
        %v3816 = vunpack.c.l.b16 %v3376
        %v3817 = vpack.c.b16 %v3674, %v3661
        %v3818 = vpack.c.b16 %v3675, %v3662
        %v3819 = vpack.c.b16 %v3676, %v3663
        %v3820 = vpack.c.b16 %v3677, %v3664
        %v3821 = vpack.c.b16 %v3678, %v3665
        %v3822 = vpack.c.b16 %v3679, %v3666
        %v3823 = vpack.c.b16 %v3680, %v3667
        %v3824 = vpack.c.b16 %v3681, %v3668
        %v3825 = vpack.c.b16 %v3682, %v3669
        %v3826 = vpack.c.b16 %v3683, %v3670
        %v3827 = vpack.c.b16 %v3684, %v3671
        %v3828 = vpack.c.b16 %v3685, %v3672
        %v3829 = vpack.c.b16 %v3686, %v3673
        %v3830 = vpack.c.b16 %v3700, %v3687
        %v3831 = vpack.c.b16 %v3701, %v3688
        %v3832 = vpack.c.b16 %v3702, %v3689
        %v3833 = vpack.c.b16 %v3703, %v3690
        %v3834 = vpack.c.b16 %v3704, %v3691
        %v3835 = vpack.c.b16 %v3705, %v3692
        %v3836 = vpack.c.b16 %v3706, %v3693
        %v3837 = vpack.c.b16 %v3707, %v3694
        %v3838 = vpack.c.b16 %v3708, %v3695
        %v3839 = vpack.c.b16 %v3709, %v3696
        %v3840 = vpack.c.b16 %v3710, %v3697
        %v3841 = vpack.c.b16 %v3711, %v3698
        %v3842 = vpack.c.b16 %v3712, %v3699
        %v3843 = vpack.c.b16 %v3726, %v3713
        %v3844 = vpack.c.b16 %v3727, %v3714
        %v3845 = vpack.c.b16 %v3728, %v3715
        %v3846 = vpack.c.b16 %v3729, %v3716
        %v3847 = vpack.c.b16 %v3730, %v3717
        %v3848 = vpack.c.b16 %v3731, %v3718
        %v3849 = vpack.c.b16 %v3732, %v3719
        %v3850 = vpack.c.b16 %v3733, %v3720
        %v3851 = vpack.c.b16 %v3734, %v3721
        %v3852 = vpack.c.b16 %v3735, %v3722
        %v3853 = vpack.c.b16 %v3736, %v3723
        %v3854 = vpack.c.b16 %v3737, %v3724
        %v3855 = vpack.c.b16 %v3738, %v3725
        %v3856 = vpack.c.b16 %v3752, %v3739
        %v3857 = vpack.c.b16 %v3753, %v3740
        %v3858 = vpack.c.b16 %v3754, %v3741
        %v3859 = vpack.c.b16 %v3755, %v3742
        %v3860 = vpack.c.b16 %v3756, %v3743
        %v3861 = vpack.c.b16 %v3757, %v3744
        %v3862 = vpack.c.b16 %v3758, %v3745
        %v3863 = vpack.c.b16 %v3759, %v3746
        %v3864 = vpack.c.b16 %v3760, %v3747
        %v3865 = vpack.c.b16 %v3761, %v3748
        %v3866 = vpack.c.b16 %v3762, %v3749
        %v3867 = vpack.c.b16 %v3763, %v3750
        %v3868 = vpack.c.b16 %v3764, %v3751
        %v3869 = vpack.c.b16 %v3778, %v3765
        %v3870 = vpack.c.b16 %v3779, %v3766
        %v3871 = vpack.c.b16 %v3780, %v3767
        %v3872 = vpack.c.b16 %v3781, %v3768
        %v3873 = vpack.c.b16 %v3782, %v3769
        %v3874 = vpack.c.b16 %v3783, %v3770
        %v3875 = vpack.c.b16 %v3784, %v3771
        %v3876 = vpack.c.b16 %v3785, %v3772
        %v3877 = vpack.c.b16 %v3786, %v3773
        %v3878 = vpack.c.b16 %v3787, %v3774
        %v3879 = vpack.c.b16 %v3788, %v3775
        %v3880 = vpack.c.b16 %v3789, %v3776
        %v3881 = vpack.c.b16 %v3790, %v3777
        %v3882 = vpack.c.b16 %v3804, %v3791
        %v3883 = vpack.c.b16 %v3805, %v3792
        %v3884 = vpack.c.b16 %v3806, %v3793
        %v3885 = vpack.c.b16 %v3807, %v3794
        %v3886 = vpack.c.b16 %v3808, %v3795
        %v3887 = vpack.c.b16 %v3809, %v3796
        %v3888 = vpack.c.b16 %v3810, %v3797
        %v3889 = vpack.c.b16 %v3811, %v3798
        %v3890 = vpack.c.b16 %v3812, %v3799
        %v3891 = vpack.c.b16 %v3813, %v3800
        %v3892 = vpack.c.b16 %v3814, %v3801
        %v3893 = vpack.c.b16 %v3815, %v3802
        %v3894 = vpack.c.b16 %v3816, %v3803
        %v4167 = vunpack.c.l.b16 %v3377
        %v4168 = vunpack.c.l.b16 %v3378
        %v4169 = vunpack.c.l.b16 %v3379
        %v4170 = vunpack.c.l.b16 %v3380
        %v4171 = vunpack.c.l.b16 %v3381
        %v4172 = vunpack.c.l.b16 %v3382
        %v4173 = vunpack.c.l.b16 %v3383
        %v4174 = vunpack.c.l.b16 %v3384
        %v4175 = vunpack.c.l.b16 %v3385
        %v4176 = vunpack.c.l.b16 %v3386
        %v4177 = vunpack.c.l.b16 %v3387
        %v4178 = vunpack.c.l.b16 %v3388
        %v4179 = vunpack.c.l.b16 %v3389
        %v4180 = vunpack.c.l.b16 %v3390
        %v4181 = vunpack.c.l.b16 %v3391
        %v4182 = vunpack.c.l.b16 %v3392
        %v4183 = vunpack.c.l.b16 %v3393
        %v4184 = vunpack.c.l.b16 %v3394
        %v4185 = vunpack.c.l.b16 %v3395
        %v4186 = vunpack.c.l.b16 %v3396
        %v4187 = vunpack.c.l.b16 %v3397
        %v4188 = vunpack.c.l.b16 %v3398
        %v4189 = vunpack.c.l.b16 %v3399
        %v4190 = vunpack.c.l.b16 %v3400
        %v4191 = vunpack.c.l.b16 %v3401
        %v4192 = vunpack.c.l.b16 %v3402
        %v4193 = vunpack.c.l.b16 %v3403
        %v4194 = vunpack.c.l.b16 %v3404
        %v4195 = vunpack.c.l.b16 %v3405
        %v4196 = vunpack.c.l.b16 %v3406
        %v4197 = vunpack.c.l.b16 %v3407
        %v4198 = vunpack.c.l.b16 %v3408
        %v4199 = vunpack.c.l.b16 %v3409
        %v4200 = vunpack.c.l.b16 %v3410
        %v4201 = vunpack.c.l.b16 %v3411
        %v4202 = vunpack.c.l.b16 %v3412
        %v4203 = vunpack.c.l.b16 %v3413
        %v4204 = vunpack.c.l.b16 %v3414
        %v4205 = vunpack.c.l.b16 %v3415
        %v4206 = vunpack.c.l.b16 %v3416
        %v4207 = vunpack.c.l.b16 %v3417
        %v4208 = vunpack.c.l.b16 %v3418
        %v4209 = vunpack.c.l.b16 %v3419
        %v4210 = vunpack.c.l.b16 %v3420
        %v4211 = vunpack.c.l.b16 %v3421
        %v4212 = vunpack.c.l.b16 %v3422
        %v4213 = vunpack.c.l.b16 %v3423
        %v4214 = vunpack.c.l.b16 %v3424
        %v4215 = vunpack.c.l.b16 %v3425
        %v4216 = vunpack.c.l.b16 %v3426
        %v4217 = vunpack.c.l.b16 %v3427
        %v4218 = vunpack.c.l.b16 %v3428
        %v4219 = vunpack.c.l.b16 %v3429
        %v4220 = vunpack.c.l.b16 %v3430
        %v4221 = vunpack.c.l.b16 %v3431
        %v4222 = vunpack.c.l.b16 %v3432
        %v4223 = vunpack.c.l.b16 %v3433
        %v4224 = vunpack.c.l.b16 %v3434
        %v4225 = vunpack.c.l.b16 %v3435
        %v4226 = vunpack.c.l.b16 %v3436
        %v4227 = vunpack.c.l.b16 %v3437
        %v4228 = vunpack.c.l.b16 %v3438
        %v4229 = vunpack.c.l.b16 %v3439
        %v4230 = vunpack.c.l.b16 %v3440
        %v4231 = vunpack.c.l.b16 %v3441
        %v4232 = vunpack.c.l.b16 %v3442
        %v4233 = vunpack.c.l.b16 %v3443
        %v4234 = vunpack.c.l.b16 %v3444
        %v4235 = vunpack.c.l.b16 %v3445
        %v4236 = vunpack.c.l.b16 %v3446
        %v4237 = vunpack.c.l.b16 %v3447
        %v4238 = vunpack.c.l.b16 %v3448
        %v4239 = vunpack.c.l.b16 %v3449
        %v4240 = vunpack.c.l.b16 %v3450
        %v4241 = vunpack.c.l.b16 %v3451
        %v4242 = vunpack.c.l.b16 %v3452
        %v4243 = vunpack.c.l.b16 %v3453
        %v4244 = vunpack.c.l.b16 %v3454
        %v4245 = vunpack.c.l.b16 %v3455
        %v4246 = vunpack.c.l.b16 %v3456
        %v4247 = vunpack.c.l.b16 %v3457
        %v4248 = vunpack.c.l.b16 %v3458
        %v4249 = vunpack.c.l.b16 %v3459
        %v4250 = vunpack.c.l.b16 %v3460
        %v4251 = vunpack.c.l.b16 %v3461
        %v4252 = vunpack.c.l.b16 %v3462
        %v4253 = vunpack.c.l.b16 %v3463
        %v4254 = vunpack.c.l.b16 %v3464
        %v4255 = vunpack.c.l.b16 %v3465
        %v4256 = vunpack.c.l.b16 %v3466
        %v4257 = vunpack.c.l.b16 %v3467
        %v4258 = vunpack.c.l.b16 %v3468
        %v4259 = vunpack.c.l.b16 %v3469
        %v4260 = vunpack.c.l.b16 %v3470
        %v4261 = vunpack.c.l.b16 %v3471
        %v4262 = vunpack.c.l.b16 %v3472
        %v4263 = vunpack.c.l.b16 %v3473
        %v4264 = vunpack.c.l.b16 %v3474
        %v4265 = vunpack.c.l.b16 %v3475
        %v4266 = vunpack.c.l.b16 %v3476
        %v4267 = vunpack.c.l.b16 %v3477
        %v4268 = vunpack.c.l.b16 %v3478
        %v4269 = vunpack.c.l.b16 %v3479
        %v4270 = vunpack.c.l.b16 %v3480
        %v4271 = vunpack.c.l.b16 %v3481
        %v4272 = vunpack.c.l.b16 %v3482
        %v4273 = vunpack.c.l.b16 %v3483
        %v4274 = vunpack.c.l.b16 %v3484
        %v4275 = vunpack.c.l.b16 %v3485
        %v4276 = vunpack.c.l.b16 %v3486
        %v4277 = vunpack.c.l.b16 %v3487
        %v4278 = vunpack.c.l.b16 %v3488
        %v4279 = vunpack.c.l.b16 %v3489
        %v4280 = vunpack.c.l.b16 %v3490
        %v4281 = vunpack.c.l.b16 %v3491
        %v4282 = vunpack.c.l.b16 %v3492
        %v4283 = vunpack.c.l.b16 %v3493
        %v4284 = vunpack.c.l.b16 %v3494
        %v4285 = vunpack.c.l.b16 %v3495
        %v4286 = vunpack.c.l.b16 %v3496
        %v4287 = vunpack.c.l.b16 %v3497
        %v4288 = vunpack.c.l.b16 %v3498
        %v4289 = vunpack.c.l.b16 %v3499
        %v4290 = vunpack.c.l.b16 %v3500
        %v4291 = vunpack.c.l.b16 %v3501
        %v4292 = vunpack.c.l.b16 %v3502
        %v4293 = vunpack.c.l.b16 %v3503
        %v4294 = vunpack.c.l.b16 %v3504
        %v4295 = vunpack.c.l.b16 %v3505
        %v4296 = vunpack.c.l.b16 %v3506
        %v4297 = vunpack.c.l.b16 %v3507
        %v4298 = vunpack.c.l.b16 %v3508
        %v4299 = vunpack.c.l.b16 %v3509
        %v4300 = vunpack.c.l.b16 %v3510
        %v4301 = vunpack.c.l.b16 %v3511
        %v4302 = vunpack.c.l.b16 %v3512
        %v4303 = vunpack.c.l.b16 %v3513
        %v4304 = vunpack.c.l.b16 %v3514
        %v4305 = vunpack.c.l.b16 %v3515
        %v4306 = vunpack.c.l.b16 %v3516
        %v4307 = vunpack.c.l.b16 %v3517
        %v4308 = vunpack.c.l.b16 %v3518
        %v4309 = vunpack.c.l.b16 %v3519
        %v4310 = vunpack.c.l.b16 %v3520
        %v4311 = vunpack.c.l.b16 %v3521
        %v4312 = vunpack.c.l.b16 %v3522
        %v4313 = vunpack.c.l.b16 %v3523
        %v4314 = vunpack.c.l.b16 %v3524
        %v4315 = vunpack.c.l.b16 %v3525
        %v4316 = vunpack.c.l.b16 %v3526
        %v4317 = vunpack.c.l.b16 %v3527
        %v4318 = vunpack.c.l.b16 %v3528
        %v4319 = vunpack.c.l.b16 %v3529
        %v4320 = vunpack.c.l.b16 %v3530
        %v4321 = vunpack.c.l.b16 %v3531
        %v4322 = vunpack.c.l.b16 %v3532
        %v4323 = vunpack.c.l.b16 %v3533
        %v4324 = vunpack.c.l.b16 %v3534
        %v4325 = vunpack.c.l.b16 %v3535
        %v4326 = vunpack.c.l.b16 %v3536
        %v4327 = vunpack.c.l.b16 %v3537
        %v4328 = vunpack.c.l.b16 %v3538
        %v4329 = vunpack.c.l.b16 %v3539
        %v4330 = vunpack.c.l.b16 %v3540
        %v4331 = vunpack.c.l.b16 %v3541
        %v4332 = vunpack.c.l.b16 %v3542
        %v4333 = vunpack.c.l.b16 %v3543
        %v4334 = vunpack.c.l.b16 %v3544
        %v4335 = vunpack.c.l.b16 %v3545
        %v4336 = vunpack.c.l.b16 %v3546
        %v4337 = vunpack.c.l.b16 %v3547
        %v4338 = vunpack.c.l.b16 %v3548
        %v4339 = vunpack.c.l.b16 %v3549
        %v4340 = vunpack.c.l.b16 %v3550
        %v4341 = vunpack.c.l.b16 %v3551
        %v4342 = vunpack.c.l.b16 %v3552
        %v4343 = vunpack.c.l.b16 %v3553
        %v4344 = vunpack.c.l.b16 %v3554
        %v4345 = vunpack.c.l.b16 %v3555
        %v4346 = vunpack.c.l.b16 %v3556
        %v4347 = vunpack.c.l.b16 %v3557
        %v4348 = vunpack.c.l.b16 %v3558
        %v4349 = vunpack.c.l.b16 %v3559
        %v4350 = vunpack.c.l.b16 %v3560
        %v4351 = vunpack.c.l.b16 %v3561
        %v4352 = vunpack.c.l.b16 %v3562
        %v4353 = vunpack.c.l.b16 %v3563
        %v4354 = vunpack.c.l.b16 %v3564
        %v4355 = vunpack.c.l.b16 %v3565
        %v4356 = vunpack.c.l.b16 %v3566
        %v4357 = vunpack.c.l.b16 %v3567
        %v4358 = vunpack.c.l.b16 %v3568
        %v4359 = vunpack.c.l.b16 %v3569
        %v4360 = vunpack.c.l.b16 %v3570
        %v4361 = vunpack.c.l.b16 %v3571
        %v4362 = vunpack.c.l.b16 %v3572
        %v4363 = vunpack.c.l.b16 %v3573
        %v4364 = vunpack.c.l.b16 %v3574
        %v4365 = vunpack.c.l.b16 %v3575
        %v4366 = vunpack.c.l.b16 %v3576
        %v4367 = vpack.c.b16 %v4168, %v4167
        %v4368 = vpack.c.b16 %v4170, %v4169
        %v4369 = vpack.c.b16 %v4172, %v4171
        %v4370 = vpack.c.b16 %v4174, %v4173
        %v4371 = vpack.c.b16 %v4176, %v4175
        %v4372 = vpack.c.b16 %v4178, %v4177
        %v4373 = vpack.c.b16 %v4180, %v4179
        %v4374 = vpack.c.b16 %v4182, %v4181
        %v4375 = vpack.c.b16 %v4184, %v4183
        %v4376 = vpack.c.b16 %v4186, %v4185
        %v4377 = vpack.c.b16 %v4188, %v4187
        %v4378 = vpack.c.b16 %v4190, %v4189
        %v4379 = vpack.c.b16 %v4192, %v4191
        %v4380 = vpack.c.b16 %v4194, %v4193
        %v4381 = vpack.c.b16 %v4196, %v4195
        %v4382 = vpack.c.b16 %v4198, %v4197
        %v4383 = vpack.c.b16 %v4200, %v4199
        %v4384 = vpack.c.b16 %v4202, %v4201
        %v4385 = vpack.c.b16 %v4204, %v4203
        %v4386 = vpack.c.b16 %v4206, %v4205
        %v4387 = vpack.c.b16 %v4208, %v4207
        %v4388 = vpack.c.b16 %v4210, %v4209
        %v4389 = vpack.c.b16 %v4212, %v4211
        %v4390 = vpack.c.b16 %v4214, %v4213
        %v4391 = vpack.c.b16 %v4216, %v4215
        %v4392 = vpack.c.b16 %v4218, %v4217
        %v4393 = vpack.c.b16 %v4220, %v4219
        %v4394 = vpack.c.b16 %v4222, %v4221
        %v4395 = vpack.c.b16 %v4224, %v4223
        %v4396 = vpack.c.b16 %v4226, %v4225
        %v4397 = vpack.c.b16 %v4228, %v4227
        %v4398 = vpack.c.b16 %v4230, %v4229
        %v4399 = vpack.c.b16 %v4232, %v4231
        %v4400 = vpack.c.b16 %v4234, %v4233
        %v4401 = vpack.c.b16 %v4236, %v4235
        %v4402 = vpack.c.b16 %v4238, %v4237
        %v4403 = vpack.c.b16 %v4240, %v4239
        %v4404 = vpack.c.b16 %v4242, %v4241
        %v4405 = vpack.c.b16 %v4244, %v4243
        %v4406 = vpack.c.b16 %v4246, %v4245
        %v4407 = vpack.c.b16 %v4248, %v4247
        %v4408 = vpack.c.b16 %v4250, %v4249
        %v4409 = vpack.c.b16 %v4252, %v4251
        %v4410 = vpack.c.b16 %v4254, %v4253
        %v4411 = vpack.c.b16 %v4256, %v4255
        %v4412 = vpack.c.b16 %v4258, %v4257
        %v4413 = vpack.c.b16 %v4260, %v4259
        %v4414 = vpack.c.b16 %v4262, %v4261
        %v4415 = vpack.c.b16 %v4264, %v4263
        %v4416 = vpack.c.b16 %v4266, %v4265
        %v4417 = vpack.c.b16 %v4268, %v4267
        %v4418 = vpack.c.b16 %v4270, %v4269
        %v4419 = vpack.c.b16 %v4272, %v4271
        %v4420 = vpack.c.b16 %v4274, %v4273
        %v4421 = vpack.c.b16 %v4276, %v4275
        %v4422 = vpack.c.b16 %v4278, %v4277
        %v4423 = vpack.c.b16 %v4280, %v4279
        %v4424 = vpack.c.b16 %v4282, %v4281
        %v4425 = vpack.c.b16 %v4284, %v4283
        %v4426 = vpack.c.b16 %v4286, %v4285
        %v4427 = vpack.c.b16 %v4288, %v4287
        %v4428 = vpack.c.b16 %v4290, %v4289
        %v4429 = vpack.c.b16 %v4292, %v4291
        %v4430 = vpack.c.b16 %v4294, %v4293
        %v4431 = vpack.c.b16 %v4296, %v4295
        %v4432 = vpack.c.b16 %v4298, %v4297
        %v4433 = vpack.c.b16 %v4300, %v4299
        %v4434 = vpack.c.b16 %v4302, %v4301
        %v4435 = vpack.c.b16 %v4304, %v4303
        %v4436 = vpack.c.b16 %v4306, %v4305
        %v4437 = vpack.c.b16 %v4308, %v4307
        %v4438 = vpack.c.b16 %v4310, %v4309
        %v4439 = vpack.c.b16 %v4312, %v4311
        %v4440 = vpack.c.b16 %v4314, %v4313
        %v4441 = vpack.c.b16 %v4316, %v4315
        %v4442 = vpack.c.b16 %v4318, %v4317
        %v4443 = vpack.c.b16 %v4320, %v4319
        %v4444 = vpack.c.b16 %v4322, %v4321
        %v4445 = vpack.c.b16 %v4324, %v4323
        %v4446 = vpack.c.b16 %v4326, %v4325
        %v4447 = vpack.c.b16 %v4328, %v4327
        %v4448 = vpack.c.b16 %v4330, %v4329
        %v4449 = vpack.c.b16 %v4332, %v4331
        %v4450 = vpack.c.b16 %v4334, %v4333
        %v4451 = vpack.c.b16 %v4336, %v4335
        %v4452 = vpack.c.b16 %v4338, %v4337
        %v4453 = vpack.c.b16 %v4340, %v4339
        %v4454 = vpack.c.b16 %v4342, %v4341
        %v4455 = vpack.c.b16 %v4344, %v4343
        %v4456 = vpack.c.b16 %v4346, %v4345
        %v4457 = vpack.c.b16 %v4348, %v4347
        %v4458 = vpack.c.b16 %v4350, %v4349
        %v4459 = vpack.c.b16 %v4352, %v4351
        %v4460 = vpack.c.b16 %v4354, %v4353
        %v4461 = vpack.c.b16 %v4356, %v4355
        %v4462 = vpack.c.b16 %v4358, %v4357
        %v4463 = vpack.c.b16 %v4360, %v4359
        %v4464 = vpack.c.b16 %v4362, %v4361
        %v4465 = vpack.c.b16 %v4364, %v4363
        %v4466 = vpack.c.b16 %v4366, %v4365
        %vm4567 = vcmask 523264
        %v4569 = vsel %vm4567, %v3829, 0
        %v4572 = vsel %vm4567, %v3842, 0
        %v4575 = vsel %vm4567, %v3855, 0
        %v4578 = vsel %vm4567, %v3868, 0
        %v4581 = vsel %vm4567, %v3881, 0
        %v4584 = vsel %vm4567, %v3894, 0
        %4586 = vmatprep.subr.bf16.mxu0 0
        %4587 = vmatpush1.bf16.msra.mxu0 %v4374
        %4588 = vmatprep.subr.bf16.mxu0 0
        %4589 = vmatpush1.bf16.msra.mxu0 %v4373
        %4590 = vmatprep.subr.bf16.mxu0 0
        %4591 = vmatpush1.bf16.msra.mxu0 %v4372
        %4592 = vmatprep.subr.bf16.mxu0 0
        %4593 = vmatpush1.bf16.msra.mxu0 %v4371
        %4594 = vmatprep.subr.bf16.mxu0 0
        %4595 = vmatpush1.bf16.msra.mxu0 %v4370
        %4596 = vmatprep.subr.bf16.mxu0 0
        %4597 = vmatpush1.bf16.msra.mxu0 %v4369
        %4598 = vmatprep.subr.bf16.mxu0 0
        %4599 = vmatpush1.bf16.msra.mxu0 %v4368
        %4600 = vmatprep.subr.bf16.mxu0 0
        %4601 = vmatpush1.bf16.msra.mxu0 %v4367
        %4602 = vmatprep.subr.bf16.mxu0 0
        %4603 = vmatpush2.bf16.msra.mxu0 %v4382
        %4604 = vmatprep.subr.bf16.mxu0 0
        %4605 = vmatpush2.bf16.msra.mxu0 %v4381
        %4606 = vmatprep.subr.bf16.mxu0 0
        %4607 = vmatpush2.bf16.msra.mxu0 %v4380
        %4608 = vmatprep.subr.bf16.mxu0 0
        %4609 = vmatpush2.bf16.msra.mxu0 %v4379
        %4610 = vmatprep.subr.bf16.mxu0 0
        %4611 = vmatpush2.bf16.msra.mxu0 %v4378
        %4612 = vmatprep.subr.bf16.mxu0 0
        %4613 = vmatpush2.bf16.msra.mxu0 %v4377
        %4614 = vmatprep.subr.bf16.mxu0 0
        %4615 = vmatpush2.bf16.msra.mxu0 %v4376
        %4616 = vmatprep.subr.bf16.mxu0 0
        %4617 = vmatpush2.bf16.msra.mxu0 %v4375
        %4618 = vmatprep.mubr.bf16.mxu0 %v3818
        %4619 = vmatmul.mubr.bf16.gmra.mxu0 %v3817
        %v4620 = vpop.f32.mrf.mxu0
        %v4621 = vadd.f32 0.0, %v4620
        %v4622 = vpop.f32.mrf.mxu0
        %v4623 = vpop.f32.mrf.mxu0
        %v4624 = vadd.f32 0.0, %v4623
        %v4625 = vpop.f32.mrf.mxu0
        %4626 = vmatprep.mubr.bf16.mxu0 %v3831
        %4627 = vmatmul.mubr.bf16.gmra.mxu0 %v3830
        %v4628 = vpop.f32.mrf.mxu0
        %v4629 = vadd.f32 0.0, %v4628
        %v4630 = vpop.f32.mrf.mxu0
        %v4631 = vpop.f32.mrf.mxu0
        %v4632 = vadd.f32 0.0, %v4631
        %v4633 = vpop.f32.mrf.mxu0
        %4634 = vmatprep.mubr.bf16.mxu0 %v3844
        %4635 = vmatmul.mubr.bf16.gmra.mxu0 %v3843
        %v4636 = vpop.f32.mrf.mxu0
        %v4637 = vadd.f32 0.0, %v4636
        %v4638 = vpop.f32.mrf.mxu0
        %v4639 = vpop.f32.mrf.mxu0
        %v4640 = vadd.f32 0.0, %v4639
        %v4641 = vpop.f32.mrf.mxu0
        %4642 = vmatprep.mubr.bf16.mxu0 %v3857
        %4643 = vmatmul.mubr.bf16.gmra.mxu0 %v3856
        %v4644 = vpop.f32.mrf.mxu0
        %v4645 = vadd.f32 0.0, %v4644
        %v4646 = vpop.f32.mrf.mxu0
        %v4647 = vpop.f32.mrf.mxu0
        %v4648 = vadd.f32 0.0, %v4647
        %v4649 = vpop.f32.mrf.mxu0
        %4650 = vmatprep.mubr.bf16.mxu0 %v3870
        %4651 = vmatmul.mubr.bf16.gmra.mxu0 %v3869
        %v4652 = vpop.f32.mrf.mxu0
        %v4653 = vadd.f32 0.0, %v4652
        %v4654 = vpop.f32.mrf.mxu0
        %v4655 = vpop.f32.mrf.mxu0
        %v4656 = vadd.f32 0.0, %v4655
        %v4657 = vpop.f32.mrf.mxu0
        %4658 = vmatprep.mubr.bf16.mxu0 %v3883
        %4659 = vmatmul.mubr.bf16.gmra.mxu0 %v3882
        %v4660 = vpop.f32.mrf.mxu0
        %v4661 = vadd.f32 0.0, %v4660
        %v4662 = vpop.f32.mrf.mxu0
        %v4663 = vpop.f32.mrf.mxu0
        %v4664 = vadd.f32 0.0, %v4663
        %v4665 = vpop.f32.mrf.mxu0
        %4666 = vdwg.mxu0
        %4667 = vmatprep.subr.bf16.mxu0 0
        %4668 = vmatpush1.bf16.msra.mxu0 %v4390
        %4669 = vmatprep.subr.bf16.mxu0 0
        %4670 = vmatpush1.bf16.msra.mxu0 %v4389
        %4671 = vmatprep.subr.bf16.mxu0 0
        %4672 = vmatpush1.bf16.msra.mxu0 %v4388
        %4673 = vmatprep.subr.bf16.mxu0 0
        %4674 = vmatpush1.bf16.msra.mxu0 %v4387
        %4675 = vmatprep.subr.bf16.mxu0 0
        %4676 = vmatpush1.bf16.msra.mxu0 %v4386
        %4677 = vmatprep.subr.bf16.mxu0 0
        %4678 = vmatpush1.bf16.msra.mxu0 %v4385
        %4679 = vmatprep.subr.bf16.mxu0 0
        %4680 = vmatpush1.bf16.msra.mxu0 %v4384
        %4681 = vmatprep.subr.bf16.mxu0 0
        %4682 = vmatpush1.bf16.msra.mxu0 %v4383
        %4683 = vmatprep.subr.bf16.mxu0 0
        %4684 = vmatpush2.bf16.msra.mxu0 %v4398
        %4685 = vmatprep.subr.bf16.mxu0 0
        %4686 = vmatpush2.bf16.msra.mxu0 %v4397
        %4687 = vmatprep.subr.bf16.mxu0 0
        %4688 = vmatpush2.bf16.msra.mxu0 %v4396
        %4689 = vmatprep.subr.bf16.mxu0 0
        %4690 = vmatpush2.bf16.msra.mxu0 %v4395
        %4691 = vmatprep.subr.bf16.mxu0 0
        %4692 = vmatpush2.bf16.msra.mxu0 %v4394
        %4693 = vmatprep.subr.bf16.mxu0 0
        %4694 = vmatpush2.bf16.msra.mxu0 %v4393
        %4695 = vmatprep.subr.bf16.mxu0 0
        %4696 = vmatpush2.bf16.msra.mxu0 %v4392
        %4697 = vmatprep.subr.bf16.mxu0 0
        %4698 = vmatpush2.bf16.msra.mxu0 %v4391
        %4699 = vmatprep.mubr.bf16.mxu0 %v3820
        %4700 = vmatmul.mubr.bf16.gmra.mxu0 %v3819
        %v4701 = vpop.f32.mrf.mxu0
        %v4702 = vadd.f32 %v4621, %v4701
        %v4703 = vpop.f32.mrf.mxu0
        %v4704 = vpop.f32.mrf.mxu0
        %v4705 = vadd.f32 %v4624, %v4704
        %v4706 = vpop.f32.mrf.mxu0
        %4707 = vmatprep.mubr.bf16.mxu0 %v3833
        %4708 = vmatmul.mubr.bf16.gmra.mxu0 %v3832
        %v4709 = vpop.f32.mrf.mxu0
        %v4710 = vadd.f32 %v4629, %v4709
        %v4711 = vpop.f32.mrf.mxu0
        %v4712 = vpop.f32.mrf.mxu0
        %v4713 = vadd.f32 %v4632, %v4712
        %v4714 = vpop.f32.mrf.mxu0
        %4715 = vmatprep.mubr.bf16.mxu0 %v3846
        %4716 = vmatmul.mubr.bf16.gmra.mxu0 %v3845
        %v4717 = vpop.f32.mrf.mxu0
        %v4718 = vadd.f32 %v4637, %v4717
        %v4719 = vpop.f32.mrf.mxu0
        %v4720 = vpop.f32.mrf.mxu0
        %v4721 = vadd.f32 %v4640, %v4720
        %v4722 = vpop.f32.mrf.mxu0
        %4723 = vmatprep.mubr.bf16.mxu0 %v3859
        %4724 = vmatmul.mubr.bf16.gmra.mxu0 %v3858
        %v4725 = vpop.f32.mrf.mxu0
        %v4726 = vadd.f32 %v4645, %v4725
        %v4727 = vpop.f32.mrf.mxu0
        %v4728 = vpop.f32.mrf.mxu0
        %v4729 = vadd.f32 %v4648, %v4728
        %v4730 = vpop.f32.mrf.mxu0
        %4731 = vmatprep.mubr.bf16.mxu0 %v3872
        %4732 = vmatmul.mubr.bf16.gmra.mxu0 %v3871
        %v4733 = vpop.f32.mrf.mxu0
        %v4734 = vadd.f32 %v4653, %v4733
        %v4735 = vpop.f32.mrf.mxu0
        %v4736 = vpop.f32.mrf.mxu0
        %v4737 = vadd.f32 %v4656, %v4736
        %v4738 = vpop.f32.mrf.mxu0
        %4739 = vmatprep.mubr.bf16.mxu0 %v3885
        %4740 = vmatmul.mubr.bf16.gmra.mxu0 %v3884
        %v4741 = vpop.f32.mrf.mxu0
        %v4742 = vadd.f32 %v4661, %v4741
        %v4743 = vpop.f32.mrf.mxu0
        %v4744 = vpop.f32.mrf.mxu0
        %v4745 = vadd.f32 %v4664, %v4744
        %v4746 = vpop.f32.mrf.mxu0
        %4747 = vdwg.mxu0
        %4748 = vmatprep.subr.bf16.mxu0 0
        %4749 = vmatpush1.bf16.msra.mxu0 %v4406
        %4750 = vmatprep.subr.bf16.mxu0 0
        %4751 = vmatpush1.bf16.msra.mxu0 %v4405
        %4752 = vmatprep.subr.bf16.mxu0 0
        %4753 = vmatpush1.bf16.msra.mxu0 %v4404
        %4754 = vmatprep.subr.bf16.mxu0 0
        %4755 = vmatpush1.bf16.msra.mxu0 %v4403
        %4756 = vmatprep.subr.bf16.mxu0 0
        %4757 = vmatpush1.bf16.msra.mxu0 %v4402
        %4758 = vmatprep.subr.bf16.mxu0 0
        %4759 = vmatpush1.bf16.msra.mxu0 %v4401
        %4760 = vmatprep.subr.bf16.mxu0 0
        %4761 = vmatpush1.bf16.msra.mxu0 %v4400
        %4762 = vmatprep.subr.bf16.mxu0 0
        %4763 = vmatpush1.bf16.msra.mxu0 %v4399
        %4764 = vmatprep.subr.bf16.mxu0 0
        %4765 = vmatpush2.bf16.msra.mxu0 %v4414
        %4766 = vmatprep.subr.bf16.mxu0 0
        %4767 = vmatpush2.bf16.msra.mxu0 %v4413
        %4768 = vmatprep.subr.bf16.mxu0 0
        %4769 = vmatpush2.bf16.msra.mxu0 %v4412
        %4770 = vmatprep.subr.bf16.mxu0 0
        %4771 = vmatpush2.bf16.msra.mxu0 %v4411
        %4772 = vmatprep.subr.bf16.mxu0 0
        %4773 = vmatpush2.bf16.msra.mxu0 %v4410
        %4774 = vmatprep.subr.bf16.mxu0 0
        %4775 = vmatpush2.bf16.msra.mxu0 %v4409
        %4776 = vmatprep.subr.bf16.mxu0 0
        %4777 = vmatpush2.bf16.msra.mxu0 %v4408
        %4778 = vmatprep.subr.bf16.mxu0 0
        %4779 = vmatpush2.bf16.msra.mxu0 %v4407
        %4780 = vmatprep.mubr.bf16.mxu0 %v3822
        %4781 = vmatmul.mubr.bf16.gmra.mxu0 %v3821
        %v4782 = vpop.f32.mrf.mxu0
        %v4783 = vadd.f32 %v4702, %v4782
        %v4784 = vpop.f32.mrf.mxu0
        %v4785 = vpop.f32.mrf.mxu0
        %v4786 = vadd.f32 %v4705, %v4785
        %v4787 = vpop.f32.mrf.mxu0
        %4788 = vmatprep.mubr.bf16.mxu0 %v3835
        %4789 = vmatmul.mubr.bf16.gmra.mxu0 %v3834
        %v4790 = vpop.f32.mrf.mxu0
        %v4791 = vadd.f32 %v4710, %v4790
        %v4792 = vpop.f32.mrf.mxu0
        %v4793 = vpop.f32.mrf.mxu0
        %v4794 = vadd.f32 %v4713, %v4793
        %v4795 = vpop.f32.mrf.mxu0
        %4796 = vmatprep.mubr.bf16.mxu0 %v3848
        %4797 = vmatmul.mubr.bf16.gmra.mxu0 %v3847
        %v4798 = vpop.f32.mrf.mxu0
        %v4799 = vadd.f32 %v4718, %v4798
        %v4800 = vpop.f32.mrf.mxu0
        %v4801 = vpop.f32.mrf.mxu0
        %v4802 = vadd.f32 %v4721, %v4801
        %v4803 = vpop.f32.mrf.mxu0
        %4804 = vmatprep.mubr.bf16.mxu0 %v3861
        %4805 = vmatmul.mubr.bf16.gmra.mxu0 %v3860
        %v4806 = vpop.f32.mrf.mxu0
        %v4807 = vadd.f32 %v4726, %v4806
        %v4808 = vpop.f32.mrf.mxu0
        %v4809 = vpop.f32.mrf.mxu0
        %v4810 = vadd.f32 %v4729, %v4809
        %v4811 = vpop.f32.mrf.mxu0
        %4812 = vmatprep.mubr.bf16.mxu0 %v3874
        %4813 = vmatmul.mubr.bf16.gmra.mxu0 %v3873
        %v4814 = vpop.f32.mrf.mxu0
        %v4815 = vadd.f32 %v4734, %v4814
        %v4816 = vpop.f32.mrf.mxu0
        %v4817 = vpop.f32.mrf.mxu0
        %v4818 = vadd.f32 %v4737, %v4817
        %v4819 = vpop.f32.mrf.mxu0
        %4820 = vmatprep.mubr.bf16.mxu0 %v3887
        %4821 = vmatmul.mubr.bf16.gmra.mxu0 %v3886
        %v4822 = vpop.f32.mrf.mxu0
        %v4823 = vadd.f32 %v4742, %v4822
        %v4824 = vpop.f32.mrf.mxu0
        %v4825 = vpop.f32.mrf.mxu0
        %v4826 = vadd.f32 %v4745, %v4825
        %v4827 = vpop.f32.mrf.mxu0
        %4828 = vdwg.mxu0
        %4829 = vmatprep.subr.bf16.mxu0 0
        %4830 = vmatpush1.bf16.msra.mxu0 %v4422
        %4831 = vmatprep.subr.bf16.mxu0 0
        %4832 = vmatpush1.bf16.msra.mxu0 %v4421
        %4833 = vmatprep.subr.bf16.mxu0 0
        %4834 = vmatpush1.bf16.msra.mxu0 %v4420
        %4835 = vmatprep.subr.bf16.mxu0 0
        %4836 = vmatpush1.bf16.msra.mxu0 %v4419
        %4837 = vmatprep.subr.bf16.mxu0 0
        %4838 = vmatpush1.bf16.msra.mxu0 %v4418
        %4839 = vmatprep.subr.bf16.mxu0 0
        %4840 = vmatpush1.bf16.msra.mxu0 %v4417
        %4841 = vmatprep.subr.bf16.mxu0 0
        %4842 = vmatpush1.bf16.msra.mxu0 %v4416
        %4843 = vmatprep.subr.bf16.mxu0 0
        %4844 = vmatpush1.bf16.msra.mxu0 %v4415
        %4845 = vmatprep.subr.bf16.mxu0 0
        %4846 = vmatpush2.bf16.msra.mxu0 %v4430
        %4847 = vmatprep.subr.bf16.mxu0 0
        %4848 = vmatpush2.bf16.msra.mxu0 %v4429
        %4849 = vmatprep.subr.bf16.mxu0 0
        %4850 = vmatpush2.bf16.msra.mxu0 %v4428
        %4851 = vmatprep.subr.bf16.mxu0 0
        %4852 = vmatpush2.bf16.msra.mxu0 %v4427
        %4853 = vmatprep.subr.bf16.mxu0 0
        %4854 = vmatpush2.bf16.msra.mxu0 %v4426
        %4855 = vmatprep.subr.bf16.mxu0 0
        %4856 = vmatpush2.bf16.msra.mxu0 %v4425
        %4857 = vmatprep.subr.bf16.mxu0 0
        %4858 = vmatpush2.bf16.msra.mxu0 %v4424
        %4859 = vmatprep.subr.bf16.mxu0 0
        %4860 = vmatpush2.bf16.msra.mxu0 %v4423
        %4861 = vmatprep.mubr.bf16.mxu0 %v3824
        %4862 = vmatmul.mubr.bf16.gmra.mxu0 %v3823
        %v4863 = vpop.f32.mrf.mxu0
        %v4864 = vadd.f32 %v4783, %v4863
        %v4865 = vpop.f32.mrf.mxu0
        %v4866 = vpop.f32.mrf.mxu0
        %v4867 = vadd.f32 %v4786, %v4866
        %v4868 = vpop.f32.mrf.mxu0
        %4869 = vmatprep.mubr.bf16.mxu0 %v3837
        %4870 = vmatmul.mubr.bf16.gmra.mxu0 %v3836
        %v4871 = vpop.f32.mrf.mxu0
        %v4872 = vadd.f32 %v4791, %v4871
        %v4873 = vpop.f32.mrf.mxu0
        %v4874 = vpop.f32.mrf.mxu0
        %v4875 = vadd.f32 %v4794, %v4874
        %v4876 = vpop.f32.mrf.mxu0
        %4877 = vmatprep.mubr.bf16.mxu0 %v3850
        %4878 = vmatmul.mubr.bf16.gmra.mxu0 %v3849
        %v4879 = vpop.f32.mrf.mxu0
        %v4880 = vadd.f32 %v4799, %v4879
        %v4881 = vpop.f32.mrf.mxu0
        %v4882 = vpop.f32.mrf.mxu0
        %v4883 = vadd.f32 %v4802, %v4882
        %v4884 = vpop.f32.mrf.mxu0
        %4885 = vmatprep.mubr.bf16.mxu0 %v3863
        %4886 = vmatmul.mubr.bf16.gmra.mxu0 %v3862
        %v4887 = vpop.f32.mrf.mxu0
        %v4888 = vadd.f32 %v4807, %v4887
        %v4889 = vpop.f32.mrf.mxu0
        %v4890 = vpop.f32.mrf.mxu0
        %v4891 = vadd.f32 %v4810, %v4890
        %v4892 = vpop.f32.mrf.mxu0
        %4893 = vmatprep.mubr.bf16.mxu0 %v3876
        %4894 = vmatmul.mubr.bf16.gmra.mxu0 %v3875
        %v4895 = vpop.f32.mrf.mxu0
        %v4896 = vadd.f32 %v4815, %v4895
        %v4897 = vpop.f32.mrf.mxu0
        %v4898 = vpop.f32.mrf.mxu0
        %v4899 = vadd.f32 %v4818, %v4898
        %v4900 = vpop.f32.mrf.mxu0
        %4901 = vmatprep.mubr.bf16.mxu0 %v3889
        %4902 = vmatmul.mubr.bf16.gmra.mxu0 %v3888
        %v4903 = vpop.f32.mrf.mxu0
        %v4904 = vadd.f32 %v4823, %v4903
        %v4905 = vpop.f32.mrf.mxu0
        %v4906 = vpop.f32.mrf.mxu0
        %v4907 = vadd.f32 %v4826, %v4906
        %v4908 = vpop.f32.mrf.mxu0
        %4909 = vdwg.mxu0
        %4910 = vmatprep.subr.bf16.mxu0 0
        %4911 = vmatpush1.bf16.msra.mxu0 %v4438
        %4912 = vmatprep.subr.bf16.mxu0 0
        %4913 = vmatpush1.bf16.msra.mxu0 %v4437
        %4914 = vmatprep.subr.bf16.mxu0 0
        %4915 = vmatpush1.bf16.msra.mxu0 %v4436
        %4916 = vmatprep.subr.bf16.mxu0 0
        %4917 = vmatpush1.bf16.msra.mxu0 %v4435
        %4918 = vmatprep.subr.bf16.mxu0 0
        %4919 = vmatpush1.bf16.msra.mxu0 %v4434
        %4920 = vmatprep.subr.bf16.mxu0 0
        %4921 = vmatpush1.bf16.msra.mxu0 %v4433
        %4922 = vmatprep.subr.bf16.mxu0 0
        %4923 = vmatpush1.bf16.msra.mxu0 %v4432
        %4924 = vmatprep.subr.bf16.mxu0 0
        %4925 = vmatpush1.bf16.msra.mxu0 %v4431
        %4926 = vmatprep.subr.bf16.mxu0 0
        %4927 = vmatpush2.bf16.msra.mxu0 %v4446
        %4928 = vmatprep.subr.bf16.mxu0 0
        %4929 = vmatpush2.bf16.msra.mxu0 %v4445
        %4930 = vmatprep.subr.bf16.mxu0 0
        %4931 = vmatpush2.bf16.msra.mxu0 %v4444
        %4932 = vmatprep.subr.bf16.mxu0 0
        %4933 = vmatpush2.bf16.msra.mxu0 %v4443
        %4934 = vmatprep.subr.bf16.mxu0 0
        %4935 = vmatpush2.bf16.msra.mxu0 %v4442
        %4936 = vmatprep.subr.bf16.mxu0 0
        %4937 = vmatpush2.bf16.msra.mxu0 %v4441
        %4938 = vmatprep.subr.bf16.mxu0 0
        %4939 = vmatpush2.bf16.msra.mxu0 %v4440
        %4940 = vmatprep.subr.bf16.mxu0 0
        %4941 = vmatpush2.bf16.msra.mxu0 %v4439
        %4942 = vmatprep.mubr.bf16.mxu0 %v3826
        %4943 = vmatmul.mubr.bf16.gmra.mxu0 %v3825
        %v4944 = vpop.f32.mrf.mxu0
        %v4945 = vadd.f32 %v4864, %v4944
        %v4946 = vpop.f32.mrf.mxu0
        %v4947 = vpop.f32.mrf.mxu0
        %v4948 = vadd.f32 %v4867, %v4947
        %v4949 = vpop.f32.mrf.mxu0
        %4950 = vmatprep.mubr.bf16.mxu0 %v3839
        %4951 = vmatmul.mubr.bf16.gmra.mxu0 %v3838
        %v4952 = vpop.f32.mrf.mxu0
        %v4953 = vadd.f32 %v4872, %v4952
        %v4954 = vpop.f32.mrf.mxu0
        %v4955 = vpop.f32.mrf.mxu0
        %v4956 = vadd.f32 %v4875, %v4955
        %v4957 = vpop.f32.mrf.mxu0
        %4958 = vmatprep.mubr.bf16.mxu0 %v3852
        %4959 = vmatmul.mubr.bf16.gmra.mxu0 %v3851
        %v4960 = vpop.f32.mrf.mxu0
        %v4961 = vadd.f32 %v4880, %v4960
        %v4962 = vpop.f32.mrf.mxu0
        %v4963 = vpop.f32.mrf.mxu0
        %v4964 = vadd.f32 %v4883, %v4963
        %v4965 = vpop.f32.mrf.mxu0
        %4966 = vmatprep.mubr.bf16.mxu0 %v3865
        %4967 = vmatmul.mubr.bf16.gmra.mxu0 %v3864
        %v4968 = vpop.f32.mrf.mxu0
        %v4969 = vadd.f32 %v4888, %v4968
        %v4970 = vpop.f32.mrf.mxu0
        %v4971 = vpop.f32.mrf.mxu0
        %v4972 = vadd.f32 %v4891, %v4971
        %v4973 = vpop.f32.mrf.mxu0
        %4974 = vmatprep.mubr.bf16.mxu0 %v3878
        %4975 = vmatmul.mubr.bf16.gmra.mxu0 %v3877
        %v4976 = vpop.f32.mrf.mxu0
        %v4977 = vadd.f32 %v4896, %v4976
        %v4978 = vpop.f32.mrf.mxu0
        %v4979 = vpop.f32.mrf.mxu0
        %v4980 = vadd.f32 %v4899, %v4979
        %v4981 = vpop.f32.mrf.mxu0
        %4982 = vmatprep.mubr.bf16.mxu0 %v3891
        %4983 = vmatmul.mubr.bf16.gmra.mxu0 %v3890
        %v4984 = vpop.f32.mrf.mxu0
        %v4985 = vadd.f32 %v4904, %v4984
        %v4986 = vpop.f32.mrf.mxu0
        %v4987 = vpop.f32.mrf.mxu0
        %v4988 = vadd.f32 %v4907, %v4987
        %v4989 = vpop.f32.mrf.mxu0
        %4990 = vdwg.mxu0
        %4991 = vmatprep.subr.bf16.mxu0 0
        %4992 = vmatpush1.bf16.msra.mxu0 %v4454
        %4993 = vmatprep.subr.bf16.mxu0 0
        %4994 = vmatpush1.bf16.msra.mxu0 %v4453
        %4995 = vmatprep.subr.bf16.mxu0 0
        %4996 = vmatpush1.bf16.msra.mxu0 %v4452
        %4997 = vmatprep.subr.bf16.mxu0 0
        %4998 = vmatpush1.bf16.msra.mxu0 %v4451
        %4999 = vmatprep.subr.bf16.mxu0 0
        %5000 = vmatpush1.bf16.msra.mxu0 %v4450
        %5001 = vmatprep.subr.bf16.mxu0 0
        %5002 = vmatpush1.bf16.msra.mxu0 %v4449
        %5003 = vmatprep.subr.bf16.mxu0 0
        %5004 = vmatpush1.bf16.msra.mxu0 %v4448
        %5005 = vmatprep.subr.bf16.mxu0 0
        %5006 = vmatpush1.bf16.msra.mxu0 %v4447
        %5007 = vmatprep.subr.bf16.mxu0 0
        %5008 = vmatpush2.bf16.msra.mxu0 %v4462
        %5009 = vmatprep.subr.bf16.mxu0 0
        %5010 = vmatpush2.bf16.msra.mxu0 %v4461
        %5011 = vmatprep.subr.bf16.mxu0 0
        %5012 = vmatpush2.bf16.msra.mxu0 %v4460
        %5013 = vmatprep.subr.bf16.mxu0 0
        %5014 = vmatpush2.bf16.msra.mxu0 %v4459
        %5015 = vmatprep.subr.bf16.mxu0 0
        %5016 = vmatpush2.bf16.msra.mxu0 %v4458
        %5017 = vmatprep.subr.bf16.mxu0 0
        %5018 = vmatpush2.bf16.msra.mxu0 %v4457
        %5019 = vmatprep.subr.bf16.mxu0 0
        %5020 = vmatpush2.bf16.msra.mxu0 %v4456
        %5021 = vmatprep.subr.bf16.mxu0 0
        %5022 = vmatpush2.bf16.msra.mxu0 %v4455
        %5023 = vmatprep.mubr.bf16.mxu0 %v3828
        %5024 = vmatmul.mubr.bf16.gmra.mxu0 %v3827
        %v5025 = vpop.f32.mrf.mxu0
        %v5026 = vadd.f32 %v4945, %v5025
        %v5027 = vpop.f32.mrf.mxu0
        %v5028 = vpop.f32.mrf.mxu0
        %v5029 = vadd.f32 %v4948, %v5028
        %v5030 = vpop.f32.mrf.mxu0
        %5031 = vmatprep.mubr.bf16.mxu0 %v3841
        %5032 = vmatmul.mubr.bf16.gmra.mxu0 %v3840
        %v5033 = vpop.f32.mrf.mxu0
        %v5034 = vadd.f32 %v4953, %v5033
        %v5035 = vpop.f32.mrf.mxu0
        %v5036 = vpop.f32.mrf.mxu0
        %v5037 = vadd.f32 %v4956, %v5036
        %v5038 = vpop.f32.mrf.mxu0
        %5039 = vmatprep.mubr.bf16.mxu0 %v3854
        %5040 = vmatmul.mubr.bf16.gmra.mxu0 %v3853
        %v5041 = vpop.f32.mrf.mxu0
        %v5042 = vadd.f32 %v4961, %v5041
        %v5043 = vpop.f32.mrf.mxu0
        %v5044 = vpop.f32.mrf.mxu0
        %v5045 = vadd.f32 %v4964, %v5044
        %v5046 = vpop.f32.mrf.mxu0
        %5047 = vmatprep.mubr.bf16.mxu0 %v3867
        %5048 = vmatmul.mubr.bf16.gmra.mxu0 %v3866
        %v5049 = vpop.f32.mrf.mxu0
        %v5050 = vadd.f32 %v4969, %v5049
        %v5051 = vpop.f32.mrf.mxu0
        %v5052 = vpop.f32.mrf.mxu0
        %v5053 = vadd.f32 %v4972, %v5052
        %v5054 = vpop.f32.mrf.mxu0
        %5055 = vmatprep.mubr.bf16.mxu0 %v3880
        %5056 = vmatmul.mubr.bf16.gmra.mxu0 %v3879
        %v5057 = vpop.f32.mrf.mxu0
        %v5058 = vadd.f32 %v4977, %v5057
        %v5059 = vpop.f32.mrf.mxu0
        %v5060 = vpop.f32.mrf.mxu0
        %v5061 = vadd.f32 %v4980, %v5060
        %v5062 = vpop.f32.mrf.mxu0
        %5063 = vmatprep.mubr.bf16.mxu0 %v3893
        %5064 = vmatmul.mubr.bf16.gmra.mxu0 %v3892
        %v5065 = vpop.f32.mrf.mxu0
        %v5066 = vadd.f32 %v4985, %v5065
        %v5067 = vpop.f32.mrf.mxu0
        %v5068 = vpop.f32.mrf.mxu0
        %v5069 = vadd.f32 %v4988, %v5068
        %v5070 = vpop.f32.mrf.mxu0
        %5071 = vdwg.mxu0
        %5072 = vmatprep.subr.bf16.mxu0 0
        %5073 = vmatpush1.bf16.msra.mxu0 0
        %5074 = vmatprep.subr.bf16.mxu0 0
        %5075 = vmatpush1.bf16.msra.mxu0 0
        %5076 = vmatprep.subr.bf16.mxu0 0
        %5077 = vmatpush1.bf16.msra.mxu0 0
        %5078 = vmatprep.subr.bf16.mxu0 0
        %5079 = vmatpush1.bf16.msra.mxu0 0
        %5080 = vmatprep.subr.bf16.mxu0 0
        %5081 = vmatpush1.bf16.msra.mxu0 %v4466
        %5082 = vmatprep.subr.bf16.mxu0 0
        %5083 = vmatpush1.bf16.msra.mxu0 %v4465
        %5084 = vmatprep.subr.bf16.mxu0 0
        %5085 = vmatpush1.bf16.msra.mxu0 %v4464
        %5086 = vmatprep.subr.bf16.mxu0 0
        %5087 = vmatpush1.bf16.msra.mxu0 %v4463
        %5088 = vmatprep.subr.bf16.mxu0 0
        %5089 = vmatpush2.bf16.msra.mxu0 0
        %5090 = vmatprep.subr.bf16.mxu0 0
        %5091 = vmatpush2.bf16.msra.mxu0 0
        %5092 = vmatprep.subr.bf16.mxu0 0
        %5093 = vmatpush2.bf16.msra.mxu0 0
        %5094 = vmatprep.subr.bf16.mxu0 0
        %5095 = vmatpush2.bf16.msra.mxu0 0
        %5096 = vmatprep.subr.bf16.mxu0 0
        %5097 = vmatpush2.bf16.msra.mxu0 0
        %5098 = vmatprep.subr.bf16.mxu0 0
        %5099 = vmatpush2.bf16.msra.mxu0 0
        %5100 = vmatprep.subr.bf16.mxu0 0
        %5101 = vmatpush2.bf16.msra.mxu0 0
        %5102 = vmatprep.subr.bf16.mxu0 0
        %5103 = vmatpush2.bf16.msra.mxu0 0
        %5104 = vmatprep.mubr.bf16.mxu0 0
        %5105 = vmatmul.mubr.bf16.gmra.mxu0 %v4569
        %v5106 = vpop.f32.mrf.mxu0
        %v5107 = vadd.f32 %v5026, %v5106
        %v5108 = vpop.f32.mrf.mxu0
        %v5109 = vpop.f32.mrf.mxu0
        %v5110 = vadd.f32 %v5029, %v5109
        %v5111 = vpop.f32.mrf.mxu0
        %5112 = vmatprep.mubr.bf16.mxu0 0
        %5113 = vmatmul.mubr.bf16.gmra.mxu0 %v4572
        %v5114 = vpop.f32.mrf.mxu0
        %v5115 = vadd.f32 %v5034, %v5114
        %v5116 = vpop.f32.mrf.mxu0
        %v5117 = vpop.f32.mrf.mxu0
        %v5118 = vadd.f32 %v5037, %v5117
        %v5119 = vpop.f32.mrf.mxu0
        %5120 = vmatprep.mubr.bf16.mxu0 0
        %5121 = vmatmul.mubr.bf16.gmra.mxu0 %v4575
        %v5122 = vpop.f32.mrf.mxu0
        %v5123 = vadd.f32 %v5042, %v5122
        %v5124 = vpop.f32.mrf.mxu0
        %v5125 = vpop.f32.mrf.mxu0
        %v5126 = vadd.f32 %v5045, %v5125
        %v5127 = vpop.f32.mrf.mxu0
        %5128 = vmatprep.mubr.bf16.mxu0 0
        %5129 = vmatmul.mubr.bf16.gmra.mxu0 %v4578
        %v5130 = vpop.f32.mrf.mxu0
        %v5131 = vadd.f32 %v5050, %v5130
        %v5132 = vpop.f32.mrf.mxu0
        %v5133 = vpop.f32.mrf.mxu0
        %v5134 = vadd.f32 %v5053, %v5133
        %v5135 = vpop.f32.mrf.mxu0
        %5136 = vmatprep.mubr.bf16.mxu0 0
        %5137 = vmatmul.mubr.bf16.gmra.mxu0 %v4581
        %v5138 = vpop.f32.mrf.mxu0
        %v5139 = vadd.f32 %v5058, %v5138
        %v5140 = vpop.f32.mrf.mxu0
        %v5141 = vpop.f32.mrf.mxu0
        %v5142 = vadd.f32 %v5061, %v5141
        %v5143 = vpop.f32.mrf.mxu0
        %5144 = vmatprep.mubr.bf16.mxu0 0
        %5145 = vmatmul.mubr.bf16.gmra.mxu0 %v4584
        %v5146 = vpop.f32.mrf.mxu0
        %v5147 = vadd.f32 %v5066, %v5146
        %v5148 = vpop.f32.mrf.mxu0
        %v5149 = vpop.f32.mrf.mxu0
        %v5150 = vadd.f32 %v5069, %v5149
        %v5151 = vpop.f32.mrf.mxu0
        %5152 = vdwg.mxu0
        %v5165 = vcombine.high %v5107, %v5107
        %v5166 = vcombine.high %v5110, %v5110
        %v5167 = vcombine.high %v5118, %v5118
        %v5168 = vcombine.high %v5123, %v5123
        %v5169 = vcombine.high %v5131, %v5131
        %v5170 = vcombine.high %v5134, %v5134
        %v5171 = vcombine.high %v5142, %v5142
        %v5172 = vcombine.high %v5147, %v5147
        %v5173 = vcombine.low %v5107, %v5165
        %v5174 = vcombine.low %v5166, %v5115
        %v5175 = vcombine.low %v5118, %v5167
        %v5176 = vcombine.low %v5168, %v5126
        %v5177 = vcombine.low %v5131, %v5169
        %v5178 = vcombine.low %v5170, %v5139
        %v5179 = vcombine.low %v5142, %v5171
        %v5180 = vcombine.low %v5172, %v5150
        %5189 = vst [vmem:[%s136] sm:$0xff] %v5173
        %5190 = vst [vmem:[%s136 + $0x8] sm:$0xff] %v5174
        %5191 = vst [vmem:[%s136 + $0x10] sm:$0xff] %v5175
        %5192 = vst [vmem:[%s136 + $0x18] sm:$0xff] %v5176
        %5193 = vst [vmem:[%s136 + $0x20] sm:$0xff] %v5177
        %5194 = vst [vmem:[%s136 + $0x28] sm:$0xff] %v5178
        %5195 = vst [vmem:[%s136 + $0x30] sm:$0xff] %v5179
        %5196 = vst [vmem:[%s136 + $0x38] sm:$0xff] %v5180
        %s5197 = sand.u32 %s71, 1
        %s5198 = scalar_lea.sflag [#allocation5], %s5197
        %s5199 = sand.u32 %s71, 1
        %s5200 = smul.addr %s5199, 64
        %s5201 = scalar_lea.vmem [#allocation4], %s5200
        // Predicated region
        $region29: #{p2c3_forward.1} parent=27 // pred_check
          %p5202 = pneg %p81
        $region30: #{p2c3_forward.1} parent=27 // pred_check_branch
          %5204 = sbr.rel (%p5202) target = $region32
        $region31: #{p2c3_forward.1} parent=27 // pred_region
          %s5206 = ssub.s32 1024, 1024
          %5207 = vsyncadd %s5198, %s5206
          %s5208 = smul.addr %s16, 8
          %s5209 = smul.addr %s5208, 128
          %s5210 = scalar_lea.hbm %s2, %s5209
          %s5211 = sshll.u32 %s5201, 4
          %s5212 = int_to_ptr.vmem [resolvable:$true] %s5211
          %5217 = dma.vmem_to_hbm [thread:$0]  %s5212, 1024, %s5210, %s5198, 128, 128, 8
        $region32: #{p2c3_forward.1} parent=27 // pred_fallthru
          _
      $region28: #{p2c3_forward.1} parent=5 // pred_fallthru
        _
      %p5218 = scmp.le.s32.totalorder 2, %s11
      // Predicated region
      $region33: #{p2c3_forward.1} parent=5 // pred_check
        %p5219 = pneg %p5218
      $region34: #{p2c3_forward.1} parent=5 // pred_check_branch
        %5221 = sbr.rel (%p5219) target = $region36
      $region35: #{p2c3_forward.1} parent=5 // pred_region
        %s5222 = ssub.s32 %s11, 2
        // Predicated region
        $region37: #{p2c3_forward.1} parent=35 // pred_check
          %p5223 = pneg %p87
        $region38: #{p2c3_forward.1} parent=35 // pred_check_branch
          %5225 = sbr.rel (%p5223) target = $region40
        $region39: #{p2c3_forward.1} parent=35 // pred_region
          %s5226 = sand.u32 %s72, 1
          %s5227 = scalar_lea.sflag [#allocation5], %s5226
          %s5228 = sand.u32 %s72, 1
          %s5229 = smul.addr %s5228, 64
          %s5230 = scalar_lea.vmem [#allocation4], %s5229
          %5231 = dma.done %s5227, 1024
        $region40: #{p2c3_forward.1} parent=35 // pred_fallthru
          _
      $region36: #{p2c3_forward.1} parent=5 // pred_fallthru
        _
    $region6: #{p2c3_forward.1} parent=1 // loop_footer
      %s15 = sadd.s32 1, %s11
    $region7: #{p2c3_forward.1} parent=1 // loop_footer_branch
      %10 = sbr.rel target = $region3
    $region8: #{p2c3_forward.1} parent=1 // loop_exit
      _
    %5232 = vsyncpa [#allocation5], 1
    %s5233 = scalar_lea.sflag [#allocation5], 1
    %5234 = vsyncpa %s5233, 1

</llo_original>
